<compile_context>
chip_gen: v7x
topology: tpu7x:2x2x1
jax: 0.10.0
libtpu: 0.0.40
codegen_flags: <defaults>
</compile_context>

<pallas_src>
import jax
import jax.numpy as jnp
from jax import lax
from jax.experimental import pallas as pl
from jax.experimental.pallas import tpu as pltpu
import numpy as np


def _round_up(x, m):
    return ((x + m - 1) // m) * m


# --------------------------------------------------------------------------- #
# Kernel
# --------------------------------------------------------------------------- #
def bilstm_last_kernel(x_ref, lens_ref,
                       wihf_ref, whhf_ref, bf_ref,
                       wihb_ref, bb_ref,
                       out_ref, gx_ref):
    """Bidirectional-LSTM 'output at last valid step' for one batch tile.

    x_ref   : (T, TB, E)   time-major embedded tokens (f32 or bf16)
    lens_ref: (TB, 1)      int32 valid lengths (>= 1 for real rows, 0 for pad rows)
    wihf/b  : (E, 4*Hp)    input->gates, gate blocks lane-padded to Hp
    whhf    : (Hp, 4*Hp)   hidden->gates (forward only; reverse needs none)
    bf/bb   : (1, 4*Hp)    bias_ih + bias_hh, f32
    out_ref : (TB, 2*Hp)   f32  [h_fwd(len-1) | h_bwd(len-1)] (lane padded)
    gx_ref  : (T, TB, 4*Hp) f32 VMEM scratch for the hoisted input projection
    """
    T, TB, E = x_ref.shape
    Hp4 = whhf_ref.shape[1]
    Hp = Hp4 // 4
    mm_dtype = whhf_ref.dtype

    lens = lens_ref[...]                                   # (TB, 1) int32

    # ---- hoisted input projection: ONE big MXU matmul, bias folded in ------
    x_all = x_ref[...].reshape(T * TB, E)
    gx = jnp.dot(x_all, wihf_ref[...], preferred_element_type=jnp.float32)
    gx_ref[...] = (gx + bf_ref[...]).reshape(T, TB, Hp4)

    whhf = whhf_ref[...]                                   # loaded once, resident

    def _sigmoid(z):
        # EUP-friendly: one tanh (EUP slot) + mul/add (VPU); no VALU divide.
        return 0.5 * jnp.tanh(0.5 * z) + 0.5

    def _gates(gsum):
        # Hp is a multiple of 128 -> each slice is a lane-dense tile.
        i = _sigmoid(gsum[:, 0 * Hp:1 * Hp])
        f = _sigmoid(gsum[:, 1 * Hp:2 * Hp])
        g = jnp.tanh(gsum[:, 2 * Hp:3 * Hp])
        o = _sigmoid(gsum[:, 3 * Hp:4 * Hp])
        return i, f, g, o

    zeros_h = jnp.zeros((TB, Hp), jnp.float32)
    zeros_x = jnp.zeros((TB, E), jnp.float32)

    # ---- forward direction: t = 0 .. T-1, state frozen for t >= len --------
    def fwd_body(t, carry):
        h, c, x_last = carry
        gsum = gx_ref[t] + jnp.dot(h.astype(mm_dtype), whhf,
                                   preferred_element_type=jnp.float32)
        i, f, g, o = _gates(gsum)
        c_new = f * c + i * g
        h_new = o * jnp.tanh(c_new)
        valid = t < lens                                   # (TB, 1)
        h = jnp.where(valid, h_new, h)
        c = jnp.where(valid, c_new, c)
        # Capture x at the last valid timestep (feeds the single reverse step).
        x_last = jnp.where(t == lens - 1, x_ref[t].astype(jnp.float32), x_last)
        return (h, c, x_last)

    unroll = True if T <= 16 else 4
    h_fwd, _, x_last = lax.fori_loop(0, T, fwd_body,
                                     (zeros_h, zeros_h, zeros_x),
                                     unroll=unroll)

    # ---- backward direction: single cell step from zero state on x[len-1] --
    # h0 = c0 = 0  =>  h @ Whh_b == 0 (Whh_b not needed), f*c0 vanishes.
    gb_sum = jnp.dot(x_last.astype(mm_dtype), wihb_ref[...],
                     preferred_element_type=jnp.float32) + bb_ref[...]
    ib, _f, gb, ob = _gates(gb_sum)
    h_bwd = ob * jnp.tanh(ib * gb)

    out_ref[:, 0:Hp] = h_fwd
    out_ref[:, Hp:2 * Hp] = h_bwd


# --------------------------------------------------------------------------- #
# Parameter preparation (done ONCE, not per forward call)
# --------------------------------------------------------------------------- #
def prepare_kernel_params(params, matmul_dtype=jnp.float32):
    """PyTorch-layout LSTM weights -> kernel layout (transposed, lane-padded).

    matmul_dtype: jnp.float32 (v5e-safe) or jnp.bfloat16 (v6e/v7x MXU path).
    Biases and all elementwise math stay float32.
    """
    H = params["whh_f"].shape[1]
    Hp = _round_up(H, 128)                     # lane-dense gate blocks

    def pad_gate_cols(w):                      # (R, 4H) -> (R, 4Hp)
        R = w.shape[0]
        out = jnp.zeros((R, 4 * Hp), jnp.float32)
        for g in range(4):
            out = out.at[:, g * Hp:g * Hp + H].set(w[:, g * H:(g + 1) * H])
        return out

    whh_f_t = jnp.zeros((Hp, 4 * H), jnp.float32).at[:H, :].set(params["whh_f"].T)
    # NOTE: whh_b is intentionally absent: the only reverse output the module
    # gathers (position len-1) is the first reverse step, taken from h0=c0=0.
    return {
        "embedding": params["embedding"],
        "wih_f": pad_gate_cols(params["wih_f"].T).astype(matmul_dtype),   # (E, 4Hp)
        "whh_f": pad_gate_cols(whh_f_t).astype(matmul_dtype),             # (Hp, 4Hp)
        "b_f": pad_gate_cols((params["bih_f"] + params["bhh_f"])[None, :]),
        "wih_b": pad_gate_cols(params["wih_b"].T).astype(matmul_dtype),
        "b_b": pad_gate_cols((params["bih_b"] + params["bhh_b"])[None, :]),
        "H": H,
        "Hp": Hp,
    }


# --------------------------------------------------------------------------- #
# Wrapper
# --------------------------------------------------------------------------- #
def lstm_encoder_forward(tokens, lens, kparams):
    """tokens: (B, T) int32 padded with 0; lens: (B,) int32 (each >= 1).
    Returns (B, 2*H) float32 — same as LSTMEncoder.forward's sent_embs."""
    B, T = tokens.shape
    H, Hp = kparams["H"], kparams["Hp"]
    E = kparams["wih_f"].shape[0]
    mm_dtype = kparams["wih_f"].dtype

    # Embedding lookup (nn.Embedding gather) stays in XLA; padding row 0 is zero.
    emb = jnp.take(kparams["embedding"], tokens, axis=0)          # (B, T, E)
    x = jnp.transpose(emb, (1, 0, 2)).astype(mm_dtype)            # (T, B, E)

    # Pad batch to the sublane minimum (8) and tile it over a parallel grid.
    TB = min(_round_up(max(B, 8), 8), 128)
    B_pad = _round_up(B, TB)
    lens_i = lens.astype(jnp.int32)
    if B_pad != B:
        x = jnp.pad(x, ((0, 0), (0, B_pad - B), (0, 0)))
        lens_i = jnp.pad(lens_i, (0, B_pad - B))                  # pad rows: len=0
    lens2d = lens_i.reshape(B_pad, 1)

    n_tiles = B_pad // TB

    # VMEM budget: x block + weights + gates_x scratch + out block, with headroom.
    wb = jnp.dtype(mm_dtype).itemsize
    block_bytes = (2 * T * TB * E * wb                       # x (double-buffered)
                   + 2 * TB * 128 * 4                        # lens (lane padded)
                   + 2 * (2 * E + Hp) * 4 * Hp * wb          # wih_f, wih_b, whh_f
                   + 2 * 2 * 4 * Hp * 4                      # biases
                   + T * TB * 4 * Hp * 4                     # gates_x scratch
                   + 2 * TB * 2 * Hp * 4)                    # out block
    vmem_limit = int(min(max(2 * block_bytes + (4 << 20), 32 << 20), 64 << 20))

    full = lambda b: (0, 0)
    out = pl.pallas_call(
        bilstm_last_kernel,
        out_shape=jax.ShapeDtypeStruct((B_pad, 2 * Hp), jnp.float32),
        grid=(n_tiles,),
        in_specs=[
            pl.BlockSpec((T, TB, E), lambda b: (0, b, 0)),    # x (time-major)
            pl.BlockSpec((TB, 1), lambda b: (b, 0)),          # lens
            pl.BlockSpec((E, 4 * Hp), full),                  # Wih fwd
            pl.BlockSpec((Hp, 4 * Hp), full),                 # Whh fwd
            pl.BlockSpec((1, 4 * Hp), full),                  # bias fwd
            pl.BlockSpec((E, 4 * Hp), full),                  # Wih bwd
            pl.BlockSpec((1, 4 * Hp), full),                  # bias bwd
        ],
        out_specs=pl.BlockSpec((TB, 2 * Hp), lambda b: (b, 0)),
        scratch_shapes=[pltpu.VMEM((T, TB, 4 * Hp), jnp.float32)],
        compiler_params=pltpu.CompilerParams(
            dimension_semantics=("parallel",),
            vmem_limit_bytes=vmem_limit),
    )(x, lens2d, kparams["wih_f"], kparams["whh_f"], kparams["b_f"],
      kparams["wih_b"], kparams["b_b"])

    # Strip batch and lane padding: [h_fwd(len-1) | h_bwd(len-1)] -> (B, 2H).
    return jnp.concatenate([out[:B, :H], out[:B, Hp:Hp + H]], axis=-1)


# --------------------------------------------------------------------------- #
# Pure-NumPy reference (mirrors PyTorch packed-sequence semantics)
# --------------------------------------------------------------------------- #
def reference_forward(tokens, lens, params):
    emb = np.asarray(jnp.take(params["embedding"], tokens, axis=0))
    H = params["whh_f"].shape[1]
    B, T = tokens.shape

    def cell(x_t, h, c, wih, whh, b):
        gates = x_t @ np.asarray(wih).T + h @ np.asarray(whh).T + np.asarray(b)
        i = 1.0 / (1.0 + np.exp(-gates[0:H]))
        f = 1.0 / (1.0 + np.exp(-gates[H:2 * H]))
        g = np.tanh(gates[2 * H:3 * H])
        o = 1.0 / (1.0 + np.exp(-gates[3 * H:4 * H]))
        c_new = f * c + i * g
        h_new = o * np.tanh(c_new)
        return h_new, c_new

    bf = params["bih_f"] + params["bhh_f"]
    bb = params["bih_b"] + params["bhh_b"]
    out = np.zeros((B, 2 * H), np.float32)
    for b_i in range(B):
        L = int(lens[b_i])
        h = np.zeros(H, np.float32); c = np.zeros(H, np.float32)
        for t in range(L):
            h, c = cell(emb[b_i, t], h, c, params["wih_f"], params["whh_f"], bf)
        out[b_i, :H] = h
        h = np.zeros(H, np.float32); c = np.zeros(H, np.float32)
        h, c = cell(emb[b_i, L - 1], h, c, params["wih_b"], params["whh_b"], bb)
        out[b_i, H:] = h
    return out


def init_params(key, vocab, emb_dim, hidden_dim):
    ks = jax.random.split(key, 9)
    scale = 0.1

    def u(k, shape):
        return jax.random.uniform(k, shape, jnp.float32, -scale, scale)

    embedding = u(ks[0], (vocab, emb_dim)).at[0].set(0.0)   # padding_idx = 0
    return {
        "embedding": embedding,
        "wih_f": u(ks[1], (4 * hidden_dim, emb_dim)),
        "whh_f": u(ks[2], (4 * hidden_dim, hidden_dim)),
        "bih_f": u(ks[3], (4 * hidden_dim,)),
        "bhh_f": u(ks[4], (4 * hidden_dim,)),
        "wih_b": u(ks[5], (4 * hidden_dim, emb_dim)),
        "whh_b": u(ks[6], (4 * hidden_dim, hidden_dim)),
        "bih_b": u(ks[7], (4 * hidden_dim,)),
        "bhh_b": u(ks[8], (4 * hidden_dim,)),
    }


if __name__ == "__main__":
    B, T = 2, 8
    VOCAB, EMB_DIM, HIDDEN = 16, 32, 32

    key = jax.random.PRNGKey(0)
    k_tok, k_param = jax.random.split(key)
    params = init_params(k_param, VOCAB, EMB_DIM, HIDDEN)

    # Synthetic "encode_pad" output: padded token ids + lengths (all lens >= 1).
    # TODO(synk): WordEncoder string tokenization has no Pallas equivalent;
    # integer token ids are generated directly here.
    lens = jnp.array([8, 5], dtype=jnp.int32)
    tokens = jax.random.randint(k_tok, (B, T), 1, VOCAB, dtype=jnp.int32)
    time_idx = jnp.arange(T)[None, :]
    tokens = jnp.where(time_idx < lens[:, None], tokens, 0)      # pad with 0

    ref = reference_forward(np.asarray(tokens), np.asarray(lens), params)

    # f32 matmul operands (v5e-safe path) — tight check against the reference.
    kp_f32 = prepare_kernel_params(params, matmul_dtype=jnp.float32)
    out_f32 = jax.block_until_ready(lstm_encoder_forward(tokens, lens, kp_f32))
    np.testing.assert_allclose(np.asarray(out_f32), ref, rtol=1e-4, atol=1e-5)

    # bf16 matmul operands, f32 accumulation & elementwise (v6e / v7x path).
    kp_bf16 = prepare_kernel_params(params, matmul_dtype=jnp.bfloat16)
    out_bf16 = jax.block_until_ready(lstm_encoder_forward(tokens, lens, kp_bf16))
    np.testing.assert_allclose(np.asarray(out_bf16), ref, rtol=5e-2, atol=5e-3)

    print("KERNEL_OK")
</pallas_src>

<mosaic_0001>
module attributes {stable_mosaic.version = 11 : i64} {
  func.func @bilstm_last_kernel(%arg0: i32, %arg1: memref<8x8x32xf32, #tpu.memory_space<vmem>>, %arg2: memref<8x1xi32, #tpu.memory_space<vmem>>, %arg3: memref<32x512xf32, #tpu.memory_space<vmem>>, %arg4: memref<128x512xf32, #tpu.memory_space<vmem>>, %arg5: memref<1x512xf32, #tpu.memory_space<vmem>>, %arg6: memref<32x512xf32, #tpu.memory_space<vmem>>, %arg7: memref<1x512xf32, #tpu.memory_space<vmem>>, %arg8: memref<8x256xf32, #tpu.memory_space<vmem>>, %arg9: memref<8x8x512xf32, #tpu.memory_space<vmem>>) attributes {dimension_semantics = [#tpu.dimension_semantics<parallel>], iteration_bounds = array<i64: 1>, scalar_prefetch = 0 : i64, scratch_operands = 1 : i64, tpu.core_type = #tpu.core_type<tc>, window_params = [{transform_indices = @transform_0, window_bounds = array<i64: 8, 8, 32>}, {transform_indices = @transform_1, window_bounds = array<i64: 8, 1>}, {pipeline_mode = #tpu.pipeline_mode<synchronous>, transform_indices = @transform_2, window_bounds = array<i64: 32, 512>}, {pipeline_mode = #tpu.pipeline_mode<synchronous>, transform_indices = @transform_3, window_bounds = array<i64: 128, 512>}, {pipeline_mode = #tpu.pipeline_mode<synchronous>, transform_indices = @transform_4, window_bounds = array<i64: 1, 512>}, {pipeline_mode = #tpu.pipeline_mode<synchronous>, transform_indices = @transform_5, window_bounds = array<i64: 32, 512>}, {pipeline_mode = #tpu.pipeline_mode<synchronous>, transform_indices = @transform_6, window_bounds = array<i64: 1, 512>}, {transform_indices = @transform_7, window_bounds = array<i64: 8, 256>}]} {
    %c0 = arith.constant 0 : index
    %c0_0 = arith.constant 0 : index
    %0 = vector.load %arg2[%c0, %c0_0] : memref<8x1xi32, #tpu.memory_space<vmem>>, vector<8x1xi32>
    %c0_1 = arith.constant 0 : index
    %c0_2 = arith.constant 0 : index
    %c0_3 = arith.constant 0 : index
    %1 = vector.load %arg1[%c0_1, %c0_2, %c0_3] : memref<8x8x32xf32, #tpu.memory_space<vmem>>, vector<8x8x32xf32>
    %2 = vector.shape_cast %1 : vector<8x8x32xf32> to vector<64x32xf32>
    %c0_4 = arith.constant 0 : index
    %c0_5 = arith.constant 0 : index
    %3 = vector.load %arg3[%c0_4, %c0_5] : memref<32x512xf32, #tpu.memory_space<vmem>>, vector<32x512xf32>
    %cst = arith.constant dense<0.000000e+00> : vector<64x512xf32>
    %4 = tpu.matmul %2, %3, %cst {dimension_numbers = #tpu.dot_dimension_numbers<[1], [0], [0], [1], [0, 0, 1, 1], [], []>} : vector<64x32xf32>, vector<32x512xf32>, vector<64x512xf32> -> vector<64x512xf32>
    %c0_6 = arith.constant 0 : index
    %c0_7 = arith.constant 0 : index
    %5 = vector.load %arg5[%c0_6, %c0_7] : memref<1x512xf32, #tpu.memory_space<vmem>>, vector<1x512xf32>
    %6 = vector.broadcast %5 : vector<1x512xf32> to vector<64x512xf32>
    %7 = arith.addf %4, %6 : vector<64x512xf32>
    %8 = vector.shape_cast %7 : vector<64x512xf32> to vector<8x8x512xf32>
    %c0_8 = arith.constant 0 : index
    %c0_9 = arith.constant 0 : index
    %c0_10 = arith.constant 0 : index
    %9 = vector.load %arg9[%c0_8, %c0_9, %c0_10] : memref<8x8x512xf32, #tpu.memory_space<vmem>>, vector<8x8x512xf32>
    tpu.vector_store %arg9[%c0_8, %c0_9, %c0_10], %8 {strides = array<i32>} : memref<8x8x512xf32, #tpu.memory_space<vmem>>, vector<8x8x512xf32>,
    %c0_11 = arith.constant 0 : index
    %c0_12 = arith.constant 0 : index
    %10 = vector.load %arg4[%c0_11, %c0_12] : memref<128x512xf32, #tpu.memory_space<vmem>>, vector<128x512xf32>
    %cst_13 = arith.constant 0.000000e+00 : f32
    %11 = vector.broadcast %cst_13 : f32 to vector<8x128xf32>
    %cst_14 = arith.constant 0.000000e+00 : f32
    %12 = vector.broadcast %cst_14 : f32 to vector<8x32xf32>
    %c0_i32 = arith.constant 0 : i32
    %13 = arith.index_cast %c0_i32 : i32 to index
    %c0_15 = arith.constant 0 : index
    %c0_16 = arith.constant 0 : index
    %14 = vector.load %arg9[%13, %c0_15, %c0_16] : memref<8x8x512xf32, #tpu.memory_space<vmem>>, vector<1x8x512xf32>
    %15 = vector.shape_cast %14 : vector<1x8x512xf32> to vector<8x512xf32>
    %cst_17 = arith.constant dense<0.000000e+00> : vector<8x512xf32>
    %16 = tpu.matmul %11, %10, %cst_17 {dimension_numbers = #tpu.dot_dimension_numbers<[1], [0], [0], [1], [0, 0, 1, 1], [], []>} : vector<8x128xf32>, vector<128x512xf32>, vector<8x512xf32> -> vector<8x512xf32>
    %17 = arith.addf %15, %16 : vector<8x512xf32>
    %18 = vector.extract_strided_slice %17 {offsets = [0, 0], sizes = [8, 128], strides = [1, 1]} : vector<8x512xf32> to vector<8x128xf32>
    %cst_18 = arith.constant 5.000000e-01 : f32
    %19 = vector.broadcast %cst_18 : f32 to vector<8x128xf32>
    %20 = arith.mulf %19, %18 : vector<8x128xf32>
    %21 = math.tanh %20 : vector<8x128xf32>
    %cst_19 = arith.constant 5.000000e-01 : f32
    %22 = vector.broadcast %cst_19 : f32 to vector<8x128xf32>
    %23 = arith.mulf %22, %21 : vector<8x128xf32>
    %cst_20 = arith.constant 5.000000e-01 : f32
    %24 = vector.broadcast %cst_20 : f32 to vector<8x128xf32>
    %25 = arith.addf %23, %24 : vector<8x128xf32>
    %26 = vector.extract_strided_slice %17 {offsets = [0, 128], sizes = [8, 128], strides = [1, 1]} : vector<8x512xf32> to vector<8x128xf32>
    %cst_21 = arith.constant 5.000000e-01 : f32
    %27 = vector.broadcast %cst_21 : f32 to vector<8x128xf32>
    %28 = arith.mulf %27, %26 : vector<8x128xf32>
    %29 = math.tanh %28 : vector<8x128xf32>
    %cst_22 = arith.constant 5.000000e-01 : f32
    %30 = vector.broadcast %cst_22 : f32 to vector<8x128xf32>
    %31 = arith.mulf %30, %29 : vector<8x128xf32>
    %cst_23 = arith.constant 5.000000e-01 : f32
    %32 = vector.broadcast %cst_23 : f32 to vector<8x128xf32>
    %33 = arith.addf %31, %32 : vector<8x128xf32>
    %34 = vector.extract_strided_slice %17 {offsets = [0, 256], sizes = [8, 128], strides = [1, 1]} : vector<8x512xf32> to vector<8x128xf32>
    %35 = math.tanh %34 : vector<8x128xf32>
    %36 = vector.extract_strided_slice %17 {offsets = [0, 384], sizes = [8, 128], strides = [1, 1]} : vector<8x512xf32> to vector<8x128xf32>
    %cst_24 = arith.constant 5.000000e-01 : f32
    %37 = vector.broadcast %cst_24 : f32 to vector<8x128xf32>
    %38 = arith.mulf %37, %36 : vector<8x128xf32>
    %39 = math.tanh %38 : vector<8x128xf32>
    %cst_25 = arith.constant 5.000000e-01 : f32
    %40 = vector.broadcast %cst_25 : f32 to vector<8x128xf32>
    %41 = arith.mulf %40, %39 : vector<8x128xf32>
    %cst_26 = arith.constant 5.000000e-01 : f32
    %42 = vector.broadcast %cst_26 : f32 to vector<8x128xf32>
    %43 = arith.addf %41, %42 : vector<8x128xf32>
    %44 = arith.mulf %33, %11 : vector<8x128xf32>
    %45 = arith.mulf %25, %35 : vector<8x128xf32>
    %46 = arith.addf %44, %45 : vector<8x128xf32>
    %47 = math.tanh %46 : vector<8x128xf32>
    %48 = arith.mulf %43, %47 : vector<8x128xf32>
    %49 = vector.broadcast %c0_i32 : i32 to vector<8x1xi32>
    %50 = arith.cmpi slt, %49, %0 : vector<8x1xi32>
    %51 = vector.shape_cast %50 : vector<8x1xi1> to vector<8x1xi1>
    %52 = vector.broadcast %51 : vector<8x1xi1> to vector<8x128xi1>
    %53 = arith.select %52, %48, %11 : vector<8x128xi1>, vector<8x128xf32>
    %54 = vector.shape_cast %50 : vector<8x1xi1> to vector<8x1xi1>
    %55 = vector.broadcast %54 : vector<8x1xi1> to vector<8x128xi1>
    %56 = arith.select %55, %46, %11 : vector<8x128xi1>, vector<8x128xf32>
    %c1_i32 = arith.constant 1 : i32
    %57 = vector.broadcast %c1_i32 : i32 to vector<8x1xi32>
    %58 = arith.subi %0, %57 : vector<8x1xi32>
    %59 = vector.broadcast %c0_i32 : i32 to vector<8x1xi32>
    %60 = arith.cmpi eq, %59, %58 : vector<8x1xi32>
    %61 = arith.index_cast %c0_i32 : i32 to index
    %c0_27 = arith.constant 0 : index
    %c0_28 = arith.constant 0 : index
    %62 = vector.load %arg1[%61, %c0_27, %c0_28] : memref<8x8x32xf32, #tpu.memory_space<vmem>>, vector<1x8x32xf32>
    %63 = vector.shape_cast %62 : vector<1x8x32xf32> to vector<8x32xf32>
    %64 = vector.shape_cast %60 : vector<8x1xi1> to vector<8x1xi1>
    %65 = vector.broadcast %64 : vector<8x1xi1> to vector<8x32xi1>
    %66 = arith.select %65, %63, %12 : vector<8x32xi1>, vector<8x32xf32>
    %c1_i32_29 = arith.constant 1 : i32
    %67 = arith.index_cast %c1_i32_29 : i32 to index
    %c0_30 = arith.constant 0 : index
    %c0_31 = arith.constant 0 : index
    %68 = vector.load %arg9[%67, %c0_30, %c0_31] : memref<8x8x512xf32, #tpu.memory_space<vmem>>, vector<1x8x512xf32>
    %69 = vector.shape_cast %68 : vector<1x8x512xf32> to vector<8x512xf32>
    %cst_32 = arith.constant dense<0.000000e+00> : vector<8x512xf32>
    %70 = tpu.matmul %53, %10, %cst_32 {dimension_numbers = #tpu.dot_dimension_numbers<[1], [0], [0], [1], [0, 0, 1, 1], [], []>} : vector<8x128xf32>, vector<128x512xf32>, vector<8x512xf32> -> vector<8x512xf32>
    %71 = arith.addf %69, %70 : vector<8x512xf32>
    %72 = vector.extract_strided_slice %71 {offsets = [0, 0], sizes = [8, 128], strides = [1, 1]} : vector<8x512xf32> to vector<8x128xf32>
    %cst_33 = arith.constant 5.000000e-01 : f32
    %73 = vector.broadcast %cst_33 : f32 to vector<8x128xf32>
    %74 = arith.mulf %73, %72 : vector<8x128xf32>
    %75 = math.tanh %74 : vector<8x128xf32>
    %cst_34 = arith.constant 5.000000e-01 : f32
    %76 = vector.broadcast %cst_34 : f32 to vector<8x128xf32>
    %77 = arith.mulf %76, %75 : vector<8x128xf32>
    %cst_35 = arith.constant 5.000000e-01 : f32
    %78 = vector.broadcast %cst_35 : f32 to vector<8x128xf32>
    %79 = arith.addf %77, %78 : vector<8x128xf32>
    %80 = vector.extract_strided_slice %71 {offsets = [0, 128], sizes = [8, 128], strides = [1, 1]} : vector<8x512xf32> to vector<8x128xf32>
    %cst_36 = arith.constant 5.000000e-01 : f32
    %81 = vector.broadcast %cst_36 : f32 to vector<8x128xf32>
    %82 = arith.mulf %81, %80 : vector<8x128xf32>
    %83 = math.tanh %82 : vector<8x128xf32>
    %cst_37 = arith.constant 5.000000e-01 : f32
    %84 = vector.broadcast %cst_37 : f32 to vector<8x128xf32>
    %85 = arith.mulf %84, %83 : vector<8x128xf32>
    %cst_38 = arith.constant 5.000000e-01 : f32
    %86 = vector.broadcast %cst_38 : f32 to vector<8x128xf32>
    %87 = arith.addf %85, %86 : vector<8x128xf32>
    %88 = vector.extract_strided_slice %71 {offsets = [0, 256], sizes = [8, 128], strides = [1, 1]} : vector<8x512xf32> to vector<8x128xf32>
    %89 = math.tanh %88 : vector<8x128xf32>
    %90 = vector.extract_strided_slice %71 {offsets = [0, 384], sizes = [8, 128], strides = [1, 1]} : vector<8x512xf32> to vector<8x128xf32>
    %cst_39 = arith.constant 5.000000e-01 : f32
    %91 = vector.broadcast %cst_39 : f32 to vector<8x128xf32>
    %92 = arith.mulf %91, %90 : vector<8x128xf32>
    %93 = math.tanh %92 : vector<8x128xf32>
    %cst_40 = arith.constant 5.000000e-01 : f32
    %94 = vector.broadcast %cst_40 : f32 to vector<8x128xf32>
    %95 = arith.mulf %94, %93 : vector<8x128xf32>
    %cst_41 = arith.constant 5.000000e-01 : f32
    %96 = vector.broadcast %cst_41 : f32 to vector<8x128xf32>
    %97 = arith.addf %95, %96 : vector<8x128xf32>
    %98 = arith.mulf %87, %56 : vector<8x128xf32>
    %99 = arith.mulf %79, %89 : vector<8x128xf32>
    %100 = arith.addf %98, %99 : vector<8x128xf32>
    %101 = math.tanh %100 : vector<8x128xf32>
    %102 = arith.mulf %97, %101 : vector<8x128xf32>
    %103 = vector.broadcast %c1_i32_29 : i32 to vector<8x1xi32>
    %104 = arith.cmpi slt, %103, %0 : vector<8x1xi32>
    %105 = vector.shape_cast %104 : vector<8x1xi1> to vector<8x1xi1>
    %106 = vector.broadcast %105 : vector<8x1xi1> to vector<8x128xi1>
    %107 = arith.select %106, %102, %53 : vector<8x128xi1>, vector<8x128xf32>
    %108 = vector.shape_cast %104 : vector<8x1xi1> to vector<8x1xi1>
    %109 = vector.broadcast %108 : vector<8x1xi1> to vector<8x128xi1>
    %110 = arith.select %109, %100, %56 : vector<8x128xi1>, vector<8x128xf32>
    %c1_i32_42 = arith.constant 1 : i32
    %111 = vector.broadcast %c1_i32_42 : i32 to vector<8x1xi32>
    %112 = arith.subi %0, %111 : vector<8x1xi32>
    %113 = vector.broadcast %c1_i32_29 : i32 to vector<8x1xi32>
    %114 = arith.cmpi eq, %113, %112 : vector<8x1xi32>
    %115 = arith.index_cast %c1_i32_29 : i32 to index
    %c0_43 = arith.constant 0 : index
    %c0_44 = arith.constant 0 : index
    %116 = vector.load %arg1[%115, %c0_43, %c0_44] : memref<8x8x32xf32, #tpu.memory_space<vmem>>, vector<1x8x32xf32>
    %117 = vector.shape_cast %116 : vector<1x8x32xf32> to vector<8x32xf32>
    %118 = vector.shape_cast %114 : vector<8x1xi1> to vector<8x1xi1>
    %119 = vector.broadcast %118 : vector<8x1xi1> to vector<8x32xi1>
    %120 = arith.select %119, %117, %66 : vector<8x32xi1>, vector<8x32xf32>
    %c2_i32 = arith.constant 2 : i32
    %121 = arith.index_cast %c2_i32 : i32 to index
    %c0_45 = arith.constant 0 : index
    %c0_46 = arith.constant 0 : index
    %122 = vector.load %arg9[%121, %c0_45, %c0_46] : memref<8x8x512xf32, #tpu.memory_space<vmem>>, vector<1x8x512xf32>
    %123 = vector.shape_cast %122 : vector<1x8x512xf32> to vector<8x512xf32>
    %cst_47 = arith.constant dense<0.000000e+00> : vector<8x512xf32>
    %124 = tpu.matmul %107, %10, %cst_47 {dimension_numbers = #tpu.dot_dimension_numbers<[1], [0], [0], [1], [0, 0, 1, 1], [], []>} : vector<8x128xf32>, vector<128x512xf32>, vector<8x512xf32> -> vector<8x512xf32>
    %125 = arith.addf %123, %124 : vector<8x512xf32>
    %126 = vector.extract_strided_slice %125 {offsets = [0, 0], sizes = [8, 128], strides = [1, 1]} : vector<8x512xf32> to vector<8x128xf32>
    %cst_48 = arith.constant 5.000000e-01 : f32
    %127 = vector.broadcast %cst_48 : f32 to vector<8x128xf32>
    %128 = arith.mulf %127, %126 : vector<8x128xf32>
    %129 = math.tanh %128 : vector<8x128xf32>
    %cst_49 = arith.constant 5.000000e-01 : f32
    %130 = vector.broadcast %cst_49 : f32 to vector<8x128xf32>
    %131 = arith.mulf %130, %129 : vector<8x128xf32>
    %cst_50 = arith.constant 5.000000e-01 : f32
    %132 = vector.broadcast %cst_50 : f32 to vector<8x128xf32>
    %133 = arith.addf %131, %132 : vector<8x128xf32>
    %134 = vector.extract_strided_slice %125 {offsets = [0, 128], sizes = [8, 128], strides = [1, 1]} : vector<8x512xf32> to vector<8x128xf32>
    %cst_51 = arith.constant 5.000000e-01 : f32
    %135 = vector.broadcast %cst_51 : f32 to vector<8x128xf32>
    %136 = arith.mulf %135, %134 : vector<8x128xf32>
    %137 = math.tanh %136 : vector<8x128xf32>
    %cst_52 = arith.constant 5.000000e-01 : f32
    %138 = vector.broadcast %cst_52 : f32 to vector<8x128xf32>
    %139 = arith.mulf %138, %137 : vector<8x128xf32>
    %cst_53 = arith.constant 5.000000e-01 : f32
    %140 = vector.broadcast %cst_53 : f32 to vector<8x128xf32>
    %141 = arith.addf %139, %140 : vector<8x128xf32>
    %142 = vector.extract_strided_slice %125 {offsets = [0, 256], sizes = [8, 128], strides = [1, 1]} : vector<8x512xf32> to vector<8x128xf32>
    %143 = math.tanh %142 : vector<8x128xf32>
    %144 = vector.extract_strided_slice %125 {offsets = [0, 384], sizes = [8, 128], strides = [1, 1]} : vector<8x512xf32> to vector<8x128xf32>
    %cst_54 = arith.constant 5.000000e-01 : f32
    %145 = vector.broadcast %cst_54 : f32 to vector<8x128xf32>
    %146 = arith.mulf %145, %144 : vector<8x128xf32>
    %147 = math.tanh %146 : vector<8x128xf32>
    %cst_55 = arith.constant 5.000000e-01 : f32
    %148 = vector.broadcast %cst_55 : f32 to vector<8x128xf32>
    %149 = arith.mulf %148, %147 : vector<8x128xf32>
    %cst_56 = arith.constant 5.000000e-01 : f32
    %150 = vector.broadcast %cst_56 : f32 to vector<8x128xf32>
    %151 = arith.addf %149, %150 : vector<8x128xf32>
    %152 = arith.mulf %141, %110 : vector<8x128xf32>
    %153 = arith.mulf %133, %143 : vector<8x128xf32>
    %154 = arith.addf %152, %153 : vector<8x128xf32>
    %155 = math.tanh %154 : vector<8x128xf32>
    %156 = arith.mulf %151, %155 : vector<8x128xf32>
    %157 = vector.broadcast %c2_i32 : i32 to vector<8x1xi32>
    %158 = arith.cmpi slt, %157, %0 : vector<8x1xi32>
    %159 = vector.shape_cast %158 : vector<8x1xi1> to vector<8x1xi1>
    %160 = vector.broadcast %159 : vector<8x1xi1> to vector<8x128xi1>
    %161 = arith.select %160, %156, %107 : vector<8x128xi1>, vector<8x128xf32>
    %162 = vector.shape_cast %158 : vector<8x1xi1> to vector<8x1xi1>
    %163 = vector.broadcast %162 : vector<8x1xi1> to vector<8x128xi1>
    %164 = arith.select %163, %154, %110 : vector<8x128xi1>, vector<8x128xf32>
    %c1_i32_57 = arith.constant 1 : i32
    %165 = vector.broadcast %c1_i32_57 : i32 to vector<8x1xi32>
    %166 = arith.subi %0, %165 : vector<8x1xi32>
    %167 = vector.broadcast %c2_i32 : i32 to vector<8x1xi32>
    %168 = arith.cmpi eq, %167, %166 : vector<8x1xi32>
    %169 = arith.index_cast %c2_i32 : i32 to index
    %c0_58 = arith.constant 0 : index
    %c0_59 = arith.constant 0 : index
    %170 = vector.load %arg1[%169, %c0_58, %c0_59] : memref<8x8x32xf32, #tpu.memory_space<vmem>>, vector<1x8x32xf32>
    %171 = vector.shape_cast %170 : vector<1x8x32xf32> to vector<8x32xf32>
    %172 = vector.shape_cast %168 : vector<8x1xi1> to vector<8x1xi1>
    %173 = vector.broadcast %172 : vector<8x1xi1> to vector<8x32xi1>
    %174 = arith.select %173, %171, %120 : vector<8x32xi1>, vector<8x32xf32>
    %c3_i32 = arith.constant 3 : i32
    %175 = arith.index_cast %c3_i32 : i32 to index
    %c0_60 = arith.constant 0 : index
    %c0_61 = arith.constant 0 : index
    %176 = vector.load %arg9[%175, %c0_60, %c0_61] : memref<8x8x512xf32, #tpu.memory_space<vmem>>, vector<1x8x512xf32>
    %177 = vector.shape_cast %176 : vector<1x8x512xf32> to vector<8x512xf32>
    %cst_62 = arith.constant dense<0.000000e+00> : vector<8x512xf32>
    %178 = tpu.matmul %161, %10, %cst_62 {dimension_numbers = #tpu.dot_dimension_numbers<[1], [0], [0], [1], [0, 0, 1, 1], [], []>} : vector<8x128xf32>, vector<128x512xf32>, vector<8x512xf32> -> vector<8x512xf32>
    %179 = arith.addf %177, %178 : vector<8x512xf32>
    %180 = vector.extract_strided_slice %179 {offsets = [0, 0], sizes = [8, 128], strides = [1, 1]} : vector<8x512xf32> to vector<8x128xf32>
    %cst_63 = arith.constant 5.000000e-01 : f32
    %181 = vector.broadcast %cst_63 : f32 to vector<8x128xf32>
    %182 = arith.mulf %181, %180 : vector<8x128xf32>
    %183 = math.tanh %182 : vector<8x128xf32>
    %cst_64 = arith.constant 5.000000e-01 : f32
    %184 = vector.broadcast %cst_64 : f32 to vector<8x128xf32>
    %185 = arith.mulf %184, %183 : vector<8x128xf32>
    %cst_65 = arith.constant 5.000000e-01 : f32
    %186 = vector.broadcast %cst_65 : f32 to vector<8x128xf32>
    %187 = arith.addf %185, %186 : vector<8x128xf32>
    %188 = vector.extract_strided_slice %179 {offsets = [0, 128], sizes = [8, 128], strides = [1, 1]} : vector<8x512xf32> to vector<8x128xf32>
    %cst_66 = arith.constant 5.000000e-01 : f32
    %189 = vector.broadcast %cst_66 : f32 to vector<8x128xf32>
    %190 = arith.mulf %189, %188 : vector<8x128xf32>
    %191 = math.tanh %190 : vector<8x128xf32>
    %cst_67 = arith.constant 5.000000e-01 : f32
    %192 = vector.broadcast %cst_67 : f32 to vector<8x128xf32>
    %193 = arith.mulf %192, %191 : vector<8x128xf32>
    %cst_68 = arith.constant 5.000000e-01 : f32
    %194 = vector.broadcast %cst_68 : f32 to vector<8x128xf32>
    %195 = arith.addf %193, %194 : vector<8x128xf32>
    %196 = vector.extract_strided_slice %179 {offsets = [0, 256], sizes = [8, 128], strides = [1, 1]} : vector<8x512xf32> to vector<8x128xf32>
    %197 = math.tanh %196 : vector<8x128xf32>
    %198 = vector.extract_strided_slice %179 {offsets = [0, 384], sizes = [8, 128], strides = [1, 1]} : vector<8x512xf32> to vector<8x128xf32>
    %cst_69 = arith.constant 5.000000e-01 : f32
    %199 = vector.broadcast %cst_69 : f32 to vector<8x128xf32>
    %200 = arith.mulf %199, %198 : vector<8x128xf32>
    %201 = math.tanh %200 : vector<8x128xf32>
    %cst_70 = arith.constant 5.000000e-01 : f32
    %202 = vector.broadcast %cst_70 : f32 to vector<8x128xf32>
    %203 = arith.mulf %202, %201 : vector<8x128xf32>
    %cst_71 = arith.constant 5.000000e-01 : f32
    %204 = vector.broadcast %cst_71 : f32 to vector<8x128xf32>
    %205 = arith.addf %203, %204 : vector<8x128xf32>
    %206 = arith.mulf %195, %164 : vector<8x128xf32>
    %207 = arith.mulf %187, %197 : vector<8x128xf32>
    %208 = arith.addf %206, %207 : vector<8x128xf32>
    %209 = math.tanh %208 : vector<8x128xf32>
    %210 = arith.mulf %205, %209 : vector<8x128xf32>
    %211 = vector.broadcast %c3_i32 : i32 to vector<8x1xi32>
    %212 = arith.cmpi slt, %211, %0 : vector<8x1xi32>
    %213 = vector.shape_cast %212 : vector<8x1xi1> to vector<8x1xi1>
    %214 = vector.broadcast %213 : vector<8x1xi1> to vector<8x128xi1>
    %215 = arith.select %214, %210, %161 : vector<8x128xi1>, vector<8x128xf32>
    %216 = vector.shape_cast %212 : vector<8x1xi1> to vector<8x1xi1>
    %217 = vector.broadcast %216 : vector<8x1xi1> to vector<8x128xi1>
    %218 = arith.select %217, %208, %164 : vector<8x128xi1>, vector<8x128xf32>
    %c1_i32_72 = arith.constant 1 : i32
    %219 = vector.broadcast %c1_i32_72 : i32 to vector<8x1xi32>
    %220 = arith.subi %0, %219 : vector<8x1xi32>
    %221 = vector.broadcast %c3_i32 : i32 to vector<8x1xi32>
    %222 = arith.cmpi eq, %221, %220 : vector<8x1xi32>
    %223 = arith.index_cast %c3_i32 : i32 to index
    %c0_73 = arith.constant 0 : index
    %c0_74 = arith.constant 0 : index
    %224 = vector.load %arg1[%223, %c0_73, %c0_74] : memref<8x8x32xf32, #tpu.memory_space<vmem>>, vector<1x8x32xf32>
    %225 = vector.shape_cast %224 : vector<1x8x32xf32> to vector<8x32xf32>
    %226 = vector.shape_cast %222 : vector<8x1xi1> to vector<8x1xi1>
    %227 = vector.broadcast %226 : vector<8x1xi1> to vector<8x32xi1>
    %228 = arith.select %227, %225, %174 : vector<8x32xi1>, vector<8x32xf32>
    %c4_i32 = arith.constant 4 : i32
    %229 = arith.index_cast %c4_i32 : i32 to index
    %c0_75 = arith.constant 0 : index
    %c0_76 = arith.constant 0 : index
    %230 = vector.load %arg9[%229, %c0_75, %c0_76] : memref<8x8x512xf32, #tpu.memory_space<vmem>>, vector<1x8x512xf32>
    %231 = vector.shape_cast %230 : vector<1x8x512xf32> to vector<8x512xf32>
    %cst_77 = arith.constant dense<0.000000e+00> : vector<8x512xf32>
    %232 = tpu.matmul %215, %10, %cst_77 {dimension_numbers = #tpu.dot_dimension_numbers<[1], [0], [0], [1], [0, 0, 1, 1], [], []>} : vector<8x128xf32>, vector<128x512xf32>, vector<8x512xf32> -> vector<8x512xf32>
    %233 = arith.addf %231, %232 : vector<8x512xf32>
    %234 = vector.extract_strided_slice %233 {offsets = [0, 0], sizes = [8, 128], strides = [1, 1]} : vector<8x512xf32> to vector<8x128xf32>
    %cst_78 = arith.constant 5.000000e-01 : f32
    %235 = vector.broadcast %cst_78 : f32 to vector<8x128xf32>
    %236 = arith.mulf %235, %234 : vector<8x128xf32>
    %237 = math.tanh %236 : vector<8x128xf32>
    %cst_79 = arith.constant 5.000000e-01 : f32
    %238 = vector.broadcast %cst_79 : f32 to vector<8x128xf32>
    %239 = arith.mulf %238, %237 : vector<8x128xf32>
    %cst_80 = arith.constant 5.000000e-01 : f32
    %240 = vector.broadcast %cst_80 : f32 to vector<8x128xf32>
    %241 = arith.addf %239, %240 : vector<8x128xf32>
    %242 = vector.extract_strided_slice %233 {offsets = [0, 128], sizes = [8, 128], strides = [1, 1]} : vector<8x512xf32> to vector<8x128xf32>
    %cst_81 = arith.constant 5.000000e-01 : f32
    %243 = vector.broadcast %cst_81 : f32 to vector<8x128xf32>
    %244 = arith.mulf %243, %242 : vector<8x128xf32>
    %245 = math.tanh %244 : vector<8x128xf32>
    %cst_82 = arith.constant 5.000000e-01 : f32
    %246 = vector.broadcast %cst_82 : f32 to vector<8x128xf32>
    %247 = arith.mulf %246, %245 : vector<8x128xf32>
    %cst_83 = arith.constant 5.000000e-01 : f32
    %248 = vector.broadcast %cst_83 : f32 to vector<8x128xf32>
    %249 = arith.addf %247, %248 : vector<8x128xf32>
    %250 = vector.extract_strided_slice %233 {offsets = [0, 256], sizes = [8, 128], strides = [1, 1]} : vector<8x512xf32> to vector<8x128xf32>
    %251 = math.tanh %250 : vector<8x128xf32>
    %252 = vector.extract_strided_slice %233 {offsets = [0, 384], sizes = [8, 128], strides = [1, 1]} : vector<8x512xf32> to vector<8x128xf32>
    %cst_84 = arith.constant 5.000000e-01 : f32
    %253 = vector.broadcast %cst_84 : f32 to vector<8x128xf32>
    %254 = arith.mulf %253, %252 : vector<8x128xf32>
    %255 = math.tanh %254 : vector<8x128xf32>
    %cst_85 = arith.constant 5.000000e-01 : f32
    %256 = vector.broadcast %cst_85 : f32 to vector<8x128xf32>
    %257 = arith.mulf %256, %255 : vector<8x128xf32>
    %cst_86 = arith.constant 5.000000e-01 : f32
    %258 = vector.broadcast %cst_86 : f32 to vector<8x128xf32>
    %259 = arith.addf %257, %258 : vector<8x128xf32>
    %260 = arith.mulf %249, %218 : vector<8x128xf32>
    %261 = arith.mulf %241, %251 : vector<8x128xf32>
    %262 = arith.addf %260, %261 : vector<8x128xf32>
    %263 = math.tanh %262 : vector<8x128xf32>
    %264 = arith.mulf %259, %263 : vector<8x128xf32>
    %265 = vector.broadcast %c4_i32 : i32 to vector<8x1xi32>
    %266 = arith.cmpi slt, %265, %0 : vector<8x1xi32>
    %267 = vector.shape_cast %266 : vector<8x1xi1> to vector<8x1xi1>
    %268 = vector.broadcast %267 : vector<8x1xi1> to vector<8x128xi1>
    %269 = arith.select %268, %264, %215 : vector<8x128xi1>, vector<8x128xf32>
    %270 = vector.shape_cast %266 : vector<8x1xi1> to vector<8x1xi1>
    %271 = vector.broadcast %270 : vector<8x1xi1> to vector<8x128xi1>
    %272 = arith.select %271, %262, %218 : vector<8x128xi1>, vector<8x128xf32>
    %c1_i32_87 = arith.constant 1 : i32
    %273 = vector.broadcast %c1_i32_87 : i32 to vector<8x1xi32>
    %274 = arith.subi %0, %273 : vector<8x1xi32>
    %275 = vector.broadcast %c4_i32 : i32 to vector<8x1xi32>
    %276 = arith.cmpi eq, %275, %274 : vector<8x1xi32>
    %277 = arith.index_cast %c4_i32 : i32 to index
    %c0_88 = arith.constant 0 : index
    %c0_89 = arith.constant 0 : index
    %278 = vector.load %arg1[%277, %c0_88, %c0_89] : memref<8x8x32xf32, #tpu.memory_space<vmem>>, vector<1x8x32xf32>
    %279 = vector.shape_cast %278 : vector<1x8x32xf32> to vector<8x32xf32>
    %280 = vector.shape_cast %276 : vector<8x1xi1> to vector<8x1xi1>
    %281 = vector.broadcast %280 : vector<8x1xi1> to vector<8x32xi1>
    %282 = arith.select %281, %279, %228 : vector<8x32xi1>, vector<8x32xf32>
    %c5_i32 = arith.constant 5 : i32
    %283 = arith.index_cast %c5_i32 : i32 to index
    %c0_90 = arith.constant 0 : index
    %c0_91 = arith.constant 0 : index
    %284 = vector.load %arg9[%283, %c0_90, %c0_91] : memref<8x8x512xf32, #tpu.memory_space<vmem>>, vector<1x8x512xf32>
    %285 = vector.shape_cast %284 : vector<1x8x512xf32> to vector<8x512xf32>
    %cst_92 = arith.constant dense<0.000000e+00> : vector<8x512xf32>
    %286 = tpu.matmul %269, %10, %cst_92 {dimension_numbers = #tpu.dot_dimension_numbers<[1], [0], [0], [1], [0, 0, 1, 1], [], []>} : vector<8x128xf32>, vector<128x512xf32>, vector<8x512xf32> -> vector<8x512xf32>
    %287 = arith.addf %285, %286 : vector<8x512xf32>
    %288 = vector.extract_strided_slice %287 {offsets = [0, 0], sizes = [8, 128], strides = [1, 1]} : vector<8x512xf32> to vector<8x128xf32>
    %cst_93 = arith.constant 5.000000e-01 : f32
    %289 = vector.broadcast %cst_93 : f32 to vector<8x128xf32>
    %290 = arith.mulf %289, %288 : vector<8x128xf32>
    %291 = math.tanh %290 : vector<8x128xf32>
    %cst_94 = arith.constant 5.000000e-01 : f32
    %292 = vector.broadcast %cst_94 : f32 to vector<8x128xf32>
    %293 = arith.mulf %292, %291 : vector<8x128xf32>
    %cst_95 = arith.constant 5.000000e-01 : f32
    %294 = vector.broadcast %cst_95 : f32 to vector<8x128xf32>
    %295 = arith.addf %293, %294 : vector<8x128xf32>
    %296 = vector.extract_strided_slice %287 {offsets = [0, 128], sizes = [8, 128], strides = [1, 1]} : vector<8x512xf32> to vector<8x128xf32>
    %cst_96 = arith.constant 5.000000e-01 : f32
    %297 = vector.broadcast %cst_96 : f32 to vector<8x128xf32>
    %298 = arith.mulf %297, %296 : vector<8x128xf32>
    %299 = math.tanh %298 : vector<8x128xf32>
    %cst_97 = arith.constant 5.000000e-01 : f32
    %300 = vector.broadcast %cst_97 : f32 to vector<8x128xf32>
    %301 = arith.mulf %300, %299 : vector<8x128xf32>
    %cst_98 = arith.constant 5.000000e-01 : f32
    %302 = vector.broadcast %cst_98 : f32 to vector<8x128xf32>
    %303 = arith.addf %301, %302 : vector<8x128xf32>
    %304 = vector.extract_strided_slice %287 {offsets = [0, 256], sizes = [8, 128], strides = [1, 1]} : vector<8x512xf32> to vector<8x128xf32>
    %305 = math.tanh %304 : vector<8x128xf32>
    %306 = vector.extract_strided_slice %287 {offsets = [0, 384], sizes = [8, 128], strides = [1, 1]} : vector<8x512xf32> to vector<8x128xf32>
    %cst_99 = arith.constant 5.000000e-01 : f32
    %307 = vector.broadcast %cst_99 : f32 to vector<8x128xf32>
    %308 = arith.mulf %307, %306 : vector<8x128xf32>
    %309 = math.tanh %308 : vector<8x128xf32>
    %cst_100 = arith.constant 5.000000e-01 : f32
    %310 = vector.broadcast %cst_100 : f32 to vector<8x128xf32>
    %311 = arith.mulf %310, %309 : vector<8x128xf32>
    %cst_101 = arith.constant 5.000000e-01 : f32
    %312 = vector.broadcast %cst_101 : f32 to vector<8x128xf32>
    %313 = arith.addf %311, %312 : vector<8x128xf32>
    %314 = arith.mulf %303, %272 : vector<8x128xf32>
    %315 = arith.mulf %295, %305 : vector<8x128xf32>
    %316 = arith.addf %314, %315 : vector<8x128xf32>
    %317 = math.tanh %316 : vector<8x128xf32>
    %318 = arith.mulf %313, %317 : vector<8x128xf32>
    %319 = vector.broadcast %c5_i32 : i32 to vector<8x1xi32>
    %320 = arith.cmpi slt, %319, %0 : vector<8x1xi32>
    %321 = vector.shape_cast %320 : vector<8x1xi1> to vector<8x1xi1>
    %322 = vector.broadcast %321 : vector<8x1xi1> to vector<8x128xi1>
    %323 = arith.select %322, %318, %269 : vector<8x128xi1>, vector<8x128xf32>
    %324 = vector.shape_cast %320 : vector<8x1xi1> to vector<8x1xi1>
    %325 = vector.broadcast %324 : vector<8x1xi1> to vector<8x128xi1>
    %326 = arith.select %325, %316, %272 : vector<8x128xi1>, vector<8x128xf32>
    %c1_i32_102 = arith.constant 1 : i32
    %327 = vector.broadcast %c1_i32_102 : i32 to vector<8x1xi32>
    %328 = arith.subi %0, %327 : vector<8x1xi32>
    %329 = vector.broadcast %c5_i32 : i32 to vector<8x1xi32>
    %330 = arith.cmpi eq, %329, %328 : vector<8x1xi32>
    %331 = arith.index_cast %c5_i32 : i32 to index
    %c0_103 = arith.constant 0 : index
    %c0_104 = arith.constant 0 : index
    %332 = vector.load %arg1[%331, %c0_103, %c0_104] : memref<8x8x32xf32, #tpu.memory_space<vmem>>, vector<1x8x32xf32>
    %333 = vector.shape_cast %332 : vector<1x8x32xf32> to vector<8x32xf32>
    %334 = vector.shape_cast %330 : vector<8x1xi1> to vector<8x1xi1>
    %335 = vector.broadcast %334 : vector<8x1xi1> to vector<8x32xi1>
    %336 = arith.select %335, %333, %282 : vector<8x32xi1>, vector<8x32xf32>
    %c6_i32 = arith.constant 6 : i32
    %337 = arith.index_cast %c6_i32 : i32 to index
    %c0_105 = arith.constant 0 : index
    %c0_106 = arith.constant 0 : index
    %338 = vector.load %arg9[%337, %c0_105, %c0_106] : memref<8x8x512xf32, #tpu.memory_space<vmem>>, vector<1x8x512xf32>
    %339 = vector.shape_cast %338 : vector<1x8x512xf32> to vector<8x512xf32>
    %cst_107 = arith.constant dense<0.000000e+00> : vector<8x512xf32>
    %340 = tpu.matmul %323, %10, %cst_107 {dimension_numbers = #tpu.dot_dimension_numbers<[1], [0], [0], [1], [0, 0, 1, 1], [], []>} : vector<8x128xf32>, vector<128x512xf32>, vector<8x512xf32> -> vector<8x512xf32>
    %341 = arith.addf %339, %340 : vector<8x512xf32>
    %342 = vector.extract_strided_slice %341 {offsets = [0, 0], sizes = [8, 128], strides = [1, 1]} : vector<8x512xf32> to vector<8x128xf32>
    %cst_108 = arith.constant 5.000000e-01 : f32
    %343 = vector.broadcast %cst_108 : f32 to vector<8x128xf32>
    %344 = arith.mulf %343, %342 : vector<8x128xf32>
    %345 = math.tanh %344 : vector<8x128xf32>
    %cst_109 = arith.constant 5.000000e-01 : f32
    %346 = vector.broadcast %cst_109 : f32 to vector<8x128xf32>
    %347 = arith.mulf %346, %345 : vector<8x128xf32>
    %cst_110 = arith.constant 5.000000e-01 : f32
    %348 = vector.broadcast %cst_110 : f32 to vector<8x128xf32>
    %349 = arith.addf %347, %348 : vector<8x128xf32>
    %350 = vector.extract_strided_slice %341 {offsets = [0, 128], sizes = [8, 128], strides = [1, 1]} : vector<8x512xf32> to vector<8x128xf32>
    %cst_111 = arith.constant 5.000000e-01 : f32
    %351 = vector.broadcast %cst_111 : f32 to vector<8x128xf32>
    %352 = arith.mulf %351, %350 : vector<8x128xf32>
    %353 = math.tanh %352 : vector<8x128xf32>
    %cst_112 = arith.constant 5.000000e-01 : f32
    %354 = vector.broadcast %cst_112 : f32 to vector<8x128xf32>
    %355 = arith.mulf %354, %353 : vector<8x128xf32>
    %cst_113 = arith.constant 5.000000e-01 : f32
    %356 = vector.broadcast %cst_113 : f32 to vector<8x128xf32>
    %357 = arith.addf %355, %356 : vector<8x128xf32>
    %358 = vector.extract_strided_slice %341 {offsets = [0, 256], sizes = [8, 128], strides = [1, 1]} : vector<8x512xf32> to vector<8x128xf32>
    %359 = math.tanh %358 : vector<8x128xf32>
    %360 = vector.extract_strided_slice %341 {offsets = [0, 384], sizes = [8, 128], strides = [1, 1]} : vector<8x512xf32> to vector<8x128xf32>
    %cst_114 = arith.constant 5.000000e-01 : f32
    %361 = vector.broadcast %cst_114 : f32 to vector<8x128xf32>
    %362 = arith.mulf %361, %360 : vector<8x128xf32>
    %363 = math.tanh %362 : vector<8x128xf32>
    %cst_115 = arith.constant 5.000000e-01 : f32
    %364 = vector.broadcast %cst_115 : f32 to vector<8x128xf32>
    %365 = arith.mulf %364, %363 : vector<8x128xf32>
    %cst_116 = arith.constant 5.000000e-01 : f32
    %366 = vector.broadcast %cst_116 : f32 to vector<8x128xf32>
    %367 = arith.addf %365, %366 : vector<8x128xf32>
    %368 = arith.mulf %357, %326 : vector<8x128xf32>
    %369 = arith.mulf %349, %359 : vector<8x128xf32>
    %370 = arith.addf %368, %369 : vector<8x128xf32>
    %371 = math.tanh %370 : vector<8x128xf32>
    %372 = arith.mulf %367, %371 : vector<8x128xf32>
    %373 = vector.broadcast %c6_i32 : i32 to vector<8x1xi32>
    %374 = arith.cmpi slt, %373, %0 : vector<8x1xi32>
    %375 = vector.shape_cast %374 : vector<8x1xi1> to vector<8x1xi1>
    %376 = vector.broadcast %375 : vector<8x1xi1> to vector<8x128xi1>
    %377 = arith.select %376, %372, %323 : vector<8x128xi1>, vector<8x128xf32>
    %378 = vector.shape_cast %374 : vector<8x1xi1> to vector<8x1xi1>
    %379 = vector.broadcast %378 : vector<8x1xi1> to vector<8x128xi1>
    %380 = arith.select %379, %370, %326 : vector<8x128xi1>, vector<8x128xf32>
    %c1_i32_117 = arith.constant 1 : i32
    %381 = vector.broadcast %c1_i32_117 : i32 to vector<8x1xi32>
    %382 = arith.subi %0, %381 : vector<8x1xi32>
    %383 = vector.broadcast %c6_i32 : i32 to vector<8x1xi32>
    %384 = arith.cmpi eq, %383, %382 : vector<8x1xi32>
    %385 = arith.index_cast %c6_i32 : i32 to index
    %c0_118 = arith.constant 0 : index
    %c0_119 = arith.constant 0 : index
    %386 = vector.load %arg1[%385, %c0_118, %c0_119] : memref<8x8x32xf32, #tpu.memory_space<vmem>>, vector<1x8x32xf32>
    %387 = vector.shape_cast %386 : vector<1x8x32xf32> to vector<8x32xf32>
    %388 = vector.shape_cast %384 : vector<8x1xi1> to vector<8x1xi1>
    %389 = vector.broadcast %388 : vector<8x1xi1> to vector<8x32xi1>
    %390 = arith.select %389, %387, %336 : vector<8x32xi1>, vector<8x32xf32>
    %c7_i32 = arith.constant 7 : i32
    %391 = arith.index_cast %c7_i32 : i32 to index
    %c0_120 = arith.constant 0 : index
    %c0_121 = arith.constant 0 : index
    %392 = vector.load %arg9[%391, %c0_120, %c0_121] : memref<8x8x512xf32, #tpu.memory_space<vmem>>, vector<1x8x512xf32>
    %393 = vector.shape_cast %392 : vector<1x8x512xf32> to vector<8x512xf32>
    %cst_122 = arith.constant dense<0.000000e+00> : vector<8x512xf32>
    %394 = tpu.matmul %377, %10, %cst_122 {dimension_numbers = #tpu.dot_dimension_numbers<[1], [0], [0], [1], [0, 0, 1, 1], [], []>} : vector<8x128xf32>, vector<128x512xf32>, vector<8x512xf32> -> vector<8x512xf32>
    %395 = arith.addf %393, %394 : vector<8x512xf32>
    %396 = vector.extract_strided_slice %395 {offsets = [0, 0], sizes = [8, 128], strides = [1, 1]} : vector<8x512xf32> to vector<8x128xf32>
    %cst_123 = arith.constant 5.000000e-01 : f32
    %397 = vector.broadcast %cst_123 : f32 to vector<8x128xf32>
    %398 = arith.mulf %397, %396 : vector<8x128xf32>
    %399 = math.tanh %398 : vector<8x128xf32>
    %cst_124 = arith.constant 5.000000e-01 : f32
    %400 = vector.broadcast %cst_124 : f32 to vector<8x128xf32>
    %401 = arith.mulf %400, %399 : vector<8x128xf32>
    %cst_125 = arith.constant 5.000000e-01 : f32
    %402 = vector.broadcast %cst_125 : f32 to vector<8x128xf32>
    %403 = arith.addf %401, %402 : vector<8x128xf32>
    %404 = vector.extract_strided_slice %395 {offsets = [0, 128], sizes = [8, 128], strides = [1, 1]} : vector<8x512xf32> to vector<8x128xf32>
    %cst_126 = arith.constant 5.000000e-01 : f32
    %405 = vector.broadcast %cst_126 : f32 to vector<8x128xf32>
    %406 = arith.mulf %405, %404 : vector<8x128xf32>
    %407 = math.tanh %406 : vector<8x128xf32>
    %cst_127 = arith.constant 5.000000e-01 : f32
    %408 = vector.broadcast %cst_127 : f32 to vector<8x128xf32>
    %409 = arith.mulf %408, %407 : vector<8x128xf32>
    %cst_128 = arith.constant 5.000000e-01 : f32
    %410 = vector.broadcast %cst_128 : f32 to vector<8x128xf32>
    %411 = arith.addf %409, %410 : vector<8x128xf32>
    %412 = vector.extract_strided_slice %395 {offsets = [0, 256], sizes = [8, 128], strides = [1, 1]} : vector<8x512xf32> to vector<8x128xf32>
    %413 = math.tanh %412 : vector<8x128xf32>
    %414 = vector.extract_strided_slice %395 {offsets = [0, 384], sizes = [8, 128], strides = [1, 1]} : vector<8x512xf32> to vector<8x128xf32>
    %cst_129 = arith.constant 5.000000e-01 : f32
    %415 = vector.broadcast %cst_129 : f32 to vector<8x128xf32>
    %416 = arith.mulf %415, %414 : vector<8x128xf32>
    %417 = math.tanh %416 : vector<8x128xf32>
    %cst_130 = arith.constant 5.000000e-01 : f32
    %418 = vector.broadcast %cst_130 : f32 to vector<8x128xf32>
    %419 = arith.mulf %418, %417 : vector<8x128xf32>
    %cst_131 = arith.constant 5.000000e-01 : f32
    %420 = vector.broadcast %cst_131 : f32 to vector<8x128xf32>
    %421 = arith.addf %419, %420 : vector<8x128xf32>
    %422 = arith.mulf %411, %380 : vector<8x128xf32>
    %423 = arith.mulf %403, %413 : vector<8x128xf32>
    %424 = arith.addf %422, %423 : vector<8x128xf32>
    %425 = math.tanh %424 : vector<8x128xf32>
    %426 = arith.mulf %421, %425 : vector<8x128xf32>
    %427 = vector.broadcast %c7_i32 : i32 to vector<8x1xi32>
    %428 = arith.cmpi slt, %427, %0 : vector<8x1xi32>
    %429 = vector.shape_cast %428 : vector<8x1xi1> to vector<8x1xi1>
    %430 = vector.broadcast %429 : vector<8x1xi1> to vector<8x128xi1>
    %431 = arith.select %430, %426, %377 : vector<8x128xi1>, vector<8x128xf32>
    %432 = vector.shape_cast %428 : vector<8x1xi1> to vector<8x1xi1>
    %433 = vector.broadcast %432 : vector<8x1xi1> to vector<8x128xi1>
    %434 = arith.select %433, %424, %380 : vector<8x128xi1>, vector<8x128xf32>
    %c1_i32_132 = arith.constant 1 : i32
    %435 = vector.broadcast %c1_i32_132 : i32 to vector<8x1xi32>
    %436 = arith.subi %0, %435 : vector<8x1xi32>
    %437 = vector.broadcast %c7_i32 : i32 to vector<8x1xi32>
    %438 = arith.cmpi eq, %437, %436 : vector<8x1xi32>
    %439 = arith.index_cast %c7_i32 : i32 to index
    %c0_133 = arith.constant 0 : index
    %c0_134 = arith.constant 0 : index
    %440 = vector.load %arg1[%439, %c0_133, %c0_134] : memref<8x8x32xf32, #tpu.memory_space<vmem>>, vector<1x8x32xf32>
    %441 = vector.shape_cast %440 : vector<1x8x32xf32> to vector<8x32xf32>
    %442 = vector.shape_cast %438 : vector<8x1xi1> to vector<8x1xi1>
    %443 = vector.broadcast %442 : vector<8x1xi1> to vector<8x32xi1>
    %444 = arith.select %443, %441, %390 : vector<8x32xi1>, vector<8x32xf32>
    %c8_i32 = arith.constant 8 : i32
    %c0_135 = arith.constant 0 : index
    %c0_136 = arith.constant 0 : index
    %445 = vector.load %arg6[%c0_135, %c0_136] : memref<32x512xf32, #tpu.memory_space<vmem>>, vector<32x512xf32>
    %cst_137 = arith.constant dense<0.000000e+00> : vector<8x512xf32>
    %446 = tpu.matmul %444, %445, %cst_137 {dimension_numbers = #tpu.dot_dimension_numbers<[1], [0], [0], [1], [0, 0, 1, 1], [], []>} : vector<8x32xf32>, vector<32x512xf32>, vector<8x512xf32> -> vector<8x512xf32>
    %c0_138 = arith.constant 0 : index
    %c0_139 = arith.constant 0 : index
    %447 = vector.load %arg7[%c0_138, %c0_139] : memref<1x512xf32, #tpu.memory_space<vmem>>, vector<1x512xf32>
    %448 = vector.broadcast %447 : vector<1x512xf32> to vector<8x512xf32>
    %449 = arith.addf %446, %448 : vector<8x512xf32>
    %450 = vector.extract_strided_slice %449 {offsets = [0, 0], sizes = [8, 128], strides = [1, 1]} : vector<8x512xf32> to vector<8x128xf32>
    %cst_140 = arith.constant 5.000000e-01 : f32
    %451 = vector.broadcast %cst_140 : f32 to vector<8x128xf32>
    %452 = arith.mulf %451, %450 : vector<8x128xf32>
    %453 = math.tanh %452 : vector<8x128xf32>
    %cst_141 = arith.constant 5.000000e-01 : f32
    %454 = vector.broadcast %cst_141 : f32 to vector<8x128xf32>
    %455 = arith.mulf %454, %453 : vector<8x128xf32>
    %cst_142 = arith.constant 5.000000e-01 : f32
    %456 = vector.broadcast %cst_142 : f32 to vector<8x128xf32>
    %457 = arith.addf %455, %456 : vector<8x128xf32>
    %458 = vector.extract_strided_slice %449 {offsets = [0, 256], sizes = [8, 128], strides = [1, 1]} : vector<8x512xf32> to vector<8x128xf32>
    %459 = math.tanh %458 : vector<8x128xf32>
    %460 = vector.extract_strided_slice %449 {offsets = [0, 384], sizes = [8, 128], strides = [1, 1]} : vector<8x512xf32> to vector<8x128xf32>
    %cst_143 = arith.constant 5.000000e-01 : f32
    %461 = vector.broadcast %cst_143 : f32 to vector<8x128xf32>
    %462 = arith.mulf %461, %460 : vector<8x128xf32>
    %463 = math.tanh %462 : vector<8x128xf32>
    %cst_144 = arith.constant 5.000000e-01 : f32
    %464 = vector.broadcast %cst_144 : f32 to vector<8x128xf32>
    %465 = arith.mulf %464, %463 : vector<8x128xf32>
    %cst_145 = arith.constant 5.000000e-01 : f32
    %466 = vector.broadcast %cst_145 : f32 to vector<8x128xf32>
    %467 = arith.addf %465, %466 : vector<8x128xf32>
    %468 = arith.mulf %457, %459 : vector<8x128xf32>
    %469 = math.tanh %468 : vector<8x128xf32>
    %470 = arith.mulf %467, %469 : vector<8x128xf32>
    %c0_146 = arith.constant 0 : index
    %c0_147 = arith.constant 0 : index
    %471 = vector.load %arg8[%c0_146, %c0_147] : memref<8x256xf32, #tpu.memory_space<vmem>>, vector<8x128xf32>
    tpu.vector_store %arg8[%c0_146, %c0_147], %431 {strides = array<i32>} : memref<8x256xf32, #tpu.memory_space<vmem>>, vector<8x128xf32>,
    %c0_148 = arith.constant 0 : index
    %c128 = arith.constant 128 : index
    %472 = vector.load %arg8[%c0_148, %c128] : memref<8x256xf32, #tpu.memory_space<vmem>>, vector<8x128xf32>
    tpu.vector_store %arg8[%c0_148, %c128], %470 {strides = array<i32>} : memref<8x256xf32, #tpu.memory_space<vmem>>, vector<8x128xf32>,
    return
  }
  func.func @transform_0(%arg0: i32) -> (i32, i32, i32) {
    %c0_i32 = arith.constant 0 : i32
    %c0_i32_0 = arith.constant 0 : i32
    %c0_i32_1 = arith.constant 0 : i32
    return %c0_i32, %arg0, %c0_i32_0 : i32, i32, i32
  }
  func.func @transform_1(%arg0: i32) -> (i32, i32) {
    %c0_i32 = arith.constant 0 : i32
    %c0_i32_0 = arith.constant 0 : i32
    return %arg0, %c0_i32 : i32, i32
  }
  func.func @transform_2(%arg0: i32) -> (i32, i32) {
    %c0_i32 = arith.constant 0 : i32
    %c0_i32_0 = arith.constant 0 : i32
    %c0_i32_1 = arith.constant 0 : i32
    return %c0_i32, %c0_i32_0 : i32, i32
  }
  func.func @transform_3(%arg0: i32) -> (i32, i32) {
    %c0_i32 = arith.constant 0 : i32
    %c0_i32_0 = arith.constant 0 : i32
    %c0_i32_1 = arith.constant 0 : i32
    return %c0_i32, %c0_i32_0 : i32, i32
  }
  func.func @transform_4(%arg0: i32) -> (i32, i32) {
    %c0_i32 = arith.constant 0 : i32
    %c0_i32_0 = arith.constant 0 : i32
    %c0_i32_1 = arith.constant 0 : i32
    return %c0_i32, %c0_i32_0 : i32, i32
  }
  func.func @transform_5(%arg0: i32) -> (i32, i32) {
    %c0_i32 = arith.constant 0 : i32
    %c0_i32_0 = arith.constant 0 : i32
    %c0_i32_1 = arith.constant 0 : i32
    return %c0_i32, %c0_i32_0 : i32, i32
  }
  func.func @transform_6(%arg0: i32) -> (i32, i32) {
    %c0_i32 = arith.constant 0 : i32
    %c0_i32_0 = arith.constant 0 : i32
    %c0_i32_1 = arith.constant 0 : i32
    return %c0_i32, %c0_i32_0 : i32, i32
  }
  func.func @transform_7(%arg0: i32) -> (i32, i32) {
    %c0_i32 = arith.constant 0 : i32
    %c0_i32_0 = arith.constant 0 : i32
    return %arg0, %c0_i32 : i32, i32
  }
}

</mosaic_0001>

<llo_original>
// kernel: tpu_custom_call.1
$region0: #{tpu_custom_call.1}
  #allocation0 [shape = 'u32[]', space=smem, size = 0x4, offset = 0x4, fixed_abs, tag = 'smem constant byte address 0x4 - core index']
  #allocation1 [shape = 'u32[144,128]{1,0:T(1,128)}', space=vmem, size = 0x12000, scoped, tag = 'internal scratch']
  #allocation2 [shape = 'f32[8,8,512]{2,1,0:T(8,128)}', space=vmem, size = 0x20000, scoped, tag = 'scratch operand']
  %s0 = inlined_call_operand.hbm [shape: f32[8,8,32], index: 0, kind: input, shape index: {}]
  %s1 = inlined_call_operand.vmem [shape: s32[8,1], index: 1, kind: input, shape index: {}]
  %s2 = inlined_call_operand.hbm [shape: f32[32,512], index: 2, kind: input, shape index: {}]
  %s3 = inlined_call_operand.hbm [shape: f32[128,512], index: 3, kind: input, shape index: {}]
  %s4 = inlined_call_operand.vmem [shape: f32[1,512], index: 4, kind: input, shape index: {}]
  %s5 = inlined_call_operand.hbm [shape: f32[32,512], index: 5, kind: input, shape index: {}]
  %s6 = inlined_call_operand.vmem [shape: f32[1,512], index: 6, kind: input, shape index: {}]
  %s7 = inlined_call_operand.hbm [shape: f32[8,256], index: 7, kind: output, shape index: {}]
  %s8 = sld [smem:[#allocation0]]
  $region54: #{tpu_custom_call.1} parent=0
    _
  %s10 = ssub.s32 1, %s8
  %s11 = scalar_select 0, %s10, %s8
  $region1: #{tpu_custom_call.1} parent=0
    #allocation3 [shape = 'u8[32768]{0}', space=vmem, size = 0x8000, scoped, tag = 'input window, operand 0, single buffered']
    #allocation4 [shape = 's32[1]{0}', space=sflag, size = 0x4, scoped, tag = 'scoped memory for tpu_custom_call.1']
    #allocation5 [shape = 's32[1]{0}', space=sflag, size = 0x4, scoped, tag = 'scoped memory for tpu_custom_call.1']
    #allocation6 [shape = 'u8[65536]{0}', space=vmem, size = 0x10000, scoped, tag = 'input window, operand 2, single buffered']
    #allocation7 [shape = 's32[1]{0}', space=sflag, size = 0x4, scoped, tag = 'scoped memory for tpu_custom_call.1']
    #allocation8 [shape = 'u8[262144]{0}', space=vmem, size = 0x40000, scoped, tag = 'input window, operand 3, single buffered']
    #allocation9 [shape = 'u8[65536]{0}', space=vmem, size = 0x10000, scoped, tag = 'input window, operand 5, single buffered']
    #allocation10 [shape = 's32[1]{0}', space=sflag, size = 0x4, scoped, tag = 'scoped memory for tpu_custom_call.1']
    #allocation11 [shape = 'u8[8192]{0}', space=vmem, size = 0x2000, scoped, tag = 'output window, operand 0, single buffered']
    %12 = vsyncpa [#allocation4], 0
    %13 = vsyncpa [#allocation7], 0
    %14 = vsyncpa [#allocation10], 0
    %15 = vsyncpa [#allocation5], 0
    // Predicated region
    $region2: #{tpu_custom_call.1} parent=1 // pred_check
      _
    $region3: #{tpu_custom_call.1} parent=1 // pred_check_branch
      %17 = sbr.rel (0) target = $region5
    $region4: #{tpu_custom_call.1} parent=1 // pred_region
      %s19 = ssub.s32 1024, 1024
      %20 = vsyncadd [#allocation4], %s19
      %s21 = sshll.u32 [#allocation3], 4
      %s22 = int_to_ptr.vmem [resolvable:$true] %s21
      %27 = dma.hbm_to_vmem [thread:$0]  %s0, 1024, %s22, [#allocation4], 128, 128, 8
    $region5: #{tpu_custom_call.1} parent=1 // pred_fallthru
      _
    // Predicated region
    $region6: #{tpu_custom_call.1} parent=1 // pred_check
      _
    $region7: #{tpu_custom_call.1} parent=1 // pred_check_branch
      %29 = sbr.rel (0) target = $region9
    $region8: #{tpu_custom_call.1} parent=1 // pred_region
      _
    $region9: #{tpu_custom_call.1} parent=1 // pred_fallthru
      _
    // Predicated region
    $region10: #{tpu_custom_call.1} parent=1 // pred_check
      _
    $region11: #{tpu_custom_call.1} parent=1 // pred_check_branch
      %31 = sbr.rel (0) target = $region13
    $region12: #{tpu_custom_call.1} parent=1 // pred_region
      %s33 = ssub.s32 2048, 2048
      %34 = vsyncadd [#allocation7], %s33
      %s35 = sshll.u32 [#allocation6], 4
      %s36 = int_to_ptr.vmem [resolvable:$true] %s35
      %41 = dma.hbm_to_vmem [thread:$0]  %s2, 2048, %s36, [#allocation7], 512, 512, 32
    $region13: #{tpu_custom_call.1} parent=1 // pred_fallthru
      _
    // Predicated region
    $region14: #{tpu_custom_call.1} parent=1 // pred_check
      _
    $region15: #{tpu_custom_call.1} parent=1 // pred_check_branch
      %43 = sbr.rel (0) target = $region17
    $region16: #{tpu_custom_call.1} parent=1 // pred_region
      %s45 = ssub.s32 8192, 8192
      %46 = vsyncadd [#allocation7], %s45
      %s47 = sshll.u32 [#allocation8], 4
      %s48 = int_to_ptr.vmem [resolvable:$true] %s47
      %53 = dma.hbm_to_vmem [thread:$0]  %s3, 8192, %s48, [#allocation7], 512, 512, 32
    $region17: #{tpu_custom_call.1} parent=1 // pred_fallthru
      _
    // Predicated region
    $region18: #{tpu_custom_call.1} parent=1 // pred_check
      _
    $region19: #{tpu_custom_call.1} parent=1 // pred_check_branch
      %55 = sbr.rel (0) target = $region21
    $region20: #{tpu_custom_call.1} parent=1 // pred_region
      _
    $region21: #{tpu_custom_call.1} parent=1 // pred_fallthru
      _
    // Predicated region
    $region22: #{tpu_custom_call.1} parent=1 // pred_check
      _
    $region23: #{tpu_custom_call.1} parent=1 // pred_check_branch
      %57 = sbr.rel (0) target = $region25
    $region24: #{tpu_custom_call.1} parent=1 // pred_region
      %s59 = ssub.s32 2048, 2048
      %60 = vsyncadd [#allocation10], %s59
      %s61 = sshll.u32 [#allocation9], 4
      %s62 = int_to_ptr.vmem [resolvable:$true] %s61
      %67 = dma.hbm_to_vmem [thread:$0]  %s5, 2048, %s62, [#allocation10], 512, 512, 32
    $region25: #{tpu_custom_call.1} parent=1 // pred_fallthru
      _
    // Predicated region
    $region26: #{tpu_custom_call.1} parent=1 // pred_check
      _
    $region27: #{tpu_custom_call.1} parent=1 // pred_check_branch
      %69 = sbr.rel (0) target = $region29
    $region28: #{tpu_custom_call.1} parent=1 // pred_region
      _
    $region29: #{tpu_custom_call.1} parent=1 // pred_fallthru
      _
    // Predicated region
    $region30: #{tpu_custom_call.1} parent=1 // pred_check
      _
    $region31: #{tpu_custom_call.1} parent=1 // pred_check_branch
      %71 = sbr.rel (0) target = $region33
    $region32: #{tpu_custom_call.1} parent=1 // pred_region
      %72 = dma.done [#allocation4], 1024
    $region33: #{tpu_custom_call.1} parent=1 // pred_fallthru
      _
    // Predicated region
    $region34: #{tpu_custom_call.1} parent=1 // pred_check
      _
    $region35: #{tpu_custom_call.1} parent=1 // pred_check_branch
      %74 = sbr.rel (0) target = $region37
    $region36: #{tpu_custom_call.1} parent=1 // pred_region
      %75 = dma.done [#allocation7], 2048
    $region37: #{tpu_custom_call.1} parent=1 // pred_fallthru
      _
    // Predicated region
    $region38: #{tpu_custom_call.1} parent=1 // pred_check
      _
    $region39: #{tpu_custom_call.1} parent=1 // pred_check_branch
      %77 = sbr.rel (0) target = $region41
    $region40: #{tpu_custom_call.1} parent=1 // pred_region
      %78 = dma.done [#allocation7], 8192
    $region41: #{tpu_custom_call.1} parent=1 // pred_fallthru
      _
    // Predicated region
    $region42: #{tpu_custom_call.1} parent=1 // pred_check
      _
    $region43: #{tpu_custom_call.1} parent=1 // pred_check_branch
      %80 = sbr.rel (0) target = $region45
    $region44: #{tpu_custom_call.1} parent=1 // pred_region
      %81 = dma.done [#allocation10], 2048
    $region45: #{tpu_custom_call.1} parent=1 // pred_fallthru
      _
    %v82 = vld [vmem:[%s1] sm:$0xff]
    %v83 = vld [vmem:[#allocation3] sm:$0xff]
    %v84 = vld [vmem:[#allocation3 + $0x8] sm:$0xff]
    %v85 = vld [vmem:[#allocation3 + $0x10] sm:$0xff]
    %v86 = vld [vmem:[#allocation3 + $0x18] sm:$0xff]
    %v87 = vld [vmem:[#allocation3 + $0x20] sm:$0xff]
    %v88 = vld [vmem:[#allocation3 + $0x28] sm:$0xff]
    %v89 = vld [vmem:[#allocation3 + $0x30] sm:$0xff]
    %v90 = vld [vmem:[#allocation3 + $0x38] sm:$0xff]
    %v91 = vld [vmem:[#allocation6] sm:$0xff]
    %v92 = vld [vmem:[#allocation6 + $0x8] sm:$0xff]
    %v93 = vld [vmem:[#allocation6 + $0x10] sm:$0xff]
    %v94 = vld [vmem:[#allocation6 + $0x18] sm:$0xff]
    %v95 = vld [vmem:[#allocation6 + $0x20] sm:$0xff]
    %v96 = vld [vmem:[#allocation6 + $0x28] sm:$0xff]
    %v97 = vld [vmem:[#allocation6 + $0x30] sm:$0xff]
    %v98 = vld [vmem:[#allocation6 + $0x38] sm:$0xff]
    %v99 = vld [vmem:[#allocation6 + $0x40] sm:$0xff]
    %v100 = vld [vmem:[#allocation6 + $0x48] sm:$0xff]
    %v101 = vld [vmem:[#allocation6 + $0x50] sm:$0xff]
    %v102 = vld [vmem:[#allocation6 + $0x58] sm:$0xff]
    %v103 = vld [vmem:[#allocation6 + $0x60] sm:$0xff]
    %v104 = vld [vmem:[#allocation6 + $0x68] sm:$0xff]
    %v105 = vld [vmem:[#allocation6 + $0x70] sm:$0xff]
    %v106 = vld [vmem:[#allocation6 + $0x78] sm:$0xff]
    %v107 = vld [vmem:[%s4] sm:$0xf]
    %v109 = vlaneseq
    %v110 = vshrl.u32 %v109, 7
    %v111 = vsub.s32 0, %v110
    %v112 = vrot.slane %v107, %v111
    %v113 = vlaneseq
    %v114 = vshrl.u32 %v113, 7
    %v115 = vsub.s32 1, %v114
    %v116 = vrot.slane %v107, %v115
    %v117 = vlaneseq
    %v118 = vshrl.u32 %v117, 7
    %v119 = vsub.s32 2, %v118
    %v120 = vrot.slane %v107, %v119
    %v121 = vlaneseq
    %v122 = vshrl.u32 %v121, 7
    %v123 = vsub.s32 3, %v122
    %v124 = vrot.slane %v107, %v123
    %vm129 = vcmask 261120
    %v131 = vsel %vm129, %v83, 0
    %v134 = vsel %vm129, %v84, 0
    %v137 = vsel %vm129, %v85, 0
    %v140 = vsel %vm129, %v86, 0
    %v143 = vsel %vm129, %v87, 0
    %v146 = vsel %vm129, %v88, 0
    %v149 = vsel %vm129, %v89, 0
    %v152 = vsel %vm129, %v90, 0
    %154 = vmatprep.subr.mxu0 %v92
    %155 = vmatpush1.msra.mxu0 %v91
    %156 = vmatprep.subr.mxu0 %v96
    %157 = vmatpush1.msra.mxu0 %v95
    %158 = vmatprep.subr.mxu0 %v100
    %159 = vmatpush1.msra.mxu0 %v99
    %160 = vmatprep.subr.mxu0 %v104
    %161 = vmatpush1.msra.mxu0 %v103
    %162 = vmatprep.subr.mxu0 0.0
    %163 = vmatpush1.msra.mxu0 0.0
    %164 = vmatprep.subr.mxu0 0.0
    %165 = vmatpush1.msra.mxu0 0.0
    %166 = vmatprep.subr.mxu0 0.0
    %167 = vmatpush1.msra.mxu0 0.0
    %168 = vmatprep.subr.mxu0 0.0
    %169 = vmatpush1.msra.mxu0 0.0
    %170 = vmatprep.subr.mxu0 0.0
    %171 = vmatpush1.msra.mxu0 0.0
    %172 = vmatprep.subr.mxu0 0.0
    %173 = vmatpush1.msra.mxu0 0.0
    %174 = vmatprep.subr.mxu0 0.0
    %175 = vmatpush1.msra.mxu0 0.0
    %176 = vmatprep.subr.mxu0 0.0
    %177 = vmatpush1.msra.mxu0 0.0
    %178 = vmatprep.subr.mxu0 0.0
    %179 = vmatpush1.msra.mxu0 0.0
    %180 = vmatprep.subr.mxu0 0.0
    %181 = vmatpush1.msra.mxu0 0.0
    %182 = vmatprep.subr.mxu0 0.0
    %183 = vmatpush1.msra.mxu0 0.0
    %184 = vmatprep.subr.mxu0 0.0
    %185 = vmatpush1.msra.mxu0 0.0
    %186 = vmatprep.subr.mxu0 0.0
    %187 = vmatpush1.msra.mxu0 0.0
    %188 = vmatprep.subr.mxu0 0.0
    %189 = vmatpush1.msra.mxu0 0.0
    %190 = vmatprep.subr.mxu0 0.0
    %191 = vmatpush1.msra.mxu0 0.0
    %192 = vmatprep.subr.mxu0 0.0
    %193 = vmatpush1.msra.mxu0 0.0
    %194 = vmatprep.subr.mxu0 0.0
    %195 = vmatpush1.msra.mxu0 0.0
    %196 = vmatprep.subr.mxu0 0.0
    %197 = vmatpush1.msra.mxu0 0.0
    %198 = vmatprep.subr.mxu0 0.0
    %199 = vmatpush1.msra.mxu0 0.0
    %200 = vmatprep.subr.mxu0 0.0
    %201 = vmatpush1.msra.mxu0 0.0
    %202 = vmatprep.subr.mxu0 0.0
    %203 = vmatpush1.msra.mxu0 0.0
    %204 = vmatprep.subr.mxu0 0.0
    %205 = vmatpush1.msra.mxu0 0.0
    %206 = vmatprep.subr.mxu0 0.0
    %207 = vmatpush1.msra.mxu0 0.0
    %208 = vmatprep.subr.mxu0 0.0
    %209 = vmatpush1.msra.mxu0 0.0
    %210 = vmatprep.subr.mxu0 0.0
    %211 = vmatpush1.msra.mxu0 0.0
    %212 = vmatprep.subr.mxu0 0.0
    %213 = vmatpush1.msra.mxu0 0.0
    %214 = vmatprep.subr.mxu0 0.0
    %215 = vmatpush1.msra.mxu0 0.0
    %216 = vmatprep.subr.mxu0 0.0
    %217 = vmatpush1.msra.mxu0 0.0
    %218 = vmatprep.mubr.f32.mxu0 0.0
    %219 = vmatmul.mubr.f32.gmra.mrb[0].mxu0 %v131
    %v220 = vpop.f32.mrb[0].mxu0
    %v221 = vadd.f32 %v112, %v220
    %v222 = vpop.f32.mrb[0].mxu0
    %v223 = vadd.f32 %v116, %v222
    %224 = vmatprep.mubr.f32.mxu0 0.0
    %225 = vmatmul.mubr.f32.gmra.mrb[0].mxu0 %v134
    %v226 = vpop.f32.mrb[0].mxu0
    %v227 = vadd.f32 %v112, %v226
    %v228 = vpop.f32.mrb[0].mxu0
    %v229 = vadd.f32 %v116, %v228
    %230 = vmatprep.mubr.f32.mxu0 0.0
    %231 = vmatmul.mubr.f32.gmra.mrb[0].mxu0 %v137
    %v232 = vpop.f32.mrb[0].mxu0
    %v233 = vadd.f32 %v112, %v232
    %v234 = vpop.f32.mrb[0].mxu0
    %v235 = vadd.f32 %v116, %v234
    %236 = vmatprep.mubr.f32.mxu0 0.0
    %237 = vmatmul.mubr.f32.gmra.mrb[0].mxu0 %v140
    %v238 = vpop.f32.mrb[0].mxu0
    %v239 = vadd.f32 %v112, %v238
    %v240 = vpop.f32.mrb[0].mxu0
    %v241 = vadd.f32 %v116, %v240
    %242 = vmatprep.mubr.f32.mxu0 0.0
    %243 = vmatmul.mubr.f32.gmra.mrb[0].mxu0 %v143
    %v244 = vpop.f32.mrb[0].mxu0
    %v245 = vadd.f32 %v112, %v244
    %v246 = vpop.f32.mrb[0].mxu0
    %v247 = vadd.f32 %v116, %v246
    %248 = vmatprep.mubr.f32.mxu0 0.0
    %249 = vmatmul.mubr.f32.gmra.mrb[0].mxu0 %v146
    %v250 = vpop.f32.mrb[0].mxu0
    %v251 = vadd.f32 %v112, %v250
    %v252 = vpop.f32.mrb[0].mxu0
    %v253 = vadd.f32 %v116, %v252
    %254 = vmatprep.mubr.f32.mxu0 0.0
    %255 = vmatmul.mubr.f32.gmra.mrb[0].mxu0 %v149
    %v256 = vpop.f32.mrb[0].mxu0
    %v257 = vadd.f32 %v112, %v256
    %v258 = vpop.f32.mrb[0].mxu0
    %v259 = vadd.f32 %v116, %v258
    %260 = vmatprep.mubr.f32.mxu0 0.0
    %261 = vmatmul.mubr.f32.gmra.mrb[0].mxu0 %v152
    %v262 = vpop.f32.mrb[0].mxu0
    %v263 = vadd.f32 %v112, %v262
    %v264 = vpop.f32.mrb[0].mxu0
    %v265 = vadd.f32 %v116, %v264
    %266 = vdwg.mxu0
    %267 = vmatprep.subr.mxu0 %v94
    %268 = vmatpush1.msra.mxu0 %v93
    %269 = vmatprep.subr.mxu0 %v98
    %270 = vmatpush1.msra.mxu0 %v97
    %271 = vmatprep.subr.mxu0 %v102
    %272 = vmatpush1.msra.mxu0 %v101
    %273 = vmatprep.subr.mxu0 %v106
    %274 = vmatpush1.msra.mxu0 %v105
    %275 = vmatprep.subr.mxu0 0.0
    %276 = vmatpush1.msra.mxu0 0.0
    %277 = vmatprep.subr.mxu0 0.0
    %278 = vmatpush1.msra.mxu0 0.0
    %279 = vmatprep.subr.mxu0 0.0
    %280 = vmatpush1.msra.mxu0 0.0
    %281 = vmatprep.subr.mxu0 0.0
    %282 = vmatpush1.msra.mxu0 0.0
    %283 = vmatprep.subr.mxu0 0.0
    %284 = vmatpush1.msra.mxu0 0.0
    %285 = vmatprep.subr.mxu0 0.0
    %286 = vmatpush1.msra.mxu0 0.0
    %287 = vmatprep.subr.mxu0 0.0
    %288 = vmatpush1.msra.mxu0 0.0
    %289 = vmatprep.subr.mxu0 0.0
    %290 = vmatpush1.msra.mxu0 0.0
    %291 = vmatprep.subr.mxu0 0.0
    %292 = vmatpush1.msra.mxu0 0.0
    %293 = vmatprep.subr.mxu0 0.0
    %294 = vmatpush1.msra.mxu0 0.0
    %295 = vmatprep.subr.mxu0 0.0
    %296 = vmatpush1.msra.mxu0 0.0
    %297 = vmatprep.subr.mxu0 0.0
    %298 = vmatpush1.msra.mxu0 0.0
    %299 = vmatprep.subr.mxu0 0.0
    %300 = vmatpush1.msra.mxu0 0.0
    %301 = vmatprep.subr.mxu0 0.0
    %302 = vmatpush1.msra.mxu0 0.0
    %303 = vmatprep.subr.mxu0 0.0
    %304 = vmatpush1.msra.mxu0 0.0
    %305 = vmatprep.subr.mxu0 0.0
    %306 = vmatpush1.msra.mxu0 0.0
    %307 = vmatprep.subr.mxu0 0.0
    %308 = vmatpush1.msra.mxu0 0.0
    %309 = vmatprep.subr.mxu0 0.0
    %310 = vmatpush1.msra.mxu0 0.0
    %311 = vmatprep.subr.mxu0 0.0
    %312 = vmatpush1.msra.mxu0 0.0
    %313 = vmatprep.subr.mxu0 0.0
    %314 = vmatpush1.msra.mxu0 0.0
    %315 = vmatprep.subr.mxu0 0.0
    %316 = vmatpush1.msra.mxu0 0.0
    %317 = vmatprep.subr.mxu0 0.0
    %318 = vmatpush1.msra.mxu0 0.0
    %319 = vmatprep.subr.mxu0 0.0
    %320 = vmatpush1.msra.mxu0 0.0
    %321 = vmatprep.subr.mxu0 0.0
    %322 = vmatpush1.msra.mxu0 0.0
    %323 = vmatprep.subr.mxu0 0.0
    %324 = vmatpush1.msra.mxu0 0.0
    %325 = vmatprep.subr.mxu0 0.0
    %326 = vmatpush1.msra.mxu0 0.0
    %327 = vmatprep.subr.mxu0 0.0
    %328 = vmatpush1.msra.mxu0 0.0
    %329 = vmatprep.subr.mxu0 0.0
    %330 = vmatpush1.msra.mxu0 0.0
    %331 = vmatprep.mubr.f32.mxu0 0.0
    %332 = vmatmul.mubr.f32.gmra.mrb[0].mxu0 %v131
    %v333 = vpop.f32.mrb[0].mxu0
    %v334 = vadd.f32 %v120, %v333
    %v335 = vpop.f32.mrb[0].mxu0
    %v336 = vadd.f32 %v124, %v335
    %337 = vmatprep.mubr.f32.mxu0 0.0
    %338 = vmatmul.mubr.f32.gmra.mrb[0].mxu0 %v134
    %v339 = vpop.f32.mrb[0].mxu0
    %v340 = vadd.f32 %v120, %v339
    %v341 = vpop.f32.mrb[0].mxu0
    %v342 = vadd.f32 %v124, %v341
    %343 = vmatprep.mubr.f32.mxu0 0.0
    %344 = vmatmul.mubr.f32.gmra.mrb[0].mxu0 %v137
    %v345 = vpop.f32.mrb[0].mxu0
    %v346 = vadd.f32 %v120, %v345
    %v347 = vpop.f32.mrb[0].mxu0
    %v348 = vadd.f32 %v124, %v347
    %349 = vmatprep.mubr.f32.mxu0 0.0
    %350 = vmatmul.mubr.f32.gmra.mrb[0].mxu0 %v140
    %v351 = vpop.f32.mrb[0].mxu0
    %v352 = vadd.f32 %v120, %v351
    %v353 = vpop.f32.mrb[0].mxu0
    %v354 = vadd.f32 %v124, %v353
    %355 = vmatprep.mubr.f32.mxu0 0.0
    %356 = vmatmul.mubr.f32.gmra.mrb[0].mxu0 %v143
    %v357 = vpop.f32.mrb[0].mxu0
    %v358 = vadd.f32 %v120, %v357
    %v359 = vpop.f32.mrb[0].mxu0
    %v360 = vadd.f32 %v124, %v359
    %361 = vmatprep.mubr.f32.mxu0 0.0
    %362 = vmatmul.mubr.f32.gmra.mrb[0].mxu0 %v146
    %v363 = vpop.f32.mrb[0].mxu0
    %v364 = vadd.f32 %v120, %v363
    %v365 = vpop.f32.mrb[0].mxu0
    %v366 = vadd.f32 %v124, %v365
    %367 = vmatprep.mubr.f32.mxu0 0.0
    %368 = vmatmul.mubr.f32.gmra.mrb[0].mxu0 %v149
    %v369 = vpop.f32.mrb[0].mxu0
    %v370 = vadd.f32 %v120, %v369
    %v371 = vpop.f32.mrb[0].mxu0
    %v372 = vadd.f32 %v124, %v371
    %373 = vmatprep.mubr.f32.mxu0 0.0
    %374 = vmatmul.mubr.f32.gmra.mrb[0].mxu0 %v152
    %v375 = vpop.f32.mrb[0].mxu0
    %v376 = vadd.f32 %v120, %v375
    %v377 = vpop.f32.mrb[0].mxu0
    %v378 = vadd.f32 %v124, %v377
    %379 = vdwg.mxu0
    %380 = vst [vmem:[#allocation2] sm:$0xff] %v221
    %381 = vst [vmem:[#allocation2 + $0x8] sm:$0xff] %v223
    %382 = vst [vmem:[#allocation2 + $0x10] sm:$0xff] %v334
    %383 = vst [vmem:[#allocation2 + $0x18] sm:$0xff] %v336
    %384 = vst [vmem:[#allocation2 + $0x20] sm:$0xff] %v227
    %385 = vst [vmem:[#allocation2 + $0x28] sm:$0xff] %v229
    %386 = vst [vmem:[#allocation2 + $0x30] sm:$0xff] %v340
    %387 = vst [vmem:[#allocation2 + $0x38] sm:$0xff] %v342
    %388 = vst [vmem:[#allocation2 + $0x40] sm:$0xff] %v233
    %389 = vst [vmem:[#allocation2 + $0x48] sm:$0xff] %v235
    %390 = vst [vmem:[#allocation2 + $0x50] sm:$0xff] %v346
    %391 = vst [vmem:[#allocation2 + $0x58] sm:$0xff] %v348
    %392 = vst [vmem:[#allocation2 + $0x60] sm:$0xff] %v239
    %393 = vst [vmem:[#allocation2 + $0x68] sm:$0xff] %v241
    %394 = vst [vmem:[#allocation2 + $0x70] sm:$0xff] %v352
    %395 = vst [vmem:[#allocation2 + $0x78] sm:$0xff] %v354
    %396 = vst [vmem:[#allocation2 + $0x80] sm:$0xff] %v245
    %397 = vst [vmem:[#allocation2 + $0x88] sm:$0xff] %v247
    %398 = vst [vmem:[#allocation2 + $0x90] sm:$0xff] %v358
    %399 = vst [vmem:[#allocation2 + $0x98] sm:$0xff] %v360
    %400 = vst [vmem:[#allocation2 + $0xa0] sm:$0xff] %v251
    %401 = vst [vmem:[#allocation2 + $0xa8] sm:$0xff] %v253
    %402 = vst [vmem:[#allocation2 + $0xb0] sm:$0xff] %v364
    %403 = vst [vmem:[#allocation2 + $0xb8] sm:$0xff] %v366
    %404 = vst [vmem:[#allocation2 + $0xc0] sm:$0xff] %v257
    %405 = vst [vmem:[#allocation2 + $0xc8] sm:$0xff] %v259
    %406 = vst [vmem:[#allocation2 + $0xd0] sm:$0xff] %v370
    %407 = vst [vmem:[#allocation2 + $0xd8] sm:$0xff] %v372
    %408 = vst [vmem:[#allocation2 + $0xe0] sm:$0xff] %v263
    %409 = vst [vmem:[#allocation2 + $0xe8] sm:$0xff] %v265
    %410 = vst [vmem:[#allocation2 + $0xf0] sm:$0xff] %v376
    %411 = vst [vmem:[#allocation2 + $0xf8] sm:$0xff] %v378
    %v412 = vld [vmem:[#allocation8] sm:$0xff]
    %v413 = vld [vmem:[#allocation8 + $0x8] sm:$0xff]
    %v414 = vld [vmem:[#allocation8 + $0x10] sm:$0xff]
    %v415 = vld [vmem:[#allocation8 + $0x18] sm:$0xff]
    %v416 = vld [vmem:[#allocation8 + $0x20] sm:$0xff]
    %v417 = vld [vmem:[#allocation8 + $0x28] sm:$0xff]
    %v418 = vld [vmem:[#allocation8 + $0x30] sm:$0xff]
    %v419 = vld [vmem:[#allocation8 + $0x38] sm:$0xff]
    %v420 = vld [vmem:[#allocation8 + $0x40] sm:$0xff]
    %v421 = vld [vmem:[#allocation8 + $0x48] sm:$0xff]
    %v422 = vld [vmem:[#allocation8 + $0x50] sm:$0xff]
    %v423 = vld [vmem:[#allocation8 + $0x58] sm:$0xff]
    %v424 = vld [vmem:[#allocation8 + $0x60] sm:$0xff]
    %v425 = vld [vmem:[#allocation8 + $0x68] sm:$0xff]
    %v426 = vld [vmem:[#allocation8 + $0x70] sm:$0xff]
    %v427 = vld [vmem:[#allocation8 + $0x78] sm:$0xff]
    %v428 = vld [vmem:[#allocation8 + $0x80] sm:$0xff]
    %v429 = vld [vmem:[#allocation8 + $0x88] sm:$0xff]
    %v430 = vld [vmem:[#allocation8 + $0x90] sm:$0xff]
    %v431 = vld [vmem:[#allocation8 + $0x98] sm:$0xff]
    %v432 = vld [vmem:[#allocation8 + $0xa0] sm:$0xff]
    %v433 = vld [vmem:[#allocation8 + $0xa8] sm:$0xff]
    %v434 = vld [vmem:[#allocation8 + $0xb0] sm:$0xff]
    %v435 = vld [vmem:[#allocation8 + $0xb8] sm:$0xff]
    %v436 = vld [vmem:[#allocation8 + $0xc0] sm:$0xff]
    %v437 = vld [vmem:[#allocation8 + $0xc8] sm:$0xff]
    %v438 = vld [vmem:[#allocation8 + $0xd0] sm:$0xff]
    %v439 = vld [vmem:[#allocation8 + $0xd8] sm:$0xff]
    %v440 = vld [vmem:[#allocation8 + $0xe0] sm:$0xff]
    %v441 = vld [vmem:[#allocation8 + $0xe8] sm:$0xff]
    %v442 = vld [vmem:[#allocation8 + $0xf0] sm:$0xff]
    %v443 = vld [vmem:[#allocation8 + $0xf8] sm:$0xff]
    %v444 = vld [vmem:[#allocation8 + $0x100] sm:$0xff]
    %v445 = vld [vmem:[#allocation8 + $0x108] sm:$0xff]
    %v446 = vld [vmem:[#allocation8 + $0x110] sm:$0xff]
    %v447 = vld [vmem:[#allocation8 + $0x118] sm:$0xff]
    %v448 = vld [vmem:[#allocation8 + $0x120] sm:$0xff]
    %v449 = vld [vmem:[#allocation8 + $0x128] sm:$0xff]
    %v450 = vld [vmem:[#allocation8 + $0x130] sm:$0xff]
    %v451 = vld [vmem:[#allocation8 + $0x138] sm:$0xff]
    %v452 = vld [vmem:[#allocation8 + $0x140] sm:$0xff]
    %v453 = vld [vmem:[#allocation8 + $0x148] sm:$0xff]
    %v454 = vld [vmem:[#allocation8 + $0x150] sm:$0xff]
    %v455 = vld [vmem:[#allocation8 + $0x158] sm:$0xff]
    %v456 = vld [vmem:[#allocation8 + $0x160] sm:$0xff]
    %v457 = vld [vmem:[#allocation8 + $0x168] sm:$0xff]
    %v458 = vld [vmem:[#allocation8 + $0x170] sm:$0xff]
    %v459 = vld [vmem:[#allocation8 + $0x178] sm:$0xff]
    %v460 = vld [vmem:[#allocation8 + $0x180] sm:$0xff]
    %v461 = vld [vmem:[#allocation8 + $0x188] sm:$0xff]
    %v462 = vld [vmem:[#allocation8 + $0x190] sm:$0xff]
    %v463 = vld [vmem:[#allocation8 + $0x198] sm:$0xff]
    %v464 = vld [vmem:[#allocation8 + $0x1a0] sm:$0xff]
    %v465 = vld [vmem:[#allocation8 + $0x1a8] sm:$0xff]
    %v466 = vld [vmem:[#allocation8 + $0x1b0] sm:$0xff]
    %v467 = vld [vmem:[#allocation8 + $0x1b8] sm:$0xff]
    %v468 = vld [vmem:[#allocation8 + $0x1c0] sm:$0xff]
    %v469 = vld [vmem:[#allocation8 + $0x1c8] sm:$0xff]
    %v470 = vld [vmem:[#allocation8 + $0x1d0] sm:$0xff]
    %v471 = vld [vmem:[#allocation8 + $0x1d8] sm:$0xff]
    %v472 = vld [vmem:[#allocation8 + $0x1e0] sm:$0xff]
    %v473 = vld [vmem:[#allocation8 + $0x1e8] sm:$0xff]
    %v474 = vld [vmem:[#allocation8 + $0x1f0] sm:$0xff]
    %v475 = vld [vmem:[#allocation8 + $0x1f8] sm:$0xff]
    %v476 = vld [vmem:[#allocation2] sm:$0xff]
    %v477 = vld [vmem:[#allocation2 + $0x8] sm:$0xff]
    %v478 = vld [vmem:[#allocation2 + $0x10] sm:$0xff]
    %v479 = vld [vmem:[#allocation2 + $0x18] sm:$0xff]
    %480 = vmatprep.subr.mxu0 %v413
    %481 = vmatpush1.msra.mxu0 %v412
    %482 = vmatprep.subr.mxu0 %v417
    %483 = vmatpush1.msra.mxu0 %v416
    %484 = vmatprep.subr.mxu0 %v421
    %485 = vmatpush1.msra.mxu0 %v420
    %486 = vmatprep.subr.mxu0 %v425
    %487 = vmatpush1.msra.mxu0 %v424
    %488 = vmatprep.subr.mxu0 %v429
    %489 = vmatpush1.msra.mxu0 %v428
    %490 = vmatprep.subr.mxu0 %v433
    %491 = vmatpush1.msra.mxu0 %v432
    %492 = vmatprep.subr.mxu0 %v437
    %493 = vmatpush1.msra.mxu0 %v436
    %494 = vmatprep.subr.mxu0 %v441
    %495 = vmatpush1.msra.mxu0 %v440
    %496 = vmatprep.subr.mxu0 %v445
    %497 = vmatpush1.msra.mxu0 %v444
    %498 = vmatprep.subr.mxu0 %v449
    %499 = vmatpush1.msra.mxu0 %v448
    %500 = vmatprep.subr.mxu0 %v453
    %501 = vmatpush1.msra.mxu0 %v452
    %502 = vmatprep.subr.mxu0 %v457
    %503 = vmatpush1.msra.mxu0 %v456
    %504 = vmatprep.subr.mxu0 %v461
    %505 = vmatpush1.msra.mxu0 %v460
    %506 = vmatprep.subr.mxu0 %v465
    %507 = vmatpush1.msra.mxu0 %v464
    %508 = vmatprep.subr.mxu0 %v469
    %509 = vmatpush1.msra.mxu0 %v468
    %510 = vmatprep.subr.mxu0 %v473
    %511 = vmatpush1.msra.mxu0 %v472
    %512 = vmatprep.subr.mxu0 0.0
    %513 = vmatpush1.msra.mxu0 0.0
    %514 = vmatprep.subr.mxu0 0.0
    %515 = vmatpush1.msra.mxu0 0.0
    %516 = vmatprep.subr.mxu0 0.0
    %517 = vmatpush1.msra.mxu0 0.0
    %518 = vmatprep.subr.mxu0 0.0
    %519 = vmatpush1.msra.mxu0 0.0
    %520 = vmatprep.subr.mxu0 0.0
    %521 = vmatpush1.msra.mxu0 0.0
    %522 = vmatprep.subr.mxu0 0.0
    %523 = vmatpush1.msra.mxu0 0.0
    %524 = vmatprep.subr.mxu0 0.0
    %525 = vmatpush1.msra.mxu0 0.0
    %526 = vmatprep.subr.mxu0 0.0
    %527 = vmatpush1.msra.mxu0 0.0
    %528 = vmatprep.subr.mxu0 0.0
    %529 = vmatpush1.msra.mxu0 0.0
    %530 = vmatprep.subr.mxu0 0.0
    %531 = vmatpush1.msra.mxu0 0.0
    %532 = vmatprep.subr.mxu0 0.0
    %533 = vmatpush1.msra.mxu0 0.0
    %534 = vmatprep.subr.mxu0 0.0
    %535 = vmatpush1.msra.mxu0 0.0
    %536 = vmatprep.subr.mxu0 0.0
    %537 = vmatpush1.msra.mxu0 0.0
    %538 = vmatprep.subr.mxu0 0.0
    %539 = vmatpush1.msra.mxu0 0.0
    %540 = vmatprep.subr.mxu0 0.0
    %541 = vmatpush1.msra.mxu0 0.0
    %542 = vmatprep.subr.mxu0 0.0
    %543 = vmatpush1.msra.mxu0 0.0
    %544 = vmatprep.mubr.f32.mxu0 0.0
    %545 = vmatmul.mubr.f32.gmra.mrb[0].mxu0 0.0
    %v546 = vpop.f32.mrb[0].mxu0
    %v547 = vadd.f32 0.0, %v546
    %v548 = vpop.f32.mrb[0].mxu0
    %v549 = vadd.f32 0.0, %v548
    %550 = vdwg.mxu0
    %551 = vmatprep.subr.mxu0 %v415
    %552 = vmatpush1.msra.mxu0 %v414
    %553 = vmatprep.subr.mxu0 %v419
    %554 = vmatpush1.msra.mxu0 %v418
    %555 = vmatprep.subr.mxu0 %v423
    %556 = vmatpush1.msra.mxu0 %v422
    %557 = vmatprep.subr.mxu0 %v427
    %558 = vmatpush1.msra.mxu0 %v426
    %559 = vmatprep.subr.mxu0 %v431
    %560 = vmatpush1.msra.mxu0 %v430
    %561 = vmatprep.subr.mxu0 %v435
    %562 = vmatpush1.msra.mxu0 %v434
    %563 = vmatprep.subr.mxu0 %v439
    %564 = vmatpush1.msra.mxu0 %v438
    %565 = vmatprep.subr.mxu0 %v443
    %566 = vmatpush1.msra.mxu0 %v442
    %567 = vmatprep.subr.mxu0 %v447
    %568 = vmatpush1.msra.mxu0 %v446
    %569 = vmatprep.subr.mxu0 %v451
    %570 = vmatpush1.msra.mxu0 %v450
    %571 = vmatprep.subr.mxu0 %v455
    %572 = vmatpush1.msra.mxu0 %v454
    %573 = vmatprep.subr.mxu0 %v459
    %574 = vmatpush1.msra.mxu0 %v458
    %575 = vmatprep.subr.mxu0 %v463
    %576 = vmatpush1.msra.mxu0 %v462
    %577 = vmatprep.subr.mxu0 %v467
    %578 = vmatpush1.msra.mxu0 %v466
    %579 = vmatprep.subr.mxu0 %v471
    %580 = vmatpush1.msra.mxu0 %v470
    %581 = vmatprep.subr.mxu0 %v475
    %582 = vmatpush1.msra.mxu0 %v474
    %583 = vmatprep.subr.mxu0 0.0
    %584 = vmatpush1.msra.mxu0 0.0
    %585 = vmatprep.subr.mxu0 0.0
    %586 = vmatpush1.msra.mxu0 0.0
    %587 = vmatprep.subr.mxu0 0.0
    %588 = vmatpush1.msra.mxu0 0.0
    %589 = vmatprep.subr.mxu0 0.0
    %590 = vmatpush1.msra.mxu0 0.0
    %591 = vmatprep.subr.mxu0 0.0
    %592 = vmatpush1.msra.mxu0 0.0
    %593 = vmatprep.subr.mxu0 0.0
    %594 = vmatpush1.msra.mxu0 0.0
    %595 = vmatprep.subr.mxu0 0.0
    %596 = vmatpush1.msra.mxu0 0.0
    %597 = vmatprep.subr.mxu0 0.0
    %598 = vmatpush1.msra.mxu0 0.0
    %599 = vmatprep.subr.mxu0 0.0
    %600 = vmatpush1.msra.mxu0 0.0
    %601 = vmatprep.subr.mxu0 0.0
    %602 = vmatpush1.msra.mxu0 0.0
    %603 = vmatprep.subr.mxu0 0.0
    %604 = vmatpush1.msra.mxu0 0.0
    %605 = vmatprep.subr.mxu0 0.0
    %606 = vmatpush1.msra.mxu0 0.0
    %607 = vmatprep.subr.mxu0 0.0
    %608 = vmatpush1.msra.mxu0 0.0
    %609 = vmatprep.subr.mxu0 0.0
    %610 = vmatpush1.msra.mxu0 0.0
    %611 = vmatprep.subr.mxu0 0.0
    %612 = vmatpush1.msra.mxu0 0.0
    %613 = vmatprep.subr.mxu0 0.0
    %614 = vmatpush1.msra.mxu0 0.0
    %615 = vmatprep.mubr.f32.mxu0 0.0
    %616 = vmatmul.mubr.f32.gmra.mrb[0].mxu0 0.0
    %v617 = vpop.f32.mrb[0].mxu0
    %v618 = vadd.f32 0.0, %v617
    %v619 = vpop.f32.mrb[0].mxu0
    %v620 = vadd.f32 0.0, %v619
    %621 = vdwg.mxu0
    %v622 = vadd.f32 %v476, %v547
    %v623 = vadd.f32 %v477, %v549
    %v624 = vadd.f32 %v478, %v618
    %v625 = vadd.f32 %v479, %v620
    %v626 = vmul.f32 %v622, 0.5
    %v627 = vtanh.pop %v626
    %v628 = vmul.f32 %v627, 0.5
    %v629 = vadd.f32 %v628, 0.5
    %v630 = vmul.f32 %v623, 0.5
    %v631 = vtanh.pop %v630
    %v632 = vmul.f32 %v631, 0.5
    %v633 = vadd.f32 %v632, 0.5
    %v634 = vtanh.pop %v624
    %v635 = vmul.f32 %v625, 0.5
    %v636 = vtanh.pop %v635
    %v637 = vmul.f32 %v636, 0.5
    %v638 = vadd.f32 %v637, 0.5
    %v639 = vmul.f32 %v633, 0.0
    %v640 = vmul.f32 %v629, %v634
    %v641 = vadd.f32 %v639, %v640
    %v642 = vtanh.pop %v641
    %v643 = vmul.f32 %v638, %v642
    %vm644 = vcmp.gt.s32.totalorder %v82, 0
    %v645 = vsel %vm644, 1, 0
    %646 = vset.pattern.permute.xlu0 0
    %647 = vperm.xlu0 %646, %v645
    %v648 = vpop.permute.xlu0 %647
    %vm649 = vcmp.eq.s32.totalorder %v648, 1
    %v650 = vsel %vm649, %v643, 0.0
    %v651 = vsel %vm649, %v641, 0.0
    %v652 = vsub.s32 %v82, 1
    %vm653 = vcmp.eq.s32.totalorder %v652, 0
    %v654 = vld [vmem:[#allocation3] sm:$0xff]
    %v655 = vsel %vm653, 1, 0
    %656 = vset.pattern.permute.xlu0 0
    %657 = vperm.xlu0 %656, %v655
    %v658 = vpop.permute.xlu0 %657
    %vm659 = vcmp.eq.s32.totalorder %v658, 1
    %v660 = vsel %vm659, %v654, 0.0
    %s661 = scalar_lea.vmem [#allocation2], 32
    %v662 = vld [vmem:[%s661] sm:$0xff]
    %v663 = vld [vmem:[%s661 + $0x8] sm:$0xff]
    %v664 = vld [vmem:[%s661 + $0x10] sm:$0xff]
    %v665 = vld [vmem:[%s661 + $0x18] sm:$0xff]
    %666 = vmatprep.subr.mxu0 %v413
    %667 = vmatpush1.msra.mxu0 %v412
    %668 = vmatprep.subr.mxu0 %v417
    %669 = vmatpush1.msra.mxu0 %v416
    %670 = vmatprep.subr.mxu0 %v421
    %671 = vmatpush1.msra.mxu0 %v420
    %672 = vmatprep.subr.mxu0 %v425
    %673 = vmatpush1.msra.mxu0 %v424
    %674 = vmatprep.subr.mxu0 %v429
    %675 = vmatpush1.msra.mxu0 %v428
    %676 = vmatprep.subr.mxu0 %v433
    %677 = vmatpush1.msra.mxu0 %v432
    %678 = vmatprep.subr.mxu0 %v437
    %679 = vmatpush1.msra.mxu0 %v436
    %680 = vmatprep.subr.mxu0 %v441
    %681 = vmatpush1.msra.mxu0 %v440
    %682 = vmatprep.subr.mxu0 %v445
    %683 = vmatpush1.msra.mxu0 %v444
    %684 = vmatprep.subr.mxu0 %v449
    %685 = vmatpush1.msra.mxu0 %v448
    %686 = vmatprep.subr.mxu0 %v453
    %687 = vmatpush1.msra.mxu0 %v452
    %688 = vmatprep.subr.mxu0 %v457
    %689 = vmatpush1.msra.mxu0 %v456
    %690 = vmatprep.subr.mxu0 %v461
    %691 = vmatpush1.msra.mxu0 %v460
    %692 = vmatprep.subr.mxu0 %v465
    %693 = vmatpush1.msra.mxu0 %v464
    %694 = vmatprep.subr.mxu0 %v469
    %695 = vmatpush1.msra.mxu0 %v468
    %696 = vmatprep.subr.mxu0 %v473
    %697 = vmatpush1.msra.mxu0 %v472
    %698 = vmatprep.subr.mxu0 0.0
    %699 = vmatpush1.msra.mxu0 0.0
    %700 = vmatprep.subr.mxu0 0.0
    %701 = vmatpush1.msra.mxu0 0.0
    %702 = vmatprep.subr.mxu0 0.0
    %703 = vmatpush1.msra.mxu0 0.0
    %704 = vmatprep.subr.mxu0 0.0
    %705 = vmatpush1.msra.mxu0 0.0
    %706 = vmatprep.subr.mxu0 0.0
    %707 = vmatpush1.msra.mxu0 0.0
    %708 = vmatprep.subr.mxu0 0.0
    %709 = vmatpush1.msra.mxu0 0.0
    %710 = vmatprep.subr.mxu0 0.0
    %711 = vmatpush1.msra.mxu0 0.0
    %712 = vmatprep.subr.mxu0 0.0
    %713 = vmatpush1.msra.mxu0 0.0
    %714 = vmatprep.subr.mxu0 0.0
    %715 = vmatpush1.msra.mxu0 0.0
    %716 = vmatprep.subr.mxu0 0.0
    %717 = vmatpush1.msra.mxu0 0.0
    %718 = vmatprep.subr.mxu0 0.0
    %719 = vmatpush1.msra.mxu0 0.0
    %720 = vmatprep.subr.mxu0 0.0
    %721 = vmatpush1.msra.mxu0 0.0
    %722 = vmatprep.subr.mxu0 0.0
    %723 = vmatpush1.msra.mxu0 0.0
    %724 = vmatprep.subr.mxu0 0.0
    %725 = vmatpush1.msra.mxu0 0.0
    %726 = vmatprep.subr.mxu0 0.0
    %727 = vmatpush1.msra.mxu0 0.0
    %728 = vmatprep.subr.mxu0 0.0
    %729 = vmatpush1.msra.mxu0 0.0
    %730 = vmatprep.mubr.f32.mxu0 0.0
    %731 = vmatmul.mubr.f32.gmra.mrb[0].mxu0 %v650
    %v732 = vpop.f32.mrb[0].mxu0
    %v733 = vadd.f32 0.0, %v732
    %v734 = vpop.f32.mrb[0].mxu0
    %v735 = vadd.f32 0.0, %v734
    %736 = vdwg.mxu0
    %737 = vmatprep.subr.mxu0 %v415
    %738 = vmatpush1.msra.mxu0 %v414
    %739 = vmatprep.subr.mxu0 %v419
    %740 = vmatpush1.msra.mxu0 %v418
    %741 = vmatprep.subr.mxu0 %v423
    %742 = vmatpush1.msra.mxu0 %v422
    %743 = vmatprep.subr.mxu0 %v427
    %744 = vmatpush1.msra.mxu0 %v426
    %745 = vmatprep.subr.mxu0 %v431
    %746 = vmatpush1.msra.mxu0 %v430
    %747 = vmatprep.subr.mxu0 %v435
    %748 = vmatpush1.msra.mxu0 %v434
    %749 = vmatprep.subr.mxu0 %v439
    %750 = vmatpush1.msra.mxu0 %v438
    %751 = vmatprep.subr.mxu0 %v443
    %752 = vmatpush1.msra.mxu0 %v442
    %753 = vmatprep.subr.mxu0 %v447
    %754 = vmatpush1.msra.mxu0 %v446
    %755 = vmatprep.subr.mxu0 %v451
    %756 = vmatpush1.msra.mxu0 %v450
    %757 = vmatprep.subr.mxu0 %v455
    %758 = vmatpush1.msra.mxu0 %v454
    %759 = vmatprep.subr.mxu0 %v459
    %760 = vmatpush1.msra.mxu0 %v458
    %761 = vmatprep.subr.mxu0 %v463
    %762 = vmatpush1.msra.mxu0 %v462
    %763 = vmatprep.subr.mxu0 %v467
    %764 = vmatpush1.msra.mxu0 %v466
    %765 = vmatprep.subr.mxu0 %v471
    %766 = vmatpush1.msra.mxu0 %v470
    %767 = vmatprep.subr.mxu0 %v475
    %768 = vmatpush1.msra.mxu0 %v474
    %769 = vmatprep.subr.mxu0 0.0
    %770 = vmatpush1.msra.mxu0 0.0
    %771 = vmatprep.subr.mxu0 0.0
    %772 = vmatpush1.msra.mxu0 0.0
    %773 = vmatprep.subr.mxu0 0.0
    %774 = vmatpush1.msra.mxu0 0.0
    %775 = vmatprep.subr.mxu0 0.0
    %776 = vmatpush1.msra.mxu0 0.0
    %777 = vmatprep.subr.mxu0 0.0
    %778 = vmatpush1.msra.mxu0 0.0
    %779 = vmatprep.subr.mxu0 0.0
    %780 = vmatpush1.msra.mxu0 0.0
    %781 = vmatprep.subr.mxu0 0.0
    %782 = vmatpush1.msra.mxu0 0.0
    %783 = vmatprep.subr.mxu0 0.0
    %784 = vmatpush1.msra.mxu0 0.0
    %785 = vmatprep.subr.mxu0 0.0
    %786 = vmatpush1.msra.mxu0 0.0
    %787 = vmatprep.subr.mxu0 0.0
    %788 = vmatpush1.msra.mxu0 0.0
    %789 = vmatprep.subr.mxu0 0.0
    %790 = vmatpush1.msra.mxu0 0.0
    %791 = vmatprep.subr.mxu0 0.0
    %792 = vmatpush1.msra.mxu0 0.0
    %793 = vmatprep.subr.mxu0 0.0
    %794 = vmatpush1.msra.mxu0 0.0
    %795 = vmatprep.subr.mxu0 0.0
    %796 = vmatpush1.msra.mxu0 0.0
    %797 = vmatprep.subr.mxu0 0.0
    %798 = vmatpush1.msra.mxu0 0.0
    %799 = vmatprep.subr.mxu0 0.0
    %800 = vmatpush1.msra.mxu0 0.0
    %801 = vmatprep.mubr.f32.mxu0 0.0
    %802 = vmatmul.mubr.f32.gmra.mrb[0].mxu0 %v650
    %v803 = vpop.f32.mrb[0].mxu0
    %v804 = vadd.f32 0.0, %v803
    %v805 = vpop.f32.mrb[0].mxu0
    %v806 = vadd.f32 0.0, %v805
    %807 = vdwg.mxu0
    %v808 = vadd.f32 %v662, %v733
    %v809 = vadd.f32 %v663, %v735
    %v810 = vadd.f32 %v664, %v804
    %v811 = vadd.f32 %v665, %v806
    %v812 = vmul.f32 %v808, 0.5
    %v813 = vtanh.pop %v812
    %v814 = vmul.f32 %v813, 0.5
    %v815 = vadd.f32 %v814, 0.5
    %v816 = vmul.f32 %v809, 0.5
    %v817 = vtanh.pop %v816
    %v818 = vmul.f32 %v817, 0.5
    %v819 = vadd.f32 %v818, 0.5
    %v820 = vtanh.pop %v810
    %v821 = vmul.f32 %v811, 0.5
    %v822 = vtanh.pop %v821
    %v823 = vmul.f32 %v822, 0.5
    %v824 = vadd.f32 %v823, 0.5
    %v825 = vmul.f32 %v819, %v651
    %v826 = vmul.f32 %v815, %v820
    %v827 = vadd.f32 %v825, %v826
    %v828 = vtanh.pop %v827
    %v829 = vmul.f32 %v824, %v828
    %vm830 = vcmp.gt.s32.totalorder %v82, 1
    %v831 = vsel %vm830, 1, 0
    %832 = vset.pattern.permute.xlu0 0
    %833 = vperm.xlu0 %832, %v831
    %v834 = vpop.permute.xlu0 %833
    %vm835 = vcmp.eq.s32.totalorder %v834, 1
    %v836 = vsel %vm835, %v829, %v650
    %v837 = vsel %vm835, %v827, %v651
    %vm838 = vcmp.eq.s32.totalorder %v652, 1
    %s839 = scalar_lea.vmem [#allocation3], 8
    %v840 = vld [vmem:[%s839] sm:$0xff]
    %v841 = vsel %vm838, 1, 0
    %842 = vset.pattern.permute.xlu0 0
    %843 = vperm.xlu0 %842, %v841
    %v844 = vpop.permute.xlu0 %843
    %vm845 = vcmp.eq.s32.totalorder %v844, 1
    %v846 = vsel %vm845, %v840, %v660
    %s847 = scalar_lea.vmem [#allocation2], 64
    %v848 = vld [vmem:[%s847] sm:$0xff]
    %v849 = vld [vmem:[%s847 + $0x8] sm:$0xff]
    %v850 = vld [vmem:[%s847 + $0x10] sm:$0xff]
    %v851 = vld [vmem:[%s847 + $0x18] sm:$0xff]
    %852 = vmatprep.subr.mxu0 %v413
    %853 = vmatpush1.msra.mxu0 %v412
    %854 = vmatprep.subr.mxu0 %v417
    %855 = vmatpush1.msra.mxu0 %v416
    %856 = vmatprep.subr.mxu0 %v421
    %857 = vmatpush1.msra.mxu0 %v420
    %858 = vmatprep.subr.mxu0 %v425
    %859 = vmatpush1.msra.mxu0 %v424
    %860 = vmatprep.subr.mxu0 %v429
    %861 = vmatpush1.msra.mxu0 %v428
    %862 = vmatprep.subr.mxu0 %v433
    %863 = vmatpush1.msra.mxu0 %v432
    %864 = vmatprep.subr.mxu0 %v437
    %865 = vmatpush1.msra.mxu0 %v436
    %866 = vmatprep.subr.mxu0 %v441
    %867 = vmatpush1.msra.mxu0 %v440
    %868 = vmatprep.subr.mxu0 %v445
    %869 = vmatpush1.msra.mxu0 %v444
    %870 = vmatprep.subr.mxu0 %v449
    %871 = vmatpush1.msra.mxu0 %v448
    %872 = vmatprep.subr.mxu0 %v453
    %873 = vmatpush1.msra.mxu0 %v452
    %874 = vmatprep.subr.mxu0 %v457
    %875 = vmatpush1.msra.mxu0 %v456
    %876 = vmatprep.subr.mxu0 %v461
    %877 = vmatpush1.msra.mxu0 %v460
    %878 = vmatprep.subr.mxu0 %v465
    %879 = vmatpush1.msra.mxu0 %v464
    %880 = vmatprep.subr.mxu0 %v469
    %881 = vmatpush1.msra.mxu0 %v468
    %882 = vmatprep.subr.mxu0 %v473
    %883 = vmatpush1.msra.mxu0 %v472
    %884 = vmatprep.subr.mxu0 0.0
    %885 = vmatpush1.msra.mxu0 0.0
    %886 = vmatprep.subr.mxu0 0.0
    %887 = vmatpush1.msra.mxu0 0.0
    %888 = vmatprep.subr.mxu0 0.0
    %889 = vmatpush1.msra.mxu0 0.0
    %890 = vmatprep.subr.mxu0 0.0
    %891 = vmatpush1.msra.mxu0 0.0
    %892 = vmatprep.subr.mxu0 0.0
    %893 = vmatpush1.msra.mxu0 0.0
    %894 = vmatprep.subr.mxu0 0.0
    %895 = vmatpush1.msra.mxu0 0.0
    %896 = vmatprep.subr.mxu0 0.0
    %897 = vmatpush1.msra.mxu0 0.0
    %898 = vmatprep.subr.mxu0 0.0
    %899 = vmatpush1.msra.mxu0 0.0
    %900 = vmatprep.subr.mxu0 0.0
    %901 = vmatpush1.msra.mxu0 0.0
    %902 = vmatprep.subr.mxu0 0.0
    %903 = vmatpush1.msra.mxu0 0.0
    %904 = vmatprep.subr.mxu0 0.0
    %905 = vmatpush1.msra.mxu0 0.0
    %906 = vmatprep.subr.mxu0 0.0
    %907 = vmatpush1.msra.mxu0 0.0
    %908 = vmatprep.subr.mxu0 0.0
    %909 = vmatpush1.msra.mxu0 0.0
    %910 = vmatprep.subr.mxu0 0.0
    %911 = vmatpush1.msra.mxu0 0.0
    %912 = vmatprep.subr.mxu0 0.0
    %913 = vmatpush1.msra.mxu0 0.0
    %914 = vmatprep.subr.mxu0 0.0
    %915 = vmatpush1.msra.mxu0 0.0
    %916 = vmatprep.mubr.f32.mxu0 0.0
    %917 = vmatmul.mubr.f32.gmra.mrb[0].mxu0 %v836
    %v918 = vpop.f32.mrb[0].mxu0
    %v919 = vadd.f32 0.0, %v918
    %v920 = vpop.f32.mrb[0].mxu0
    %v921 = vadd.f32 0.0, %v920
    %922 = vdwg.mxu0
    %923 = vmatprep.subr.mxu0 %v415
    %924 = vmatpush1.msra.mxu0 %v414
    %925 = vmatprep.subr.mxu0 %v419
    %926 = vmatpush1.msra.mxu0 %v418
    %927 = vmatprep.subr.mxu0 %v423
    %928 = vmatpush1.msra.mxu0 %v422
    %929 = vmatprep.subr.mxu0 %v427
    %930 = vmatpush1.msra.mxu0 %v426
    %931 = vmatprep.subr.mxu0 %v431
    %932 = vmatpush1.msra.mxu0 %v430
    %933 = vmatprep.subr.mxu0 %v435
    %934 = vmatpush1.msra.mxu0 %v434
    %935 = vmatprep.subr.mxu0 %v439
    %936 = vmatpush1.msra.mxu0 %v438
    %937 = vmatprep.subr.mxu0 %v443
    %938 = vmatpush1.msra.mxu0 %v442
    %939 = vmatprep.subr.mxu0 %v447
    %940 = vmatpush1.msra.mxu0 %v446
    %941 = vmatprep.subr.mxu0 %v451
    %942 = vmatpush1.msra.mxu0 %v450
    %943 = vmatprep.subr.mxu0 %v455
    %944 = vmatpush1.msra.mxu0 %v454
    %945 = vmatprep.subr.mxu0 %v459
    %946 = vmatpush1.msra.mxu0 %v458
    %947 = vmatprep.subr.mxu0 %v463
    %948 = vmatpush1.msra.mxu0 %v462
    %949 = vmatprep.subr.mxu0 %v467
    %950 = vmatpush1.msra.mxu0 %v466
    %951 = vmatprep.subr.mxu0 %v471
    %952 = vmatpush1.msra.mxu0 %v470
    %953 = vmatprep.subr.mxu0 %v475
    %954 = vmatpush1.msra.mxu0 %v474
    %955 = vmatprep.subr.mxu0 0.0
    %956 = vmatpush1.msra.mxu0 0.0
    %957 = vmatprep.subr.mxu0 0.0
    %958 = vmatpush1.msra.mxu0 0.0
    %959 = vmatprep.subr.mxu0 0.0
    %960 = vmatpush1.msra.mxu0 0.0
    %961 = vmatprep.subr.mxu0 0.0
    %962 = vmatpush1.msra.mxu0 0.0
    %963 = vmatprep.subr.mxu0 0.0
    %964 = vmatpush1.msra.mxu0 0.0
    %965 = vmatprep.subr.mxu0 0.0
    %966 = vmatpush1.msra.mxu0 0.0
    %967 = vmatprep.subr.mxu0 0.0
    %968 = vmatpush1.msra.mxu0 0.0
    %969 = vmatprep.subr.mxu0 0.0
    %970 = vmatpush1.msra.mxu0 0.0
    %971 = vmatprep.subr.mxu0 0.0
    %972 = vmatpush1.msra.mxu0 0.0
    %973 = vmatprep.subr.mxu0 0.0
    %974 = vmatpush1.msra.mxu0 0.0
    %975 = vmatprep.subr.mxu0 0.0
    %976 = vmatpush1.msra.mxu0 0.0
    %977 = vmatprep.subr.mxu0 0.0
    %978 = vmatpush1.msra.mxu0 0.0
    %979 = vmatprep.subr.mxu0 0.0
    %980 = vmatpush1.msra.mxu0 0.0
    %981 = vmatprep.subr.mxu0 0.0
    %982 = vmatpush1.msra.mxu0 0.0
    %983 = vmatprep.subr.mxu0 0.0
    %984 = vmatpush1.msra.mxu0 0.0
    %985 = vmatprep.subr.mxu0 0.0
    %986 = vmatpush1.msra.mxu0 0.0
    %987 = vmatprep.mubr.f32.mxu0 0.0
    %988 = vmatmul.mubr.f32.gmra.mrb[0].mxu0 %v836
    %v989 = vpop.f32.mrb[0].mxu0
    %v990 = vadd.f32 0.0, %v989
    %v991 = vpop.f32.mrb[0].mxu0
    %v992 = vadd.f32 0.0, %v991
    %993 = vdwg.mxu0
    %v994 = vadd.f32 %v848, %v919
    %v995 = vadd.f32 %v849, %v921
    %v996 = vadd.f32 %v850, %v990
    %v997 = vadd.f32 %v851, %v992
    %v998 = vmul.f32 %v994, 0.5
    %v999 = vtanh.pop %v998
    %v1000 = vmul.f32 %v999, 0.5
    %v1001 = vadd.f32 %v1000, 0.5
    %v1002 = vmul.f32 %v995, 0.5
    %v1003 = vtanh.pop %v1002
    %v1004 = vmul.f32 %v1003, 0.5
    %v1005 = vadd.f32 %v1004, 0.5
    %v1006 = vtanh.pop %v996
    %v1007 = vmul.f32 %v997, 0.5
    %v1008 = vtanh.pop %v1007
    %v1009 = vmul.f32 %v1008, 0.5
    %v1010 = vadd.f32 %v1009, 0.5
    %v1011 = vmul.f32 %v1005, %v837
    %v1012 = vmul.f32 %v1001, %v1006
    %v1013 = vadd.f32 %v1011, %v1012
    %v1014 = vtanh.pop %v1013
    %v1015 = vmul.f32 %v1010, %v1014
    %vm1016 = vcmp.gt.s32.totalorder %v82, 2
    %v1017 = vsel %vm1016, 1, 0
    %1018 = vset.pattern.permute.xlu0 0
    %1019 = vperm.xlu0 %1018, %v1017
    %v1020 = vpop.permute.xlu0 %1019
    %vm1021 = vcmp.eq.s32.totalorder %v1020, 1
    %v1022 = vsel %vm1021, %v1015, %v836
    %v1023 = vsel %vm1021, %v1013, %v837
    %vm1024 = vcmp.eq.s32.totalorder %v652, 2
    %s1025 = scalar_lea.vmem [#allocation3], 16
    %v1026 = vld [vmem:[%s1025] sm:$0xff]
    %v1027 = vsel %vm1024, 1, 0
    %1028 = vset.pattern.permute.xlu0 0
    %1029 = vperm.xlu0 %1028, %v1027
    %v1030 = vpop.permute.xlu0 %1029
    %vm1031 = vcmp.eq.s32.totalorder %v1030, 1
    %v1032 = vsel %vm1031, %v1026, %v846
    %s1033 = scalar_lea.vmem [#allocation2], 96
    %v1034 = vld [vmem:[%s1033] sm:$0xff]
    %v1035 = vld [vmem:[%s1033 + $0x8] sm:$0xff]
    %v1036 = vld [vmem:[%s1033 + $0x10] sm:$0xff]
    %v1037 = vld [vmem:[%s1033 + $0x18] sm:$0xff]
    %1038 = vmatprep.subr.mxu0 %v413
    %1039 = vmatpush1.msra.mxu0 %v412
    %1040 = vmatprep.subr.mxu0 %v417
    %1041 = vmatpush1.msra.mxu0 %v416
    %1042 = vmatprep.subr.mxu0 %v421
    %1043 = vmatpush1.msra.mxu0 %v420
    %1044 = vmatprep.subr.mxu0 %v425
    %1045 = vmatpush1.msra.mxu0 %v424
    %1046 = vmatprep.subr.mxu0 %v429
    %1047 = vmatpush1.msra.mxu0 %v428
    %1048 = vmatprep.subr.mxu0 %v433
    %1049 = vmatpush1.msra.mxu0 %v432
    %1050 = vmatprep.subr.mxu0 %v437
    %1051 = vmatpush1.msra.mxu0 %v436
    %1052 = vmatprep.subr.mxu0 %v441
    %1053 = vmatpush1.msra.mxu0 %v440
    %1054 = vmatprep.subr.mxu0 %v445
    %1055 = vmatpush1.msra.mxu0 %v444
    %1056 = vmatprep.subr.mxu0 %v449
    %1057 = vmatpush1.msra.mxu0 %v448
    %1058 = vmatprep.subr.mxu0 %v453
    %1059 = vmatpush1.msra.mxu0 %v452
    %1060 = vmatprep.subr.mxu0 %v457
    %1061 = vmatpush1.msra.mxu0 %v456
    %1062 = vmatprep.subr.mxu0 %v461
    %1063 = vmatpush1.msra.mxu0 %v460
    %1064 = vmatprep.subr.mxu0 %v465
    %1065 = vmatpush1.msra.mxu0 %v464
    %1066 = vmatprep.subr.mxu0 %v469
    %1067 = vmatpush1.msra.mxu0 %v468
    %1068 = vmatprep.subr.mxu0 %v473
    %1069 = vmatpush1.msra.mxu0 %v472
    %1070 = vmatprep.subr.mxu0 0.0
    %1071 = vmatpush1.msra.mxu0 0.0
    %1072 = vmatprep.subr.mxu0 0.0
    %1073 = vmatpush1.msra.mxu0 0.0
    %1074 = vmatprep.subr.mxu0 0.0
    %1075 = vmatpush1.msra.mxu0 0.0
    %1076 = vmatprep.subr.mxu0 0.0
    %1077 = vmatpush1.msra.mxu0 0.0
    %1078 = vmatprep.subr.mxu0 0.0
    %1079 = vmatpush1.msra.mxu0 0.0
    %1080 = vmatprep.subr.mxu0 0.0
    %1081 = vmatpush1.msra.mxu0 0.0
    %1082 = vmatprep.subr.mxu0 0.0
    %1083 = vmatpush1.msra.mxu0 0.0
    %1084 = vmatprep.subr.mxu0 0.0
    %1085 = vmatpush1.msra.mxu0 0.0
    %1086 = vmatprep.subr.mxu0 0.0
    %1087 = vmatpush1.msra.mxu0 0.0
    %1088 = vmatprep.subr.mxu0 0.0
    %1089 = vmatpush1.msra.mxu0 0.0
    %1090 = vmatprep.subr.mxu0 0.0
    %1091 = vmatpush1.msra.mxu0 0.0
    %1092 = vmatprep.subr.mxu0 0.0
    %1093 = vmatpush1.msra.mxu0 0.0
    %1094 = vmatprep.subr.mxu0 0.0
    %1095 = vmatpush1.msra.mxu0 0.0
    %1096 = vmatprep.subr.mxu0 0.0
    %1097 = vmatpush1.msra.mxu0 0.0
    %1098 = vmatprep.subr.mxu0 0.0
    %1099 = vmatpush1.msra.mxu0 0.0
    %1100 = vmatprep.subr.mxu0 0.0
    %1101 = vmatpush1.msra.mxu0 0.0
    %1102 = vmatprep.mubr.f32.mxu0 0.0
    %1103 = vmatmul.mubr.f32.gmra.mrb[0].mxu0 %v1022
    %v1104 = vpop.f32.mrb[0].mxu0
    %v1105 = vadd.f32 0.0, %v1104
    %v1106 = vpop.f32.mrb[0].mxu0
    %v1107 = vadd.f32 0.0, %v1106
    %1108 = vdwg.mxu0
    %1109 = vmatprep.subr.mxu0 %v415
    %1110 = vmatpush1.msra.mxu0 %v414
    %1111 = vmatprep.subr.mxu0 %v419
    %1112 = vmatpush1.msra.mxu0 %v418
    %1113 = vmatprep.subr.mxu0 %v423
    %1114 = vmatpush1.msra.mxu0 %v422
    %1115 = vmatprep.subr.mxu0 %v427
    %1116 = vmatpush1.msra.mxu0 %v426
    %1117 = vmatprep.subr.mxu0 %v431
    %1118 = vmatpush1.msra.mxu0 %v430
    %1119 = vmatprep.subr.mxu0 %v435
    %1120 = vmatpush1.msra.mxu0 %v434
    %1121 = vmatprep.subr.mxu0 %v439
    %1122 = vmatpush1.msra.mxu0 %v438
    %1123 = vmatprep.subr.mxu0 %v443
    %1124 = vmatpush1.msra.mxu0 %v442
    %1125 = vmatprep.subr.mxu0 %v447
    %1126 = vmatpush1.msra.mxu0 %v446
    %1127 = vmatprep.subr.mxu0 %v451
    %1128 = vmatpush1.msra.mxu0 %v450
    %1129 = vmatprep.subr.mxu0 %v455
    %1130 = vmatpush1.msra.mxu0 %v454
    %1131 = vmatprep.subr.mxu0 %v459
    %1132 = vmatpush1.msra.mxu0 %v458
    %1133 = vmatprep.subr.mxu0 %v463
    %1134 = vmatpush1.msra.mxu0 %v462
    %1135 = vmatprep.subr.mxu0 %v467
    %1136 = vmatpush1.msra.mxu0 %v466
    %1137 = vmatprep.subr.mxu0 %v471
    %1138 = vmatpush1.msra.mxu0 %v470
    %1139 = vmatprep.subr.mxu0 %v475
    %1140 = vmatpush1.msra.mxu0 %v474
    %1141 = vmatprep.subr.mxu0 0.0
    %1142 = vmatpush1.msra.mxu0 0.0
    %1143 = vmatprep.subr.mxu0 0.0
    %1144 = vmatpush1.msra.mxu0 0.0
    %1145 = vmatprep.subr.mxu0 0.0
    %1146 = vmatpush1.msra.mxu0 0.0
    %1147 = vmatprep.subr.mxu0 0.0
    %1148 = vmatpush1.msra.mxu0 0.0
    %1149 = vmatprep.subr.mxu0 0.0
    %1150 = vmatpush1.msra.mxu0 0.0
    %1151 = vmatprep.subr.mxu0 0.0
    %1152 = vmatpush1.msra.mxu0 0.0
    %1153 = vmatprep.subr.mxu0 0.0
    %1154 = vmatpush1.msra.mxu0 0.0
    %1155 = vmatprep.subr.mxu0 0.0
    %1156 = vmatpush1.msra.mxu0 0.0
    %1157 = vmatprep.subr.mxu0 0.0
    %1158 = vmatpush1.msra.mxu0 0.0
    %1159 = vmatprep.subr.mxu0 0.0
    %1160 = vmatpush1.msra.mxu0 0.0
    %1161 = vmatprep.subr.mxu0 0.0
    %1162 = vmatpush1.msra.mxu0 0.0
    %1163 = vmatprep.subr.mxu0 0.0
    %1164 = vmatpush1.msra.mxu0 0.0
    %1165 = vmatprep.subr.mxu0 0.0
    %1166 = vmatpush1.msra.mxu0 0.0
    %1167 = vmatprep.subr.mxu0 0.0
    %1168 = vmatpush1.msra.mxu0 0.0
    %1169 = vmatprep.subr.mxu0 0.0
    %1170 = vmatpush1.msra.mxu0 0.0
    %1171 = vmatprep.subr.mxu0 0.0
    %1172 = vmatpush1.msra.mxu0 0.0
    %1173 = vmatprep.mubr.f32.mxu0 0.0
    %1174 = vmatmul.mubr.f32.gmra.mrb[0].mxu0 %v1022
    %v1175 = vpop.f32.mrb[0].mxu0
    %v1176 = vadd.f32 0.0, %v1175
    %v1177 = vpop.f32.mrb[0].mxu0
    %v1178 = vadd.f32 0.0, %v1177
    %1179 = vdwg.mxu0
    %v1180 = vadd.f32 %v1034, %v1105
    %v1181 = vadd.f32 %v1035, %v1107
    %v1182 = vadd.f32 %v1036, %v1176
    %v1183 = vadd.f32 %v1037, %v1178
    %v1184 = vmul.f32 %v1180, 0.5
    %v1185 = vtanh.pop %v1184
    %v1186 = vmul.f32 %v1185, 0.5
    %v1187 = vadd.f32 %v1186, 0.5
    %v1188 = vmul.f32 %v1181, 0.5
    %v1189 = vtanh.pop %v1188
    %v1190 = vmul.f32 %v1189, 0.5
    %v1191 = vadd.f32 %v1190, 0.5
    %v1192 = vtanh.pop %v1182
    %v1193 = vmul.f32 %v1183, 0.5
    %v1194 = vtanh.pop %v1193
    %v1195 = vmul.f32 %v1194, 0.5
    %v1196 = vadd.f32 %v1195, 0.5
    %v1197 = vmul.f32 %v1191, %v1023
    %v1198 = vmul.f32 %v1187, %v1192
    %v1199 = vadd.f32 %v1197, %v1198
    %v1200 = vtanh.pop %v1199
    %v1201 = vmul.f32 %v1196, %v1200
    %vm1202 = vcmp.gt.s32.totalorder %v82, 3
    %v1203 = vsel %vm1202, 1, 0
    %1204 = vset.pattern.permute.xlu0 0
    %1205 = vperm.xlu0 %1204, %v1203
    %v1206 = vpop.permute.xlu0 %1205
    %vm1207 = vcmp.eq.s32.totalorder %v1206, 1
    %v1208 = vsel %vm1207, %v1201, %v1022
    %v1209 = vsel %vm1207, %v1199, %v1023
    %vm1210 = vcmp.eq.s32.totalorder %v652, 3
    %s1211 = scalar_lea.vmem [#allocation3], 24
    %v1212 = vld [vmem:[%s1211] sm:$0xff]
    %v1213 = vsel %vm1210, 1, 0
    %1214 = vset.pattern.permute.xlu0 0
    %1215 = vperm.xlu0 %1214, %v1213
    %v1216 = vpop.permute.xlu0 %1215
    %vm1217 = vcmp.eq.s32.totalorder %v1216, 1
    %v1218 = vsel %vm1217, %v1212, %v1032
    %s1219 = scalar_lea.vmem [#allocation2], 128
    %v1220 = vld [vmem:[%s1219] sm:$0xff]
    %v1221 = vld [vmem:[%s1219 + $0x8] sm:$0xff]
    %v1222 = vld [vmem:[%s1219 + $0x10] sm:$0xff]
    %v1223 = vld [vmem:[%s1219 + $0x18] sm:$0xff]
    %1224 = vmatprep.subr.mxu0 %v413
    %1225 = vmatpush1.msra.mxu0 %v412
    %1226 = vmatprep.subr.mxu0 %v417
    %1227 = vmatpush1.msra.mxu0 %v416
    %1228 = vmatprep.subr.mxu0 %v421
    %1229 = vmatpush1.msra.mxu0 %v420
    %1230 = vmatprep.subr.mxu0 %v425
    %1231 = vmatpush1.msra.mxu0 %v424
    %1232 = vmatprep.subr.mxu0 %v429
    %1233 = vmatpush1.msra.mxu0 %v428
    %1234 = vmatprep.subr.mxu0 %v433
    %1235 = vmatpush1.msra.mxu0 %v432
    %1236 = vmatprep.subr.mxu0 %v437
    %1237 = vmatpush1.msra.mxu0 %v436
    %1238 = vmatprep.subr.mxu0 %v441
    %1239 = vmatpush1.msra.mxu0 %v440
    %1240 = vmatprep.subr.mxu0 %v445
    %1241 = vmatpush1.msra.mxu0 %v444
    %1242 = vmatprep.subr.mxu0 %v449
    %1243 = vmatpush1.msra.mxu0 %v448
    %1244 = vmatprep.subr.mxu0 %v453
    %1245 = vmatpush1.msra.mxu0 %v452
    %1246 = vmatprep.subr.mxu0 %v457
    %1247 = vmatpush1.msra.mxu0 %v456
    %1248 = vmatprep.subr.mxu0 %v461
    %1249 = vmatpush1.msra.mxu0 %v460
    %1250 = vmatprep.subr.mxu0 %v465
    %1251 = vmatpush1.msra.mxu0 %v464
    %1252 = vmatprep.subr.mxu0 %v469
    %1253 = vmatpush1.msra.mxu0 %v468
    %1254 = vmatprep.subr.mxu0 %v473
    %1255 = vmatpush1.msra.mxu0 %v472
    %1256 = vmatprep.subr.mxu0 0.0
    %1257 = vmatpush1.msra.mxu0 0.0
    %1258 = vmatprep.subr.mxu0 0.0
    %1259 = vmatpush1.msra.mxu0 0.0
    %1260 = vmatprep.subr.mxu0 0.0
    %1261 = vmatpush1.msra.mxu0 0.0
    %1262 = vmatprep.subr.mxu0 0.0
    %1263 = vmatpush1.msra.mxu0 0.0
    %1264 = vmatprep.subr.mxu0 0.0
    %1265 = vmatpush1.msra.mxu0 0.0
    %1266 = vmatprep.subr.mxu0 0.0
    %1267 = vmatpush1.msra.mxu0 0.0
    %1268 = vmatprep.subr.mxu0 0.0
    %1269 = vmatpush1.msra.mxu0 0.0
    %1270 = vmatprep.subr.mxu0 0.0
    %1271 = vmatpush1.msra.mxu0 0.0
    %1272 = vmatprep.subr.mxu0 0.0
    %1273 = vmatpush1.msra.mxu0 0.0
    %1274 = vmatprep.subr.mxu0 0.0
    %1275 = vmatpush1.msra.mxu0 0.0
    %1276 = vmatprep.subr.mxu0 0.0
    %1277 = vmatpush1.msra.mxu0 0.0
    %1278 = vmatprep.subr.mxu0 0.0
    %1279 = vmatpush1.msra.mxu0 0.0
    %1280 = vmatprep.subr.mxu0 0.0
    %1281 = vmatpush1.msra.mxu0 0.0
    %1282 = vmatprep.subr.mxu0 0.0
    %1283 = vmatpush1.msra.mxu0 0.0
    %1284 = vmatprep.subr.mxu0 0.0
    %1285 = vmatpush1.msra.mxu0 0.0
    %1286 = vmatprep.subr.mxu0 0.0
    %1287 = vmatpush1.msra.mxu0 0.0
    %1288 = vmatprep.mubr.f32.mxu0 0.0
    %1289 = vmatmul.mubr.f32.gmra.mrb[0].mxu0 %v1208
    %v1290 = vpop.f32.mrb[0].mxu0
    %v1291 = vadd.f32 0.0, %v1290
    %v1292 = vpop.f32.mrb[0].mxu0
    %v1293 = vadd.f32 0.0, %v1292
    %1294 = vdwg.mxu0
    %1295 = vmatprep.subr.mxu0 %v415
    %1296 = vmatpush1.msra.mxu0 %v414
    %1297 = vmatprep.subr.mxu0 %v419
    %1298 = vmatpush1.msra.mxu0 %v418
    %1299 = vmatprep.subr.mxu0 %v423
    %1300 = vmatpush1.msra.mxu0 %v422
    %1301 = vmatprep.subr.mxu0 %v427
    %1302 = vmatpush1.msra.mxu0 %v426
    %1303 = vmatprep.subr.mxu0 %v431
    %1304 = vmatpush1.msra.mxu0 %v430
    %1305 = vmatprep.subr.mxu0 %v435
    %1306 = vmatpush1.msra.mxu0 %v434
    %1307 = vmatprep.subr.mxu0 %v439
    %1308 = vmatpush1.msra.mxu0 %v438
    %1309 = vmatprep.subr.mxu0 %v443
    %1310 = vmatpush1.msra.mxu0 %v442
    %1311 = vmatprep.subr.mxu0 %v447
    %1312 = vmatpush1.msra.mxu0 %v446
    %1313 = vmatprep.subr.mxu0 %v451
    %1314 = vmatpush1.msra.mxu0 %v450
    %1315 = vmatprep.subr.mxu0 %v455
    %1316 = vmatpush1.msra.mxu0 %v454
    %1317 = vmatprep.subr.mxu0 %v459
    %1318 = vmatpush1.msra.mxu0 %v458
    %1319 = vmatprep.subr.mxu0 %v463
    %1320 = vmatpush1.msra.mxu0 %v462
    %1321 = vmatprep.subr.mxu0 %v467
    %1322 = vmatpush1.msra.mxu0 %v466
    %1323 = vmatprep.subr.mxu0 %v471
    %1324 = vmatpush1.msra.mxu0 %v470
    %1325 = vmatprep.subr.mxu0 %v475
    %1326 = vmatpush1.msra.mxu0 %v474
    %1327 = vmatprep.subr.mxu0 0.0
    %1328 = vmatpush1.msra.mxu0 0.0
    %1329 = vmatprep.subr.mxu0 0.0
    %1330 = vmatpush1.msra.mxu0 0.0
    %1331 = vmatprep.subr.mxu0 0.0
    %1332 = vmatpush1.msra.mxu0 0.0
    %1333 = vmatprep.subr.mxu0 0.0
    %1334 = vmatpush1.msra.mxu0 0.0
    %1335 = vmatprep.subr.mxu0 0.0
    %1336 = vmatpush1.msra.mxu0 0.0
    %1337 = vmatprep.subr.mxu0 0.0
    %1338 = vmatpush1.msra.mxu0 0.0
    %1339 = vmatprep.subr.mxu0 0.0
    %1340 = vmatpush1.msra.mxu0 0.0
    %1341 = vmatprep.subr.mxu0 0.0
    %1342 = vmatpush1.msra.mxu0 0.0
    %1343 = vmatprep.subr.mxu0 0.0
    %1344 = vmatpush1.msra.mxu0 0.0
    %1345 = vmatprep.subr.mxu0 0.0
    %1346 = vmatpush1.msra.mxu0 0.0
    %1347 = vmatprep.subr.mxu0 0.0
    %1348 = vmatpush1.msra.mxu0 0.0
    %1349 = vmatprep.subr.mxu0 0.0
    %1350 = vmatpush1.msra.mxu0 0.0
    %1351 = vmatprep.subr.mxu0 0.0
    %1352 = vmatpush1.msra.mxu0 0.0
    %1353 = vmatprep.subr.mxu0 0.0
    %1354 = vmatpush1.msra.mxu0 0.0
    %1355 = vmatprep.subr.mxu0 0.0
    %1356 = vmatpush1.msra.mxu0 0.0
    %1357 = vmatprep.subr.mxu0 0.0
    %1358 = vmatpush1.msra.mxu0 0.0
    %1359 = vmatprep.mubr.f32.mxu0 0.0
    %1360 = vmatmul.mubr.f32.gmra.mrb[0].mxu0 %v1208
    %v1361 = vpop.f32.mrb[0].mxu0
    %v1362 = vadd.f32 0.0, %v1361
    %v1363 = vpop.f32.mrb[0].mxu0
    %v1364 = vadd.f32 0.0, %v1363
    %1365 = vdwg.mxu0
    %v1366 = vadd.f32 %v1220, %v1291
    %v1367 = vadd.f32 %v1221, %v1293
    %v1368 = vadd.f32 %v1222, %v1362
    %v1369 = vadd.f32 %v1223, %v1364
    %v1370 = vmul.f32 %v1366, 0.5
    %v1371 = vtanh.pop %v1370
    %v1372 = vmul.f32 %v1371, 0.5
    %v1373 = vadd.f32 %v1372, 0.5
    %v1374 = vmul.f32 %v1367, 0.5
    %v1375 = vtanh.pop %v1374
    %v1376 = vmul.f32 %v1375, 0.5
    %v1377 = vadd.f32 %v1376, 0.5
    %v1378 = vtanh.pop %v1368
    %v1379 = vmul.f32 %v1369, 0.5
    %v1380 = vtanh.pop %v1379
    %v1381 = vmul.f32 %v1380, 0.5
    %v1382 = vadd.f32 %v1381, 0.5
    %v1383 = vmul.f32 %v1377, %v1209
    %v1384 = vmul.f32 %v1373, %v1378
    %v1385 = vadd.f32 %v1383, %v1384
    %v1386 = vtanh.pop %v1385
    %v1387 = vmul.f32 %v1382, %v1386
    %vm1388 = vcmp.gt.s32.totalorder %v82, 4
    %v1389 = vsel %vm1388, 1, 0
    %1390 = vset.pattern.permute.xlu0 0
    %1391 = vperm.xlu0 %1390, %v1389
    %v1392 = vpop.permute.xlu0 %1391
    %vm1393 = vcmp.eq.s32.totalorder %v1392, 1
    %v1394 = vsel %vm1393, %v1387, %v1208
    %v1395 = vsel %vm1393, %v1385, %v1209
    %vm1396 = vcmp.eq.s32.totalorder %v652, 4
    %s1397 = scalar_lea.vmem [#allocation3], 32
    %v1398 = vld [vmem:[%s1397] sm:$0xff]
    %v1399 = vsel %vm1396, 1, 0
    %1400 = vset.pattern.permute.xlu0 0
    %1401 = vperm.xlu0 %1400, %v1399
    %v1402 = vpop.permute.xlu0 %1401
    %vm1403 = vcmp.eq.s32.totalorder %v1402, 1
    %v1404 = vsel %vm1403, %v1398, %v1218
    %s1405 = scalar_lea.vmem [#allocation2], 160
    %v1406 = vld [vmem:[%s1405] sm:$0xff]
    %v1407 = vld [vmem:[%s1405 + $0x8] sm:$0xff]
    %v1408 = vld [vmem:[%s1405 + $0x10] sm:$0xff]
    %v1409 = vld [vmem:[%s1405 + $0x18] sm:$0xff]
    %1410 = vmatprep.subr.mxu0 %v413
    %1411 = vmatpush1.msra.mxu0 %v412
    %1412 = vmatprep.subr.mxu0 %v417
    %1413 = vmatpush1.msra.mxu0 %v416
    %1414 = vmatprep.subr.mxu0 %v421
    %1415 = vmatpush1.msra.mxu0 %v420
    %1416 = vmatprep.subr.mxu0 %v425
    %1417 = vmatpush1.msra.mxu0 %v424
    %1418 = vmatprep.subr.mxu0 %v429
    %1419 = vmatpush1.msra.mxu0 %v428
    %1420 = vmatprep.subr.mxu0 %v433
    %1421 = vmatpush1.msra.mxu0 %v432
    %1422 = vmatprep.subr.mxu0 %v437
    %1423 = vmatpush1.msra.mxu0 %v436
    %1424 = vmatprep.subr.mxu0 %v441
    %1425 = vmatpush1.msra.mxu0 %v440
    %1426 = vmatprep.subr.mxu0 %v445
    %1427 = vmatpush1.msra.mxu0 %v444
    %1428 = vmatprep.subr.mxu0 %v449
    %1429 = vmatpush1.msra.mxu0 %v448
    %1430 = vmatprep.subr.mxu0 %v453
    %1431 = vmatpush1.msra.mxu0 %v452
    %1432 = vmatprep.subr.mxu0 %v457
    %1433 = vmatpush1.msra.mxu0 %v456
    %1434 = vmatprep.subr.mxu0 %v461
    %1435 = vmatpush1.msra.mxu0 %v460
    %1436 = vmatprep.subr.mxu0 %v465
    %1437 = vmatpush1.msra.mxu0 %v464
    %1438 = vmatprep.subr.mxu0 %v469
    %1439 = vmatpush1.msra.mxu0 %v468
    %1440 = vmatprep.subr.mxu0 %v473
    %1441 = vmatpush1.msra.mxu0 %v472
    %1442 = vmatprep.subr.mxu0 0.0
    %1443 = vmatpush1.msra.mxu0 0.0
    %1444 = vmatprep.subr.mxu0 0.0
    %1445 = vmatpush1.msra.mxu0 0.0
    %1446 = vmatprep.subr.mxu0 0.0
    %1447 = vmatpush1.msra.mxu0 0.0
    %1448 = vmatprep.subr.mxu0 0.0
    %1449 = vmatpush1.msra.mxu0 0.0
    %1450 = vmatprep.subr.mxu0 0.0
    %1451 = vmatpush1.msra.mxu0 0.0
    %1452 = vmatprep.subr.mxu0 0.0
    %1453 = vmatpush1.msra.mxu0 0.0
    %1454 = vmatprep.subr.mxu0 0.0
    %1455 = vmatpush1.msra.mxu0 0.0
    %1456 = vmatprep.subr.mxu0 0.0
    %1457 = vmatpush1.msra.mxu0 0.0
    %1458 = vmatprep.subr.mxu0 0.0
    %1459 = vmatpush1.msra.mxu0 0.0
    %1460 = vmatprep.subr.mxu0 0.0
    %1461 = vmatpush1.msra.mxu0 0.0
    %1462 = vmatprep.subr.mxu0 0.0
    %1463 = vmatpush1.msra.mxu0 0.0
    %1464 = vmatprep.subr.mxu0 0.0
    %1465 = vmatpush1.msra.mxu0 0.0
    %1466 = vmatprep.subr.mxu0 0.0
    %1467 = vmatpush1.msra.mxu0 0.0
    %1468 = vmatprep.subr.mxu0 0.0
    %1469 = vmatpush1.msra.mxu0 0.0
    %1470 = vmatprep.subr.mxu0 0.0
    %1471 = vmatpush1.msra.mxu0 0.0
    %1472 = vmatprep.subr.mxu0 0.0
    %1473 = vmatpush1.msra.mxu0 0.0
    %1474 = vmatprep.mubr.f32.mxu0 0.0
    %1475 = vmatmul.mubr.f32.gmra.mrb[0].mxu0 %v1394
    %v1476 = vpop.f32.mrb[0].mxu0
    %v1477 = vadd.f32 0.0, %v1476
    %v1478 = vpop.f32.mrb[0].mxu0
    %v1479 = vadd.f32 0.0, %v1478
    %1480 = vdwg.mxu0
    %1481 = vmatprep.subr.mxu0 %v415
    %1482 = vmatpush1.msra.mxu0 %v414
    %1483 = vmatprep.subr.mxu0 %v419
    %1484 = vmatpush1.msra.mxu0 %v418
    %1485 = vmatprep.subr.mxu0 %v423
    %1486 = vmatpush1.msra.mxu0 %v422
    %1487 = vmatprep.subr.mxu0 %v427
    %1488 = vmatpush1.msra.mxu0 %v426
    %1489 = vmatprep.subr.mxu0 %v431
    %1490 = vmatpush1.msra.mxu0 %v430
    %1491 = vmatprep.subr.mxu0 %v435
    %1492 = vmatpush1.msra.mxu0 %v434
    %1493 = vmatprep.subr.mxu0 %v439
    %1494 = vmatpush1.msra.mxu0 %v438
    %1495 = vmatprep.subr.mxu0 %v443
    %1496 = vmatpush1.msra.mxu0 %v442
    %1497 = vmatprep.subr.mxu0 %v447
    %1498 = vmatpush1.msra.mxu0 %v446
    %1499 = vmatprep.subr.mxu0 %v451
    %1500 = vmatpush1.msra.mxu0 %v450
    %1501 = vmatprep.subr.mxu0 %v455
    %1502 = vmatpush1.msra.mxu0 %v454
    %1503 = vmatprep.subr.mxu0 %v459
    %1504 = vmatpush1.msra.mxu0 %v458
    %1505 = vmatprep.subr.mxu0 %v463
    %1506 = vmatpush1.msra.mxu0 %v462
    %1507 = vmatprep.subr.mxu0 %v467
    %1508 = vmatpush1.msra.mxu0 %v466
    %1509 = vmatprep.subr.mxu0 %v471
    %1510 = vmatpush1.msra.mxu0 %v470
    %1511 = vmatprep.subr.mxu0 %v475
    %1512 = vmatpush1.msra.mxu0 %v474
    %1513 = vmatprep.subr.mxu0 0.0
    %1514 = vmatpush1.msra.mxu0 0.0
    %1515 = vmatprep.subr.mxu0 0.0
    %1516 = vmatpush1.msra.mxu0 0.0
    %1517 = vmatprep.subr.mxu0 0.0
    %1518 = vmatpush1.msra.mxu0 0.0
    %1519 = vmatprep.subr.mxu0 0.0
    %1520 = vmatpush1.msra.mxu0 0.0
    %1521 = vmatprep.subr.mxu0 0.0
    %1522 = vmatpush1.msra.mxu0 0.0
    %1523 = vmatprep.subr.mxu0 0.0
    %1524 = vmatpush1.msra.mxu0 0.0
    %1525 = vmatprep.subr.mxu0 0.0
    %1526 = vmatpush1.msra.mxu0 0.0
    %1527 = vmatprep.subr.mxu0 0.0
    %1528 = vmatpush1.msra.mxu0 0.0
    %1529 = vmatprep.subr.mxu0 0.0
    %1530 = vmatpush1.msra.mxu0 0.0
    %1531 = vmatprep.subr.mxu0 0.0
    %1532 = vmatpush1.msra.mxu0 0.0
    %1533 = vmatprep.subr.mxu0 0.0
    %1534 = vmatpush1.msra.mxu0 0.0
    %1535 = vmatprep.subr.mxu0 0.0
    %1536 = vmatpush1.msra.mxu0 0.0
    %1537 = vmatprep.subr.mxu0 0.0
    %1538 = vmatpush1.msra.mxu0 0.0
    %1539 = vmatprep.subr.mxu0 0.0
    %1540 = vmatpush1.msra.mxu0 0.0
    %1541 = vmatprep.subr.mxu0 0.0
    %1542 = vmatpush1.msra.mxu0 0.0
    %1543 = vmatprep.subr.mxu0 0.0
    %1544 = vmatpush1.msra.mxu0 0.0
    %1545 = vmatprep.mubr.f32.mxu0 0.0
    %1546 = vmatmul.mubr.f32.gmra.mrb[0].mxu0 %v1394
    %v1547 = vpop.f32.mrb[0].mxu0
    %v1548 = vadd.f32 0.0, %v1547
    %v1549 = vpop.f32.mrb[0].mxu0
    %v1550 = vadd.f32 0.0, %v1549
    %1551 = vdwg.mxu0
    %v1552 = vadd.f32 %v1406, %v1477
    %v1553 = vadd.f32 %v1407, %v1479
    %v1554 = vadd.f32 %v1408, %v1548
    %v1555 = vadd.f32 %v1409, %v1550
    %v1556 = vmul.f32 %v1552, 0.5
    %v1557 = vtanh.pop %v1556
    %v1558 = vmul.f32 %v1557, 0.5
    %v1559 = vadd.f32 %v1558, 0.5
    %v1560 = vmul.f32 %v1553, 0.5
    %v1561 = vtanh.pop %v1560
    %v1562 = vmul.f32 %v1561, 0.5
    %v1563 = vadd.f32 %v1562, 0.5
    %v1564 = vtanh.pop %v1554
    %v1565 = vmul.f32 %v1555, 0.5
    %v1566 = vtanh.pop %v1565
    %v1567 = vmul.f32 %v1566, 0.5
    %v1568 = vadd.f32 %v1567, 0.5
    %v1569 = vmul.f32 %v1563, %v1395
    %v1570 = vmul.f32 %v1559, %v1564
    %v1571 = vadd.f32 %v1569, %v1570
    %v1572 = vtanh.pop %v1571
    %v1573 = vmul.f32 %v1568, %v1572
    %vm1574 = vcmp.gt.s32.totalorder %v82, 5
    %v1575 = vsel %vm1574, 1, 0
    %1576 = vset.pattern.permute.xlu0 0
    %1577 = vperm.xlu0 %1576, %v1575
    %v1578 = vpop.permute.xlu0 %1577
    %vm1579 = vcmp.eq.s32.totalorder %v1578, 1
    %v1580 = vsel %vm1579, %v1573, %v1394
    %v1581 = vsel %vm1579, %v1571, %v1395
    %vm1582 = vcmp.eq.s32.totalorder %v652, 5
    %s1583 = scalar_lea.vmem [#allocation3], 40
    %v1584 = vld [vmem:[%s1583] sm:$0xff]
    %v1585 = vsel %vm1582, 1, 0
    %1586 = vset.pattern.permute.xlu0 0
    %1587 = vperm.xlu0 %1586, %v1585
    %v1588 = vpop.permute.xlu0 %1587
    %vm1589 = vcmp.eq.s32.totalorder %v1588, 1
    %v1590 = vsel %vm1589, %v1584, %v1404
    %s1591 = scalar_lea.vmem [#allocation2], 192
    %v1592 = vld [vmem:[%s1591] sm:$0xff]
    %v1593 = vld [vmem:[%s1591 + $0x8] sm:$0xff]
    %v1594 = vld [vmem:[%s1591 + $0x10] sm:$0xff]
    %v1595 = vld [vmem:[%s1591 + $0x18] sm:$0xff]
    %1596 = vmatprep.subr.mxu0 %v413
    %1597 = vmatpush1.msra.mxu0 %v412
    %1598 = vmatprep.subr.mxu0 %v417
    %1599 = vmatpush1.msra.mxu0 %v416
    %1600 = vmatprep.subr.mxu0 %v421
    %1601 = vmatpush1.msra.mxu0 %v420
    %1602 = vmatprep.subr.mxu0 %v425
    %1603 = vmatpush1.msra.mxu0 %v424
    %1604 = vmatprep.subr.mxu0 %v429
    %1605 = vmatpush1.msra.mxu0 %v428
    %1606 = vmatprep.subr.mxu0 %v433
    %1607 = vmatpush1.msra.mxu0 %v432
    %1608 = vmatprep.subr.mxu0 %v437
    %1609 = vmatpush1.msra.mxu0 %v436
    %1610 = vmatprep.subr.mxu0 %v441
    %1611 = vmatpush1.msra.mxu0 %v440
    %1612 = vmatprep.subr.mxu0 %v445
    %1613 = vmatpush1.msra.mxu0 %v444
    %1614 = vmatprep.subr.mxu0 %v449
    %1615 = vmatpush1.msra.mxu0 %v448
    %1616 = vmatprep.subr.mxu0 %v453
    %1617 = vmatpush1.msra.mxu0 %v452
    %1618 = vmatprep.subr.mxu0 %v457
    %1619 = vmatpush1.msra.mxu0 %v456
    %1620 = vmatprep.subr.mxu0 %v461
    %1621 = vmatpush1.msra.mxu0 %v460
    %1622 = vmatprep.subr.mxu0 %v465
    %1623 = vmatpush1.msra.mxu0 %v464
    %1624 = vmatprep.subr.mxu0 %v469
    %1625 = vmatpush1.msra.mxu0 %v468
    %1626 = vmatprep.subr.mxu0 %v473
    %1627 = vmatpush1.msra.mxu0 %v472
    %1628 = vmatprep.subr.mxu0 0.0
    %1629 = vmatpush1.msra.mxu0 0.0
    %1630 = vmatprep.subr.mxu0 0.0
    %1631 = vmatpush1.msra.mxu0 0.0
    %1632 = vmatprep.subr.mxu0 0.0
    %1633 = vmatpush1.msra.mxu0 0.0
    %1634 = vmatprep.subr.mxu0 0.0
    %1635 = vmatpush1.msra.mxu0 0.0
    %1636 = vmatprep.subr.mxu0 0.0
    %1637 = vmatpush1.msra.mxu0 0.0
    %1638 = vmatprep.subr.mxu0 0.0
    %1639 = vmatpush1.msra.mxu0 0.0
    %1640 = vmatprep.subr.mxu0 0.0
    %1641 = vmatpush1.msra.mxu0 0.0
    %1642 = vmatprep.subr.mxu0 0.0
    %1643 = vmatpush1.msra.mxu0 0.0
    %1644 = vmatprep.subr.mxu0 0.0
    %1645 = vmatpush1.msra.mxu0 0.0
    %1646 = vmatprep.subr.mxu0 0.0
    %1647 = vmatpush1.msra.mxu0 0.0
    %1648 = vmatprep.subr.mxu0 0.0
    %1649 = vmatpush1.msra.mxu0 0.0
    %1650 = vmatprep.subr.mxu0 0.0
    %1651 = vmatpush1.msra.mxu0 0.0
    %1652 = vmatprep.subr.mxu0 0.0
    %1653 = vmatpush1.msra.mxu0 0.0
    %1654 = vmatprep.subr.mxu0 0.0
    %1655 = vmatpush1.msra.mxu0 0.0
    %1656 = vmatprep.subr.mxu0 0.0
    %1657 = vmatpush1.msra.mxu0 0.0
    %1658 = vmatprep.subr.mxu0 0.0
    %1659 = vmatpush1.msra.mxu0 0.0
    %1660 = vmatprep.mubr.f32.mxu0 0.0
    %1661 = vmatmul.mubr.f32.gmra.mrb[0].mxu0 %v1580
    %v1662 = vpop.f32.mrb[0].mxu0
    %v1663 = vadd.f32 0.0, %v1662
    %v1664 = vpop.f32.mrb[0].mxu0
    %v1665 = vadd.f32 0.0, %v1664
    %1666 = vdwg.mxu0
    %1667 = vmatprep.subr.mxu0 %v415
    %1668 = vmatpush1.msra.mxu0 %v414
    %1669 = vmatprep.subr.mxu0 %v419
    %1670 = vmatpush1.msra.mxu0 %v418
    %1671 = vmatprep.subr.mxu0 %v423
    %1672 = vmatpush1.msra.mxu0 %v422
    %1673 = vmatprep.subr.mxu0 %v427
    %1674 = vmatpush1.msra.mxu0 %v426
    %1675 = vmatprep.subr.mxu0 %v431
    %1676 = vmatpush1.msra.mxu0 %v430
    %1677 = vmatprep.subr.mxu0 %v435
    %1678 = vmatpush1.msra.mxu0 %v434
    %1679 = vmatprep.subr.mxu0 %v439
    %1680 = vmatpush1.msra.mxu0 %v438
    %1681 = vmatprep.subr.mxu0 %v443
    %1682 = vmatpush1.msra.mxu0 %v442
    %1683 = vmatprep.subr.mxu0 %v447
    %1684 = vmatpush1.msra.mxu0 %v446
    %1685 = vmatprep.subr.mxu0 %v451
    %1686 = vmatpush1.msra.mxu0 %v450
    %1687 = vmatprep.subr.mxu0 %v455
    %1688 = vmatpush1.msra.mxu0 %v454
    %1689 = vmatprep.subr.mxu0 %v459
    %1690 = vmatpush1.msra.mxu0 %v458
    %1691 = vmatprep.subr.mxu0 %v463
    %1692 = vmatpush1.msra.mxu0 %v462
    %1693 = vmatprep.subr.mxu0 %v467
    %1694 = vmatpush1.msra.mxu0 %v466
    %1695 = vmatprep.subr.mxu0 %v471
    %1696 = vmatpush1.msra.mxu0 %v470
    %1697 = vmatprep.subr.mxu0 %v475
    %1698 = vmatpush1.msra.mxu0 %v474
    %1699 = vmatprep.subr.mxu0 0.0
    %1700 = vmatpush1.msra.mxu0 0.0
    %1701 = vmatprep.subr.mxu0 0.0
    %1702 = vmatpush1.msra.mxu0 0.0
    %1703 = vmatprep.subr.mxu0 0.0
    %1704 = vmatpush1.msra.mxu0 0.0
    %1705 = vmatprep.subr.mxu0 0.0
    %1706 = vmatpush1.msra.mxu0 0.0
    %1707 = vmatprep.subr.mxu0 0.0
    %1708 = vmatpush1.msra.mxu0 0.0
    %1709 = vmatprep.subr.mxu0 0.0
    %1710 = vmatpush1.msra.mxu0 0.0
    %1711 = vmatprep.subr.mxu0 0.0
    %1712 = vmatpush1.msra.mxu0 0.0
    %1713 = vmatprep.subr.mxu0 0.0
    %1714 = vmatpush1.msra.mxu0 0.0
    %1715 = vmatprep.subr.mxu0 0.0
    %1716 = vmatpush1.msra.mxu0 0.0
    %1717 = vmatprep.subr.mxu0 0.0
    %1718 = vmatpush1.msra.mxu0 0.0
    %1719 = vmatprep.subr.mxu0 0.0
    %1720 = vmatpush1.msra.mxu0 0.0
    %1721 = vmatprep.subr.mxu0 0.0
    %1722 = vmatpush1.msra.mxu0 0.0
    %1723 = vmatprep.subr.mxu0 0.0
    %1724 = vmatpush1.msra.mxu0 0.0
    %1725 = vmatprep.subr.mxu0 0.0
    %1726 = vmatpush1.msra.mxu0 0.0
    %1727 = vmatprep.subr.mxu0 0.0
    %1728 = vmatpush1.msra.mxu0 0.0
    %1729 = vmatprep.subr.mxu0 0.0
    %1730 = vmatpush1.msra.mxu0 0.0
    %1731 = vmatprep.mubr.f32.mxu0 0.0
    %1732 = vmatmul.mubr.f32.gmra.mrb[0].mxu0 %v1580
    %v1733 = vpop.f32.mrb[0].mxu0
    %v1734 = vadd.f32 0.0, %v1733
    %v1735 = vpop.f32.mrb[0].mxu0
    %v1736 = vadd.f32 0.0, %v1735
    %1737 = vdwg.mxu0
    %v1738 = vadd.f32 %v1592, %v1663
    %v1739 = vadd.f32 %v1593, %v1665
    %v1740 = vadd.f32 %v1594, %v1734
    %v1741 = vadd.f32 %v1595, %v1736
    %v1742 = vmul.f32 %v1738, 0.5
    %v1743 = vtanh.pop %v1742
    %v1744 = vmul.f32 %v1743, 0.5
    %v1745 = vadd.f32 %v1744, 0.5
    %v1746 = vmul.f32 %v1739, 0.5
    %v1747 = vtanh.pop %v1746
    %v1748 = vmul.f32 %v1747, 0.5
    %v1749 = vadd.f32 %v1748, 0.5
    %v1750 = vtanh.pop %v1740
    %v1751 = vmul.f32 %v1741, 0.5
    %v1752 = vtanh.pop %v1751
    %v1753 = vmul.f32 %v1752, 0.5
    %v1754 = vadd.f32 %v1753, 0.5
    %v1755 = vmul.f32 %v1749, %v1581
    %v1756 = vmul.f32 %v1745, %v1750
    %v1757 = vadd.f32 %v1755, %v1756
    %v1758 = vtanh.pop %v1757
    %v1759 = vmul.f32 %v1754, %v1758
    %vm1760 = vcmp.gt.s32.totalorder %v82, 6
    %v1761 = vsel %vm1760, 1, 0
    %1762 = vset.pattern.permute.xlu0 0
    %1763 = vperm.xlu0 %1762, %v1761
    %v1764 = vpop.permute.xlu0 %1763
    %vm1765 = vcmp.eq.s32.totalorder %v1764, 1
    %v1766 = vsel %vm1765, %v1759, %v1580
    %v1767 = vsel %vm1765, %v1757, %v1581
    %vm1768 = vcmp.eq.s32.totalorder %v652, 6
    %s1769 = scalar_lea.vmem [#allocation3], 48
    %v1770 = vld [vmem:[%s1769] sm:$0xff]
    %v1771 = vsel %vm1768, 1, 0
    %1772 = vset.pattern.permute.xlu0 0
    %1773 = vperm.xlu0 %1772, %v1771
    %v1774 = vpop.permute.xlu0 %1773
    %vm1775 = vcmp.eq.s32.totalorder %v1774, 1
    %v1776 = vsel %vm1775, %v1770, %v1590
    %s1777 = scalar_lea.vmem [#allocation2], 224
    %v1778 = vld [vmem:[%s1777] sm:$0xff]
    %v1779 = vld [vmem:[%s1777 + $0x8] sm:$0xff]
    %v1780 = vld [vmem:[%s1777 + $0x10] sm:$0xff]
    %v1781 = vld [vmem:[%s1777 + $0x18] sm:$0xff]
    %1782 = vmatprep.subr.mxu0 %v413
    %1783 = vmatpush1.msra.mxu0 %v412
    %1784 = vmatprep.subr.mxu0 %v417
    %1785 = vmatpush1.msra.mxu0 %v416
    %1786 = vmatprep.subr.mxu0 %v421
    %1787 = vmatpush1.msra.mxu0 %v420
    %1788 = vmatprep.subr.mxu0 %v425
    %1789 = vmatpush1.msra.mxu0 %v424
    %1790 = vmatprep.subr.mxu0 %v429
    %1791 = vmatpush1.msra.mxu0 %v428
    %1792 = vmatprep.subr.mxu0 %v433
    %1793 = vmatpush1.msra.mxu0 %v432
    %1794 = vmatprep.subr.mxu0 %v437
    %1795 = vmatpush1.msra.mxu0 %v436
    %1796 = vmatprep.subr.mxu0 %v441
    %1797 = vmatpush1.msra.mxu0 %v440
    %1798 = vmatprep.subr.mxu0 %v445
    %1799 = vmatpush1.msra.mxu0 %v444
    %1800 = vmatprep.subr.mxu0 %v449
    %1801 = vmatpush1.msra.mxu0 %v448
    %1802 = vmatprep.subr.mxu0 %v453
    %1803 = vmatpush1.msra.mxu0 %v452
    %1804 = vmatprep.subr.mxu0 %v457
    %1805 = vmatpush1.msra.mxu0 %v456
    %1806 = vmatprep.subr.mxu0 %v461
    %1807 = vmatpush1.msra.mxu0 %v460
    %1808 = vmatprep.subr.mxu0 %v465
    %1809 = vmatpush1.msra.mxu0 %v464
    %1810 = vmatprep.subr.mxu0 %v469
    %1811 = vmatpush1.msra.mxu0 %v468
    %1812 = vmatprep.subr.mxu0 %v473
    %1813 = vmatpush1.msra.mxu0 %v472
    %1814 = vmatprep.subr.mxu0 0.0
    %1815 = vmatpush1.msra.mxu0 0.0
    %1816 = vmatprep.subr.mxu0 0.0
    %1817 = vmatpush1.msra.mxu0 0.0
    %1818 = vmatprep.subr.mxu0 0.0
    %1819 = vmatpush1.msra.mxu0 0.0
    %1820 = vmatprep.subr.mxu0 0.0
    %1821 = vmatpush1.msra.mxu0 0.0
    %1822 = vmatprep.subr.mxu0 0.0
    %1823 = vmatpush1.msra.mxu0 0.0
    %1824 = vmatprep.subr.mxu0 0.0
    %1825 = vmatpush1.msra.mxu0 0.0
    %1826 = vmatprep.subr.mxu0 0.0
    %1827 = vmatpush1.msra.mxu0 0.0
    %1828 = vmatprep.subr.mxu0 0.0
    %1829 = vmatpush1.msra.mxu0 0.0
    %1830 = vmatprep.subr.mxu0 0.0
    %1831 = vmatpush1.msra.mxu0 0.0
    %1832 = vmatprep.subr.mxu0 0.0
    %1833 = vmatpush1.msra.mxu0 0.0
    %1834 = vmatprep.subr.mxu0 0.0
    %1835 = vmatpush1.msra.mxu0 0.0
    %1836 = vmatprep.subr.mxu0 0.0
    %1837 = vmatpush1.msra.mxu0 0.0
    %1838 = vmatprep.subr.mxu0 0.0
    %1839 = vmatpush1.msra.mxu0 0.0
    %1840 = vmatprep.subr.mxu0 0.0
    %1841 = vmatpush1.msra.mxu0 0.0
    %1842 = vmatprep.subr.mxu0 0.0
    %1843 = vmatpush1.msra.mxu0 0.0
    %1844 = vmatprep.subr.mxu0 0.0
    %1845 = vmatpush1.msra.mxu0 0.0
    %1846 = vmatprep.mubr.f32.mxu0 0.0
    %1847 = vmatmul.mubr.f32.gmra.mrb[0].mxu0 %v1766
    %v1848 = vpop.f32.mrb[0].mxu0
    %v1849 = vadd.f32 0.0, %v1848
    %v1850 = vpop.f32.mrb[0].mxu0
    %v1851 = vadd.f32 0.0, %v1850
    %1852 = vdwg.mxu0
    %1853 = vmatprep.subr.mxu0 %v415
    %1854 = vmatpush1.msra.mxu0 %v414
    %1855 = vmatprep.subr.mxu0 %v419
    %1856 = vmatpush1.msra.mxu0 %v418
    %1857 = vmatprep.subr.mxu0 %v423
    %1858 = vmatpush1.msra.mxu0 %v422
    %1859 = vmatprep.subr.mxu0 %v427
    %1860 = vmatpush1.msra.mxu0 %v426
    %1861 = vmatprep.subr.mxu0 %v431
    %1862 = vmatpush1.msra.mxu0 %v430
    %1863 = vmatprep.subr.mxu0 %v435
    %1864 = vmatpush1.msra.mxu0 %v434
    %1865 = vmatprep.subr.mxu0 %v439
    %1866 = vmatpush1.msra.mxu0 %v438
    %1867 = vmatprep.subr.mxu0 %v443
    %1868 = vmatpush1.msra.mxu0 %v442
    %1869 = vmatprep.subr.mxu0 %v447
    %1870 = vmatpush1.msra.mxu0 %v446
    %1871 = vmatprep.subr.mxu0 %v451
    %1872 = vmatpush1.msra.mxu0 %v450
    %1873 = vmatprep.subr.mxu0 %v455
    %1874 = vmatpush1.msra.mxu0 %v454
    %1875 = vmatprep.subr.mxu0 %v459
    %1876 = vmatpush1.msra.mxu0 %v458
    %1877 = vmatprep.subr.mxu0 %v463
    %1878 = vmatpush1.msra.mxu0 %v462
    %1879 = vmatprep.subr.mxu0 %v467
    %1880 = vmatpush1.msra.mxu0 %v466
    %1881 = vmatprep.subr.mxu0 %v471
    %1882 = vmatpush1.msra.mxu0 %v470
    %1883 = vmatprep.subr.mxu0 %v475
    %1884 = vmatpush1.msra.mxu0 %v474
    %1885 = vmatprep.subr.mxu0 0.0
    %1886 = vmatpush1.msra.mxu0 0.0
    %1887 = vmatprep.subr.mxu0 0.0
    %1888 = vmatpush1.msra.mxu0 0.0
    %1889 = vmatprep.subr.mxu0 0.0
    %1890 = vmatpush1.msra.mxu0 0.0
    %1891 = vmatprep.subr.mxu0 0.0
    %1892 = vmatpush1.msra.mxu0 0.0
    %1893 = vmatprep.subr.mxu0 0.0
    %1894 = vmatpush1.msra.mxu0 0.0
    %1895 = vmatprep.subr.mxu0 0.0
    %1896 = vmatpush1.msra.mxu0 0.0
    %1897 = vmatprep.subr.mxu0 0.0
    %1898 = vmatpush1.msra.mxu0 0.0
    %1899 = vmatprep.subr.mxu0 0.0
    %1900 = vmatpush1.msra.mxu0 0.0
    %1901 = vmatprep.subr.mxu0 0.0
    %1902 = vmatpush1.msra.mxu0 0.0
    %1903 = vmatprep.subr.mxu0 0.0
    %1904 = vmatpush1.msra.mxu0 0.0
    %1905 = vmatprep.subr.mxu0 0.0
    %1906 = vmatpush1.msra.mxu0 0.0
    %1907 = vmatprep.subr.mxu0 0.0
    %1908 = vmatpush1.msra.mxu0 0.0
    %1909 = vmatprep.subr.mxu0 0.0
    %1910 = vmatpush1.msra.mxu0 0.0
    %1911 = vmatprep.subr.mxu0 0.0
    %1912 = vmatpush1.msra.mxu0 0.0
    %1913 = vmatprep.subr.mxu0 0.0
    %1914 = vmatpush1.msra.mxu0 0.0
    %1915 = vmatprep.subr.mxu0 0.0
    %1916 = vmatpush1.msra.mxu0 0.0
    %1917 = vmatprep.mubr.f32.mxu0 0.0
    %1918 = vmatmul.mubr.f32.gmra.mrb[0].mxu0 %v1766
    %v1919 = vpop.f32.mrb[0].mxu0
    %v1920 = vadd.f32 0.0, %v1919
    %v1921 = vpop.f32.mrb[0].mxu0
    %v1922 = vadd.f32 0.0, %v1921
    %1923 = vdwg.mxu0
    %v1924 = vadd.f32 %v1778, %v1849
    %v1925 = vadd.f32 %v1779, %v1851
    %v1926 = vadd.f32 %v1780, %v1920
    %v1927 = vadd.f32 %v1781, %v1922
    %v1928 = vmul.f32 %v1924, 0.5
    %v1929 = vtanh.pop %v1928
    %v1930 = vmul.f32 %v1929, 0.5
    %v1931 = vadd.f32 %v1930, 0.5
    %v1932 = vmul.f32 %v1925, 0.5
    %v1933 = vtanh.pop %v1932
    %v1934 = vmul.f32 %v1933, 0.5
    %v1935 = vadd.f32 %v1934, 0.5
    %v1936 = vtanh.pop %v1926
    %v1937 = vmul.f32 %v1927, 0.5
    %v1938 = vtanh.pop %v1937
    %v1939 = vmul.f32 %v1938, 0.5
    %v1940 = vadd.f32 %v1939, 0.5
    %v1941 = vmul.f32 %v1935, %v1767
    %v1942 = vmul.f32 %v1931, %v1936
    %v1943 = vadd.f32 %v1941, %v1942
    %v1944 = vtanh.pop %v1943
    %v1945 = vmul.f32 %v1940, %v1944
    %vm1946 = vcmp.gt.s32.totalorder %v82, 7
    %v1947 = vsel %vm1946, 1, 0
    %1948 = vset.pattern.permute.xlu0 0
    %1949 = vperm.xlu0 %1948, %v1947
    %v1950 = vpop.permute.xlu0 %1949
    %vm1951 = vcmp.eq.s32.totalorder %v1950, 1
    %v1952 = vsel %vm1951, %v1945, %v1766
    %vm1953 = vcmp.eq.s32.totalorder %v652, 7
    %s1954 = scalar_lea.vmem [#allocation3], 56
    %v1955 = vld [vmem:[%s1954] sm:$0xff]
    %v1956 = vsel %vm1953, 1, 0
    %1957 = vset.pattern.permute.xlu0 0
    %1958 = vperm.xlu0 %1957, %v1956
    %v1959 = vpop.permute.xlu0 %1958
    %vm1960 = vcmp.eq.s32.totalorder %v1959, 1
    %v1961 = vsel %vm1960, %v1955, %v1776
    %v1962 = vld [vmem:[#allocation9] sm:$0xff]
    %v1963 = vld [vmem:[#allocation9 + $0x8] sm:$0xff]
    %v1964 = vld [vmem:[#allocation9 + $0x10] sm:$0xff]
    %v1965 = vld [vmem:[#allocation9 + $0x18] sm:$0xff]
    %v1966 = vld [vmem:[#allocation9 + $0x20] sm:$0xff]
    %v1967 = vld [vmem:[#allocation9 + $0x28] sm:$0xff]
    %v1968 = vld [vmem:[#allocation9 + $0x30] sm:$0xff]
    %v1969 = vld [vmem:[#allocation9 + $0x38] sm:$0xff]
    %v1970 = vld [vmem:[#allocation9 + $0x40] sm:$0xff]
    %v1971 = vld [vmem:[#allocation9 + $0x48] sm:$0xff]
    %v1972 = vld [vmem:[#allocation9 + $0x50] sm:$0xff]
    %v1973 = vld [vmem:[#allocation9 + $0x58] sm:$0xff]
    %v1974 = vld [vmem:[#allocation9 + $0x60] sm:$0xff]
    %v1975 = vld [vmem:[#allocation9 + $0x68] sm:$0xff]
    %v1976 = vld [vmem:[#allocation9 + $0x70] sm:$0xff]
    %v1977 = vld [vmem:[#allocation9 + $0x78] sm:$0xff]
    %v1978 = vld [vmem:[%s6] sm:$0xf]
    %v1980 = vlaneseq
    %v1981 = vshrl.u32 %v1980, 7
    %v1982 = vsub.s32 0, %v1981
    %v1983 = vrot.slane %v1978, %v1982
    %v1984 = vlaneseq
    %v1985 = vshrl.u32 %v1984, 7
    %v1986 = vsub.s32 2, %v1985
    %v1987 = vrot.slane %v1978, %v1986
    %v1988 = vlaneseq
    %v1989 = vshrl.u32 %v1988, 7
    %v1990 = vsub.s32 3, %v1989
    %v1991 = vrot.slane %v1978, %v1990
    %v1996 = vsel %vm129, %v1961, 0
    %1998 = vmatprep.subr.mxu0 %v1963
    %1999 = vmatpush1.msra.mxu0 %v1962
    %2000 = vmatprep.subr.mxu0 %v1967
    %2001 = vmatpush1.msra.mxu0 %v1966
    %2002 = vmatprep.subr.mxu0 %v1971
    %2003 = vmatpush1.msra.mxu0 %v1970
    %2004 = vmatprep.subr.mxu0 %v1975
    %2005 = vmatpush1.msra.mxu0 %v1974
    %2006 = vmatprep.subr.mxu0 0.0
    %2007 = vmatpush1.msra.mxu0 0.0
    %2008 = vmatprep.subr.mxu0 0.0
    %2009 = vmatpush1.msra.mxu0 0.0
    %2010 = vmatprep.subr.mxu0 0.0
    %2011 = vmatpush1.msra.mxu0 0.0
    %2012 = vmatprep.subr.mxu0 0.0
    %2013 = vmatpush1.msra.mxu0 0.0
    %2014 = vmatprep.subr.mxu0 0.0
    %2015 = vmatpush1.msra.mxu0 0.0
    %2016 = vmatprep.subr.mxu0 0.0
    %2017 = vmatpush1.msra.mxu0 0.0
    %2018 = vmatprep.subr.mxu0 0.0
    %2019 = vmatpush1.msra.mxu0 0.0
    %2020 = vmatprep.subr.mxu0 0.0
    %2021 = vmatpush1.msra.mxu0 0.0
    %2022 = vmatprep.subr.mxu0 0.0
    %2023 = vmatpush1.msra.mxu0 0.0
    %2024 = vmatprep.subr.mxu0 0.0
    %2025 = vmatpush1.msra.mxu0 0.0
    %2026 = vmatprep.subr.mxu0 0.0
    %2027 = vmatpush1.msra.mxu0 0.0
    %2028 = vmatprep.subr.mxu0 0.0
    %2029 = vmatpush1.msra.mxu0 0.0
    %2030 = vmatprep.subr.mxu0 0.0
    %2031 = vmatpush1.msra.mxu0 0.0
    %2032 = vmatprep.subr.mxu0 0.0
    %2033 = vmatpush1.msra.mxu0 0.0
    %2034 = vmatprep.subr.mxu0 0.0
    %2035 = vmatpush1.msra.mxu0 0.0
    %2036 = vmatprep.subr.mxu0 0.0
    %2037 = vmatpush1.msra.mxu0 0.0
    %2038 = vmatprep.subr.mxu0 0.0
    %2039 = vmatpush1.msra.mxu0 0.0
    %2040 = vmatprep.subr.mxu0 0.0
    %2041 = vmatpush1.msra.mxu0 0.0
    %2042 = vmatprep.subr.mxu0 0.0
    %2043 = vmatpush1.msra.mxu0 0.0
    %2044 = vmatprep.subr.mxu0 0.0
    %2045 = vmatpush1.msra.mxu0 0.0
    %2046 = vmatprep.subr.mxu0 0.0
    %2047 = vmatpush1.msra.mxu0 0.0
    %2048 = vmatprep.subr.mxu0 0.0
    %2049 = vmatpush1.msra.mxu0 0.0
    %2050 = vmatprep.subr.mxu0 0.0
    %2051 = vmatpush1.msra.mxu0 0.0
    %2052 = vmatprep.subr.mxu0 0.0
    %2053 = vmatpush1.msra.mxu0 0.0
    %2054 = vmatprep.subr.mxu0 0.0
    %2055 = vmatpush1.msra.mxu0 0.0
    %2056 = vmatprep.subr.mxu0 0.0
    %2057 = vmatpush1.msra.mxu0 0.0
    %2058 = vmatprep.subr.mxu0 0.0
    %2059 = vmatpush1.msra.mxu0 0.0
    %2060 = vmatprep.subr.mxu0 0.0
    %2061 = vmatpush1.msra.mxu0 0.0
    %2062 = vmatprep.mubr.f32.mxu0 0.0
    %2063 = vmatmul.mubr.f32.gmra.mrb[0].mxu0 %v1996
    %v2064 = vpop.f32.mrb[0].mxu0
    %v2065 = vadd.f32 %v1983, %v2064
    %v2066 = vpop.f32.mrb[0].mxu0
    %2067 = vdwg.mxu0
    %2068 = vmatprep.subr.mxu0 %v1965
    %2069 = vmatpush1.msra.mxu0 %v1964
    %2070 = vmatprep.subr.mxu0 %v1969
    %2071 = vmatpush1.msra.mxu0 %v1968
    %2072 = vmatprep.subr.mxu0 %v1973
    %2073 = vmatpush1.msra.mxu0 %v1972
    %2074 = vmatprep.subr.mxu0 %v1977
    %2075 = vmatpush1.msra.mxu0 %v1976
    %2076 = vmatprep.subr.mxu0 0.0
    %2077 = vmatpush1.msra.mxu0 0.0
    %2078 = vmatprep.subr.mxu0 0.0
    %2079 = vmatpush1.msra.mxu0 0.0
    %2080 = vmatprep.subr.mxu0 0.0
    %2081 = vmatpush1.msra.mxu0 0.0
    %2082 = vmatprep.subr.mxu0 0.0
    %2083 = vmatpush1.msra.mxu0 0.0
    %2084 = vmatprep.subr.mxu0 0.0
    %2085 = vmatpush1.msra.mxu0 0.0
    %2086 = vmatprep.subr.mxu0 0.0
    %2087 = vmatpush1.msra.mxu0 0.0
    %2088 = vmatprep.subr.mxu0 0.0
    %2089 = vmatpush1.msra.mxu0 0.0
    %2090 = vmatprep.subr.mxu0 0.0
    %2091 = vmatpush1.msra.mxu0 0.0
    %2092 = vmatprep.subr.mxu0 0.0
    %2093 = vmatpush1.msra.mxu0 0.0
    %2094 = vmatprep.subr.mxu0 0.0
    %2095 = vmatpush1.msra.mxu0 0.0
    %2096 = vmatprep.subr.mxu0 0.0
    %2097 = vmatpush1.msra.mxu0 0.0
    %2098 = vmatprep.subr.mxu0 0.0
    %2099 = vmatpush1.msra.mxu0 0.0
    %2100 = vmatprep.subr.mxu0 0.0
    %2101 = vmatpush1.msra.mxu0 0.0
    %2102 = vmatprep.subr.mxu0 0.0
    %2103 = vmatpush1.msra.mxu0 0.0
    %2104 = vmatprep.subr.mxu0 0.0
    %2105 = vmatpush1.msra.mxu0 0.0
    %2106 = vmatprep.subr.mxu0 0.0
    %2107 = vmatpush1.msra.mxu0 0.0
    %2108 = vmatprep.subr.mxu0 0.0
    %2109 = vmatpush1.msra.mxu0 0.0
    %2110 = vmatprep.subr.mxu0 0.0
    %2111 = vmatpush1.msra.mxu0 0.0
    %2112 = vmatprep.subr.mxu0 0.0
    %2113 = vmatpush1.msra.mxu0 0.0
    %2114 = vmatprep.subr.mxu0 0.0
    %2115 = vmatpush1.msra.mxu0 0.0
    %2116 = vmatprep.subr.mxu0 0.0
    %2117 = vmatpush1.msra.mxu0 0.0
    %2118 = vmatprep.subr.mxu0 0.0
    %2119 = vmatpush1.msra.mxu0 0.0
    %2120 = vmatprep.subr.mxu0 0.0
    %2121 = vmatpush1.msra.mxu0 0.0
    %2122 = vmatprep.subr.mxu0 0.0
    %2123 = vmatpush1.msra.mxu0 0.0
    %2124 = vmatprep.subr.mxu0 0.0
    %2125 = vmatpush1.msra.mxu0 0.0
    %2126 = vmatprep.subr.mxu0 0.0
    %2127 = vmatpush1.msra.mxu0 0.0
    %2128 = vmatprep.subr.mxu0 0.0
    %2129 = vmatpush1.msra.mxu0 0.0
    %2130 = vmatprep.subr.mxu0 0.0
    %2131 = vmatpush1.msra.mxu0 0.0
    %2132 = vmatprep.mubr.f32.mxu0 0.0
    %2133 = vmatmul.mubr.f32.gmra.mrb[0].mxu0 %v1996
    %v2134 = vpop.f32.mrb[0].mxu0
    %v2135 = vadd.f32 %v1987, %v2134
    %v2136 = vpop.f32.mrb[0].mxu0
    %v2137 = vadd.f32 %v1991, %v2136
    %2138 = vdwg.mxu0
    %v2139 = vmul.f32 %v2065, 0.5
    %v2140 = vtanh.pop %v2139
    %v2141 = vmul.f32 %v2140, 0.5
    %v2142 = vadd.f32 %v2141, 0.5
    %v2143 = vtanh.pop %v2135
    %v2144 = vmul.f32 %v2137, 0.5
    %v2145 = vtanh.pop %v2144
    %v2146 = vmul.f32 %v2145, 0.5
    %v2147 = vadd.f32 %v2146, 0.5
    %v2148 = vmul.f32 %v2142, %v2143
    %v2149 = vtanh.pop %v2148
    %v2150 = vmul.f32 %v2147, %v2149
    %2151 = vst [vmem:[#allocation11] sm:$0xff] %v1952
    %2152 = vst [vmem:[#allocation11 + $0x8] sm:$0xff] %v2150
    // Predicated region
    $region46: #{tpu_custom_call.1} parent=1 // pred_check
      _
    $region47: #{tpu_custom_call.1} parent=1 // pred_check_branch
      %2154 = sbr.rel (0) target = $region49
    $region48: #{tpu_custom_call.1} parent=1 // pred_region
      %s2156 = ssub.s32 256, 256
      %2157 = vsyncadd [#allocation5], %s2156
      %s2159 = sshll.u32 [#allocation11], 4
      %s2160 = int_to_ptr.vmem [resolvable:$true] %s2159
      %2162 = dma.vmem_to_hbm [thread:$0]  %s2160, 256, %s7, [#allocation5]
    $region49: #{tpu_custom_call.1} parent=1 // pred_fallthru
      _
    // Predicated region
    $region50: #{tpu_custom_call.1} parent=1 // pred_check
      _
    $region51: #{tpu_custom_call.1} parent=1 // pred_check_branch
      %2164 = sbr.rel (0) target = $region53
    $region52: #{tpu_custom_call.1} parent=1 // pred_region
      %2165 = dma.done [#allocation5], 256
    $region53: #{tpu_custom_call.1} parent=1 // pred_fallthru
      _
    %2166 = vsyncpa [#allocation4], 1
    %2167 = vsyncpa [#allocation7], 1
    %2168 = vsyncpa [#allocation10], 1
    %2169 = vsyncpa [#allocation5], 1

</llo_original>
